<compile_context>
chip_gen: v6e
topology: v6e:2x2x1
jax: 0.10.0
libtpu: 0.0.40
codegen_flags: <defaults>
</compile_context>

<pallas_src>
import jax
import jax.numpy as jnp
from jax.experimental import pallas as pl
from jax.experimental.pallas import tpu as pltpu


def _round_up(x, m):
    return ((x + m - 1) // m) * m


def _simple_model_kernel(
    x_ref,                    # (TB, D) batch tile of the raw input (f32)
    p_ref, t2_ref,            # pool*0.5*bn2_scale matrix (D, Hp) bf16, bn2 shift (1, Hp) f32
    w1_ref, t3_ref,           # fc1 weight * bn3 scale (Hp, 512) bf16, folded shift (1, 512) f32
    w2_ref, t4_ref,           # (512, 256) bf16, (1, 256) f32
    w3_ref, t5_ref,           # (256, 128) bf16, (1, 128) f32
    w4_ref, t6_ref,           # (128, 64)  bf16, (1, 64)  f32
    w5_ref, b5_ref,           # fc5 weight row (1, 64) f32, bias (1, 1) f32
    o_ref,                    # (TB, 1) output block
):
    bf16, f32 = jnp.bfloat16, jnp.float32

    # AvgPool1d(k=2) + bn2 scale as one bf16 MXU matmul, then f32 bn2 shift + ReLU.
    x = x_ref[...].astype(bf16)
    h = jnp.maximum(jnp.dot(x, p_ref[...], preferred_element_type=f32) + t2_ref[...], 0.0)
    # fc1..fc4: bf16 operands on the MXU, f32 accumulation, f32 shift + ReLU (VPU).
    h = jnp.maximum(jnp.dot(h.astype(bf16), w1_ref[...], preferred_element_type=f32) + t3_ref[...], 0.0)
    h = jnp.maximum(jnp.dot(h.astype(bf16), w2_ref[...], preferred_element_type=f32) + t4_ref[...], 0.0)
    h = jnp.maximum(jnp.dot(h.astype(bf16), w3_ref[...], preferred_element_type=f32) + t5_ref[...], 0.0)
    h = jnp.maximum(jnp.dot(h.astype(bf16), w4_ref[...], preferred_element_type=f32) + t6_ref[...], 0.0)
    # fc5 (64 -> 1): lane reduction on the VPU/XLU instead of an almost-empty MXU pass.
    logit = jnp.sum(h * w5_ref[...], axis=-1, keepdims=True) + b5_ref[...]
    # sigmoid: exp rides the EUP slot; approx reciprocal is also EUP (free vs a VPU divide).
    o_ref[...] = pl.reciprocal(1.0 + jnp.exp(-logit), approx=True)


def _choose_batch_tile(B, block_b):
    """Batch tile: multiple of 8 (or the full batch), aiming for >=2 grid steps so the
    'parallel' batch axis shards across v7x's two TensorCores."""
    if B <= 8:
        return B
    return min(block_b, _round_up(pl.cdiv(B, 2), 8))


def simple_model_forward(x, folded, *, block_b=512, interpret=False):
    """x: (B, input_dim) float32; folded: output of fold_params.  Returns (B, 1) float32."""
    B, D = x.shape
    tb = _choose_batch_tile(B, block_b)
    grid = (pl.cdiv(B, tb),)          # no wrapper-side pad: Pallas clips the ragged tail

    const = lambda i: (0, 0)          # weights: same block every step -> VMEM-resident
    in_specs = [
        pl.BlockSpec((tb, D), lambda i: (i, 0)),
        pl.BlockSpec(folded["pool"].shape, const),
        pl.BlockSpec(folded["t2"].shape, const),
        pl.BlockSpec(folded["w1"].shape, const),
        pl.BlockSpec(folded["t3"].shape, const),
        pl.BlockSpec(folded["w2"].shape, const),
        pl.BlockSpec(folded["t4"].shape, const),
        pl.BlockSpec(folded["w3"].shape, const),
        pl.BlockSpec(folded["t5"].shape, const),
        pl.BlockSpec(folded["w4"].shape, const),
        pl.BlockSpec(folded["t6"].shape, const),
        pl.BlockSpec(folded["w5_row"].shape, const),
        pl.BlockSpec(folded["b5"].shape, const),
    ]

    # Advisory cost estimate so XLA schedules the call sensibly against surrounding ops.
    macs = folded["pool"].shape[0] * folded["pool"].shape[1]
    for name in ("w1", "w2", "w3", "w4"):
        r, c = folded[name].shape
        macs += r * c
    macs += folded["w5_row"].shape[1]
    weight_bytes = sum(int(v.size) * v.dtype.itemsize for v in folded.values())
    cost = pl.CostEstimate(
        flops=2 * macs * B,
        transcendentals=2 * B,
        bytes_accessed=int(x.size) * x.dtype.itemsize + weight_bytes + B * 4,
    )

    out = pl.pallas_call(
        _simple_model_kernel,
        out_shape=jax.ShapeDtypeStruct((B, 1), jnp.float32),
        grid=grid,
        in_specs=in_specs,
        out_specs=pl.BlockSpec((tb, 1), lambda i: (i, 0)),
        compiler_params=pltpu.CompilerParams(dimension_semantics=("parallel",)),
        cost_estimate=cost,
        interpret=interpret,
    )(x, folded["pool"], folded["t2"], folded["w1"], folded["t3"],
      folded["w2"], folded["t4"], folded["w3"], folded["t5"],
      folded["w4"], folded["t6"], folded["w5_row"], folded["b5"])
    return out


def make_params(key, input_dim):
    """Raw parameters matching the nn.Module shapes (Linear W:(in,out), b:(1,out);
    BatchNorm1d eval-mode gamma/beta/running_mean/running_var).  BN stats are
    randomized so the folded-kernel sanity check is meaningful."""
    half = input_dim // 2
    dims = [half, 512, 256, 128, 64, 1]
    n_lin = len(dims) - 1
    keys = jax.random.split(key, 2 * n_lin + 4 * 5)
    ki = 0
    params = {}
    for i in range(n_lin):
        bound = 1.0 / (dims[i] ** 0.5)
        params[f"w{i+1}"] = jax.random.uniform(
            keys[ki], (dims[i], dims[i + 1]), jnp.float32, -bound, bound); ki += 1
        params[f"b{i+1}"] = jax.random.uniform(
            keys[ki], (1, dims[i + 1]), jnp.float32, -bound, bound); ki += 1
    for name, feat in (("bn2", half), ("bn3", 512), ("bn4", 256),
                       ("bn5", 128), ("bn6", 64)):
        params[f"{name}_g"] = jax.random.uniform(keys[ki], (1, feat), jnp.float32, 0.5, 1.5); ki += 1
        params[f"{name}_b"] = 0.1 * jax.random.normal(keys[ki], (1, feat), jnp.float32); ki += 1
        params[f"{name}_m"] = 0.1 * jax.random.normal(keys[ki], (1, feat), jnp.float32); ki += 1
        params[f"{name}_v"] = jax.random.uniform(keys[ki], (1, feat), jnp.float32, 0.5, 1.5); ki += 1
    return params


def fold_params(params, input_dim, eps=1e-5):
    """One-time constant folding (run once outside the inference hot loop).
    MXU weights are stored bf16; shifts and the tiny fc5 row stay f32 (VPU path)."""
    half = input_dim // 2
    half_pad = max(_round_up(half, 128), 128)   # lane-align pooled features / fc1 rows

    def bn_scale_shift(name):
        s = params[f"{name}_g"] / jnp.sqrt(params[f"{name}_v"] + eps)
        t = params[f"{name}_b"] - params[f"{name}_m"] * s
        return s, t

    s2, t2 = bn_scale_shift("bn2")
    # Pooling matrix: P[2j, j] = P[2j+1, j] = 0.5 (trailing odd element dropped, matching
    # PyTorch AvgPool1d truncation); bn2 scale folded into its columns; columns >= half
    # are zero (lane padding -> relu(0+0)=0 and zero fc1 rows, mathematically inert).
    rows = jnp.arange(input_dim)[:, None] // 2
    cols = jnp.arange(half_pad)[None, :]
    s2_pad = jnp.pad(s2, ((0, 0), (0, half_pad - half)))
    pool = jnp.where(rows == cols, 0.5, 0.0).astype(jnp.float32) * s2_pad
    t2_pad = jnp.pad(t2, ((0, 0), (0, half_pad - half)))

    folded = {"pool": pool.astype(jnp.bfloat16), "t2": t2_pad}

    s3, t3 = bn_scale_shift("bn3")
    w1 = jnp.pad(params["w1"], ((0, half_pad - half), (0, 0))) * s3   # fold BN scale in
    folded["w1"] = w1.astype(jnp.bfloat16)
    folded["t3"] = params["b1"] * s3 + t3                             # fold bias into shift

    for i, name in zip((2, 3, 4), ("bn4", "bn5", "bn6")):
        s, t = bn_scale_shift(name)
        folded[f"w{i}"] = (params[f"w{i}"] * s).astype(jnp.bfloat16)
        folded[f"t{i + 2}"] = params[f"b{i}"] * s + t
    folded["w5_row"] = params["w5"].T                                 # (1, 64) f32
    folded["b5"] = params["b5"]                                       # (1, 1)  f32
    return folded


def simple_model_reference(x, params, eps=1e-5):
    """Pure-JAX f32 reference of the same eval-mode forward pass (unfolded math)."""
    D = x.shape[1]
    half = D // 2
    xp = (x[:, 0:2 * half:2] + x[:, 1:2 * half:2]) * 0.5

    def bn(h, name):
        s = params[f"{name}_g"] / jnp.sqrt(params[f"{name}_v"] + eps)
        return (h - params[f"{name}_m"]) * s + params[f"{name}_b"]

    h = jnp.maximum(bn(xp, "bn2"), 0.0)
    for i, name in zip((1, 2, 3, 4), ("bn3", "bn4", "bn5", "bn6")):
        h = jnp.maximum(bn(h @ params[f"w{i}"] + params[f"b{i}"], name), 0.0)
    h = h @ params["w5"] + params["b5"]
    return jax.nn.sigmoid(h)


if __name__ == "__main__":
    INPUT_DIM = 256   # lane-friendly stand-in for the module default 600
    BATCH = 512       # two 256-row tiles -> both v7x TensorCores get work

    key = jax.random.PRNGKey(0)
    k_x, k_p = jax.random.split(key)
    x = jax.random.normal(k_x, (BATCH, INPUT_DIM), jnp.float32)
    params = make_params(k_p, INPUT_DIM)
    folded = fold_params(params, INPUT_DIM)

    out = jax.block_until_ready(simple_model_forward(x, folded))
    ref = jax.block_until_ready(simple_model_reference(x, params))

    assert out.shape == (BATCH, 1), out.shape
    # bf16 MXU operands + approx reciprocal + folded constants: the kernel and the f32
    # unfolded reference don't round identically.  3e-2 on a sigmoid output is far below
    # any structural/wiring error (which shows up as O(0.3+) discrepancies).
    max_err = float(jnp.max(jnp.abs(out - ref)))
    assert jnp.allclose(out, ref, atol=3e-2, rtol=3e-2), max_err
    print("KERNEL_OK")
</pallas_src>

<mosaic_0001>
module attributes {stable_mosaic.version = 11 : i64} {
  func.func @_simple_model_kernel(%arg0: i32, %arg1: memref<256x256xf32, #tpu.memory_space<vmem>>, %arg2: memref<256x128xbf16, #tpu.memory_space<vmem>>, %arg3: memref<1x128xf32, #tpu.memory_space<vmem>>, %arg4: memref<128x512xbf16, #tpu.memory_space<vmem>>, %arg5: memref<1x512xf32, #tpu.memory_space<vmem>>, %arg6: memref<512x256xbf16, #tpu.memory_space<vmem>>, %arg7: memref<1x256xf32, #tpu.memory_space<vmem>>, %arg8: memref<256x128xbf16, #tpu.memory_space<vmem>>, %arg9: memref<1x128xf32, #tpu.memory_space<vmem>>, %arg10: memref<128x64xbf16, #tpu.memory_space<vmem>>, %arg11: memref<1x64xf32, #tpu.memory_space<vmem>>, %arg12: memref<1x64xf32, #tpu.memory_space<vmem>>, %arg13: memref<1x1xf32, #tpu.memory_space<vmem>>, %arg14: memref<256x1xf32, #tpu.memory_space<vmem>>) attributes {dimension_semantics = [#tpu.dimension_semantics<parallel>], iteration_bounds = array<i64: 2>, scalar_prefetch = 0 : i64, scratch_operands = 0 : i64, tpu.core_type = #tpu.core_type<tc>, window_params = [{transform_indices = @transform_0, window_bounds = array<i64: 256, 256>}, {pipeline_mode = #tpu.pipeline_mode<synchronous>, transform_indices = @transform_1, window_bounds = array<i64: 256, 128>}, {pipeline_mode = #tpu.pipeline_mode<synchronous>, transform_indices = @transform_2, window_bounds = array<i64: 1, 128>}, {pipeline_mode = #tpu.pipeline_mode<synchronous>, transform_indices = @transform_3, window_bounds = array<i64: 128, 512>}, {pipeline_mode = #tpu.pipeline_mode<synchronous>, transform_indices = @transform_4, window_bounds = array<i64: 1, 512>}, {pipeline_mode = #tpu.pipeline_mode<synchronous>, transform_indices = @transform_5, window_bounds = array<i64: 512, 256>}, {pipeline_mode = #tpu.pipeline_mode<synchronous>, transform_indices = @transform_6, window_bounds = array<i64: 1, 256>}, {pipeline_mode = #tpu.pipeline_mode<synchronous>, transform_indices = @transform_7, window_bounds = array<i64: 256, 128>}, {pipeline_mode = #tpu.pipeline_mode<synchronous>, transform_indices = @transform_8, window_bounds = array<i64: 1, 128>}, {pipeline_mode = #tpu.pipeline_mode<synchronous>, transform_indices = @transform_9, window_bounds = array<i64: 128, 64>}, {pipeline_mode = #tpu.pipeline_mode<synchronous>, transform_indices = @transform_10, window_bounds = array<i64: 1, 64>}, {pipeline_mode = #tpu.pipeline_mode<synchronous>, transform_indices = @transform_11, window_bounds = array<i64: 1, 64>}, {pipeline_mode = #tpu.pipeline_mode<synchronous>, transform_indices = @transform_12, window_bounds = array<i64: 1, 1>}, {transform_indices = @transform_13, window_bounds = array<i64: 256, 1>}]} {
    %c0 = arith.constant 0 : index
    %c0_0 = arith.constant 0 : index
    %0 = vector.load %arg1[%c0, %c0_0] : memref<256x256xf32, #tpu.memory_space<vmem>>, vector<256x256xf32>
    %1 = arith.truncf %0 : vector<256x256xf32> to vector<256x256xbf16>
    %c0_1 = arith.constant 0 : index
    %c0_2 = arith.constant 0 : index
    %2 = vector.load %arg2[%c0_1, %c0_2] : memref<256x128xbf16, #tpu.memory_space<vmem>>, vector<256x128xbf16>
    %cst = arith.constant dense<0.000000e+00> : vector<256x128xf32>
    %3 = tpu.matmul %1, %2, %cst {dimension_numbers = #tpu.dot_dimension_numbers<[1], [0], [0], [1], [0, 0, 1, 1], [], []>} : vector<256x256xbf16>, vector<256x128xbf16>, vector<256x128xf32> -> vector<256x128xf32>
    %c0_3 = arith.constant 0 : index
    %c0_4 = arith.constant 0 : index
    %4 = vector.load %arg3[%c0_3, %c0_4] : memref<1x128xf32, #tpu.memory_space<vmem>>, vector<1x128xf32>
    %5 = vector.broadcast %4 : vector<1x128xf32> to vector<256x128xf32>
    %6 = arith.addf %3, %5 : vector<256x128xf32>
    %cst_5 = arith.constant 0.000000e+00 : f32
    %7 = vector.broadcast %cst_5 : f32 to vector<256x128xf32>
    %8 = arith.maximumf %6, %7 : vector<256x128xf32>
    %9 = arith.truncf %8 : vector<256x128xf32> to vector<256x128xbf16>
    %c0_6 = arith.constant 0 : index
    %c0_7 = arith.constant 0 : index
    %10 = vector.load %arg4[%c0_6, %c0_7] : memref<128x512xbf16, #tpu.memory_space<vmem>>, vector<128x512xbf16>
    %cst_8 = arith.constant dense<0.000000e+00> : vector<256x512xf32>
    %11 = tpu.matmul %9, %10, %cst_8 {dimension_numbers = #tpu.dot_dimension_numbers<[1], [0], [0], [1], [0, 0, 1, 1], [], []>} : vector<256x128xbf16>, vector<128x512xbf16>, vector<256x512xf32> -> vector<256x512xf32>
    %c0_9 = arith.constant 0 : index
    %c0_10 = arith.constant 0 : index
    %12 = vector.load %arg5[%c0_9, %c0_10] : memref<1x512xf32, #tpu.memory_space<vmem>>, vector<1x512xf32>
    %13 = vector.broadcast %12 : vector<1x512xf32> to vector<256x512xf32>
    %14 = arith.addf %11, %13 : vector<256x512xf32>
    %cst_11 = arith.constant 0.000000e+00 : f32
    %15 = vector.broadcast %cst_11 : f32 to vector<256x512xf32>
    %16 = arith.maximumf %14, %15 : vector<256x512xf32>
    %17 = arith.truncf %16 : vector<256x512xf32> to vector<256x512xbf16>
    %c0_12 = arith.constant 0 : index
    %c0_13 = arith.constant 0 : index
    %18 = vector.load %arg6[%c0_12, %c0_13] : memref<512x256xbf16, #tpu.memory_space<vmem>>, vector<512x256xbf16>
    %cst_14 = arith.constant dense<0.000000e+00> : vector<256x256xf32>
    %19 = tpu.matmul %17, %18, %cst_14 {dimension_numbers = #tpu.dot_dimension_numbers<[1], [0], [0], [1], [0, 0, 1, 1], [], []>} : vector<256x512xbf16>, vector<512x256xbf16>, vector<256x256xf32> -> vector<256x256xf32>
    %c0_15 = arith.constant 0 : index
    %c0_16 = arith.constant 0 : index
    %20 = vector.load %arg7[%c0_15, %c0_16] : memref<1x256xf32, #tpu.memory_space<vmem>>, vector<1x256xf32>
    %21 = vector.broadcast %20 : vector<1x256xf32> to vector<256x256xf32>
    %22 = arith.addf %19, %21 : vector<256x256xf32>
    %cst_17 = arith.constant 0.000000e+00 : f32
    %23 = vector.broadcast %cst_17 : f32 to vector<256x256xf32>
    %24 = arith.maximumf %22, %23 : vector<256x256xf32>
    %25 = arith.truncf %24 : vector<256x256xf32> to vector<256x256xbf16>
    %c0_18 = arith.constant 0 : index
    %c0_19 = arith.constant 0 : index
    %26 = vector.load %arg8[%c0_18, %c0_19] : memref<256x128xbf16, #tpu.memory_space<vmem>>, vector<256x128xbf16>
    %cst_20 = arith.constant dense<0.000000e+00> : vector<256x128xf32>
    %27 = tpu.matmul %25, %26, %cst_20 {dimension_numbers = #tpu.dot_dimension_numbers<[1], [0], [0], [1], [0, 0, 1, 1], [], []>} : vector<256x256xbf16>, vector<256x128xbf16>, vector<256x128xf32> -> vector<256x128xf32>
    %c0_21 = arith.constant 0 : index
    %c0_22 = arith.constant 0 : index
    %28 = vector.load %arg9[%c0_21, %c0_22] : memref<1x128xf32, #tpu.memory_space<vmem>>, vector<1x128xf32>
    %29 = vector.broadcast %28 : vector<1x128xf32> to vector<256x128xf32>
    %30 = arith.addf %27, %29 : vector<256x128xf32>
    %cst_23 = arith.constant 0.000000e+00 : f32
    %31 = vector.broadcast %cst_23 : f32 to vector<256x128xf32>
    %32 = arith.maximumf %30, %31 : vector<256x128xf32>
    %33 = arith.truncf %32 : vector<256x128xf32> to vector<256x128xbf16>
    %c0_24 = arith.constant 0 : index
    %c0_25 = arith.constant 0 : index
    %34 = vector.load %arg10[%c0_24, %c0_25] : memref<128x64xbf16, #tpu.memory_space<vmem>>, vector<128x64xbf16>
    %cst_26 = arith.constant dense<0.000000e+00> : vector<256x64xf32>
    %35 = tpu.matmul %33, %34, %cst_26 {dimension_numbers = #tpu.dot_dimension_numbers<[1], [0], [0], [1], [0, 0, 1, 1], [], []>} : vector<256x128xbf16>, vector<128x64xbf16>, vector<256x64xf32> -> vector<256x64xf32>
    %c0_27 = arith.constant 0 : index
    %c0_28 = arith.constant 0 : index
    %36 = vector.load %arg11[%c0_27, %c0_28] : memref<1x64xf32, #tpu.memory_space<vmem>>, vector<1x64xf32>
    %37 = vector.broadcast %36 : vector<1x64xf32> to vector<256x64xf32>
    %38 = arith.addf %35, %37 : vector<256x64xf32>
    %cst_29 = arith.constant 0.000000e+00 : f32
    %39 = vector.broadcast %cst_29 : f32 to vector<256x64xf32>
    %40 = arith.maximumf %38, %39 : vector<256x64xf32>
    %c0_30 = arith.constant 0 : index
    %c0_31 = arith.constant 0 : index
    %41 = vector.load %arg12[%c0_30, %c0_31] : memref<1x64xf32, #tpu.memory_space<vmem>>, vector<1x64xf32>
    %42 = vector.broadcast %41 : vector<1x64xf32> to vector<256x64xf32>
    %43 = arith.mulf %40, %42 : vector<256x64xf32>
    %cst_32 = arith.constant dense<0.000000e+00> : vector<256xf32>
    %44 = vector.multi_reduction <add>, %43, %cst_32 [1] : vector<256x64xf32> to vector<256xf32>
    %45 = vector.shape_cast %44 : vector<256xf32> to vector<256x1xf32>
    %c0_33 = arith.constant 0 : index
    %c0_34 = arith.constant 0 : index
    %46 = vector.load %arg13[%c0_33, %c0_34] : memref<1x1xf32, #tpu.memory_space<vmem>>, vector<1x1xf32>
    %47 = vector.broadcast %46 : vector<1x1xf32> to vector<256x1xf32>
    %48 = arith.addf %45, %47 : vector<256x1xf32>
    %cst_35 = arith.constant 0.000000e+00 : f32
    %49 = vector.broadcast %cst_35 : f32 to vector<256x1xf32>
    %50 = arith.subf %49, %48 : vector<256x1xf32>
    %51 = math.exp %50 : vector<256x1xf32>
    %cst_36 = arith.constant 1.000000e+00 : f32
    %52 = vector.broadcast %cst_36 : f32 to vector<256x1xf32>
    %53 = arith.addf %52, %51 : vector<256x1xf32>
    %54 = tpu.reciprocal %53 {approx = true} : vector<256x1xf32> -> vector<256x1xf32>
    %c0_37 = arith.constant 0 : index
    %c0_38 = arith.constant 0 : index
    %55 = vector.load %arg14[%c0_37, %c0_38] : memref<256x1xf32, #tpu.memory_space<vmem>>, vector<256x1xf32>
    tpu.vector_store %arg14[%c0_37, %c0_38], %54 {strides = array<i32>} : memref<256x1xf32, #tpu.memory_space<vmem>>, vector<256x1xf32>,
    return
  }
  func.func @transform_0(%arg0: i32) -> (i32, i32) {
    %c0_i32 = arith.constant 0 : i32
    %c0_i32_0 = arith.constant 0 : i32
    return %arg0, %c0_i32 : i32, i32
  }
  func.func @transform_1(%arg0: i32) -> (i32, i32) {
    %c0_i32 = arith.constant 0 : i32
    %c0_i32_0 = arith.constant 0 : i32
    %c0_i32_1 = arith.constant 0 : i32
    return %c0_i32, %c0_i32_0 : i32, i32
  }
  func.func @transform_2(%arg0: i32) -> (i32, i32) {
    %c0_i32 = arith.constant 0 : i32
    %c0_i32_0 = arith.constant 0 : i32
    %c0_i32_1 = arith.constant 0 : i32
    return %c0_i32, %c0_i32_0 : i32, i32
  }
  func.func @transform_3(%arg0: i32) -> (i32, i32) {
    %c0_i32 = arith.constant 0 : i32
    %c0_i32_0 = arith.constant 0 : i32
    %c0_i32_1 = arith.constant 0 : i32
    return %c0_i32, %c0_i32_0 : i32, i32
  }
  func.func @transform_4(%arg0: i32) -> (i32, i32) {
    %c0_i32 = arith.constant 0 : i32
    %c0_i32_0 = arith.constant 0 : i32
    %c0_i32_1 = arith.constant 0 : i32
    return %c0_i32, %c0_i32_0 : i32, i32
  }
  func.func @transform_5(%arg0: i32) -> (i32, i32) {
    %c0_i32 = arith.constant 0 : i32
    %c0_i32_0 = arith.constant 0 : i32
    %c0_i32_1 = arith.constant 0 : i32
    return %c0_i32, %c0_i32_0 : i32, i32
  }
  func.func @transform_6(%arg0: i32) -> (i32, i32) {
    %c0_i32 = arith.constant 0 : i32
    %c0_i32_0 = arith.constant 0 : i32
    %c0_i32_1 = arith.constant 0 : i32
    return %c0_i32, %c0_i32_0 : i32, i32
  }
  func.func @transform_7(%arg0: i32) -> (i32, i32) {
    %c0_i32 = arith.constant 0 : i32
    %c0_i32_0 = arith.constant 0 : i32
    %c0_i32_1 = arith.constant 0 : i32
    return %c0_i32, %c0_i32_0 : i32, i32
  }
  func.func @transform_8(%arg0: i32) -> (i32, i32) {
    %c0_i32 = arith.constant 0 : i32
    %c0_i32_0 = arith.constant 0 : i32
    %c0_i32_1 = arith.constant 0 : i32
    return %c0_i32, %c0_i32_0 : i32, i32
  }
  func.func @transform_9(%arg0: i32) -> (i32, i32) {
    %c0_i32 = arith.constant 0 : i32
    %c0_i32_0 = arith.constant 0 : i32
    %c0_i32_1 = arith.constant 0 : i32
    return %c0_i32, %c0_i32_0 : i32, i32
  }
  func.func @transform_10(%arg0: i32) -> (i32, i32) {
    %c0_i32 = arith.constant 0 : i32
    %c0_i32_0 = arith.constant 0 : i32
    %c0_i32_1 = arith.constant 0 : i32
    return %c0_i32, %c0_i32_0 : i32, i32
  }
  func.func @transform_11(%arg0: i32) -> (i32, i32) {
    %c0_i32 = arith.constant 0 : i32
    %c0_i32_0 = arith.constant 0 : i32
    %c0_i32_1 = arith.constant 0 : i32
    return %c0_i32, %c0_i32_0 : i32, i32
  }
  func.func @transform_12(%arg0: i32) -> (i32, i32) {
    %c0_i32 = arith.constant 0 : i32
    %c0_i32_0 = arith.constant 0 : i32
    %c0_i32_1 = arith.constant 0 : i32
    return %c0_i32, %c0_i32_0 : i32, i32
  }
  func.func @transform_13(%arg0: i32) -> (i32, i32) {
    %c0_i32 = arith.constant 0 : i32
    %c0_i32_0 = arith.constant 0 : i32
    return %arg0, %c0_i32 : i32, i32
  }
}

</mosaic_0001>

<llo_original>
// kernel: tpu_custom_call.1
$region0: #{tpu_custom_call.1}
  #allocation0 [shape = 'u32[]', space=smem, size = 0x4, offset = 0x4, fixed_abs, tag = 'smem constant byte address 0x4 - core index']
  #allocation1 [shape = 'u32[144,128]{1,0:T(1,128)}', space=vmem, size = 0x12000, scoped, tag = 'internal scratch']
  #allocation2 [shape = 'f32[1,1]{1,0:T(1,128)S(1)}', space=vmem, size = 0x200, scoped, tag = 'scoped memory for tpu_custom_call.1']
  %s0 = inlined_call_operand.hbm [shape: f32[512,256], index: 0, kind: input, shape index: {}]
  %s1 = inlined_call_operand.hbm [shape: bf16[256,128], index: 1, kind: input, shape index: {}]
  %s2 = inlined_call_operand.vmem [shape: f32[1,128], index: 2, kind: input, shape index: {}]
  %s3 = inlined_call_operand.hbm [shape: bf16[128,512], index: 3, kind: input, shape index: {}]
  %s4 = inlined_call_operand.vmem [shape: f32[1,512], index: 4, kind: input, shape index: {}]
  %s5 = inlined_call_operand.hbm [shape: bf16[512,256], index: 5, kind: input, shape index: {}]
  %s6 = inlined_call_operand.vmem [shape: f32[1,256], index: 6, kind: input, shape index: {}]
  %s7 = inlined_call_operand.hbm [shape: bf16[256,128], index: 7, kind: input, shape index: {}]
  %s8 = inlined_call_operand.vmem [shape: f32[1,128], index: 8, kind: input, shape index: {}]
  %s9 = inlined_call_operand.vmem [shape: bf16[128,64], index: 9, kind: input, shape index: {}]
  %s10 = inlined_call_operand.vmem [shape: f32[1,64], index: 10, kind: input, shape index: {}]
  %s11 = inlined_call_operand.vmem [shape: f32[1,64], index: 11, kind: input, shape index: {}]
  %s12 = inlined_call_operand.<no memory space> [shape: f32[1,1], index: 12, kind: input, shape index: {}]
  %s13 = inlined_call_operand.vmem [shape: f32[512,1], index: 13, kind: output, shape index: {}]
  %s14 = sld [smem:[#allocation0]]
  $region105: #{tpu_custom_call.1} parent=0
    _
  %s16 = ssub.s32 1, %s14
  %s17 = scalar_select 0, %s16, %s14
  %v18 = vstv %s12
  %19 = vst [vmem:[#allocation2] sm:$0x1] %v18
  $region1: #{tpu_custom_call.1} parent=0
    #allocation3 [shape = 'u8[524288]{0}', space=vmem, size = 0x80000, scoped, tag = 'input window, operand 0']
    #allocation4 [shape = 's32[2]{0}', space=sflag, size = 0x8, scoped, tag = 'scoped memory for tpu_custom_call.1']
    #allocation5 [shape = 'u8[65536]{0}', space=vmem, size = 0x10000, scoped, tag = 'input window, operand 1, single buffered']
    #allocation6 [shape = 's32[1]{0}', space=sflag, size = 0x4, scoped, tag = 'scoped memory for tpu_custom_call.1']
    #allocation7 [shape = 'u8[131072]{0}', space=vmem, size = 0x20000, scoped, tag = 'input window, operand 3, single buffered']
    #allocation8 [shape = 'u8[262144]{0}', space=vmem, size = 0x40000, scoped, tag = 'input window, operand 5, single buffered']
    #allocation9 [shape = 's32[1]{0}', space=sflag, size = 0x4, scoped, tag = 'scoped memory for tpu_custom_call.1']
    #allocation10 [shape = 'u8[65536]{0}', space=vmem, size = 0x10000, scoped, tag = 'input window, operand 7, single buffered']
    %20 = vsyncpa [#allocation4], 0
    %s21 = scalar_lea.sflag [#allocation4], 1
    %22 = vsyncpa %s21, 0
    %23 = vsyncpa [#allocation6], 0
    %24 = vsyncpa [#allocation9], 0
    loop: start=0, step=1, limit=4
    $region2: #{tpu_custom_call.1} parent=1 // loop_pre_header
      _
    $region3: #{tpu_custom_call.1} parent=1 // loop_header
      %s26 = sphi 0, %s30
      %p27 = scmp.ge.s32.totalorder %s26, 4
      %s36 = sphi 0, %s38
      %s39 = sphi 0, %s36
      %s40 = sphi 0, %s39
      %s56 = sphi 0, %s40
      %s60 = sphi 0, %s60
      %s62 = sphi 0, %s60
      %s63 = sphi 0, %s62
      %s77 = sphi 0, %s63
      %s81 = sphi 0, %s81
      %s83 = sphi 0, %s81
      %s84 = sphi 0, %s83
      %s98 = sphi 0, %s84
      %s102 = sphi 0, %s102
      %s104 = sphi 0, %s102
      %s105 = sphi 0, %s104
      %s119 = sphi 0, %s105
      %s123 = sphi 0, %s123
      %s125 = sphi 0, %s123
      %s126 = sphi 0, %s125
      %s140 = sphi 0, %s126
      %s144 = sphi 0, %s144
      %s146 = sphi 0, %s144
      %s147 = sphi 0, %s146
      %s161 = sphi 0, %s147
      %s165 = sphi 0, %s165
      %s167 = sphi 0, %s165
      %s168 = sphi 0, %s167
      %s182 = sphi 0, %s168
      %s186 = sphi 0, %s186
      %s188 = sphi 0, %s186
      %s189 = sphi 0, %s188
      %s203 = sphi 0, %s189
      %s207 = sphi 0, %s207
      %s209 = sphi 0, %s207
      %s210 = sphi 0, %s209
      %s224 = sphi 0, %s210
      %s228 = sphi 0, %s228
      %s230 = sphi 0, %s228
      %s231 = sphi 0, %s230
      %s245 = sphi 0, %s231
      %s249 = sphi 0, %s249
      %s251 = sphi 0, %s249
      %s252 = sphi 0, %s251
      %s266 = sphi 0, %s252
      %s270 = sphi 0, %s270
      %s272 = sphi 0, %s270
      %s273 = sphi 0, %s272
      %s287 = sphi 0, %s273
      %s291 = sphi 0, %s291
      %s293 = sphi 0, %s291
      %s294 = sphi 0, %s293
      %s308 = sphi 0, %s294
      %s314 = sphi 0, %s316
      %s317 = sphi 0, %s314
      %s318 = sphi 0, %s317
      %s334 = sphi 0, %s318
    $region4: #{tpu_custom_call.1} parent=1 // loop_header_branch
      %29 = sbr.rel (%p27) target = $region8
    $region5: #{tpu_custom_call.1} parent=1 // loop_body
      %s31 = ssub.s32 %s26, 1
      %s32 = ssub.s32 %s26, 2
      %s33 = sadd.s32 %s26, 1
      %s34 = ssub.s32 %s26, %s33
      %p35 = scmp.eq.s32.totalorder %s34, 0
      %s37 = sadd.s32 %s36, 1
      %s38 = scalar_select %p35, %s36, %s37
      %p41 = pneg %p35
      %p42 = scmp.eq.s32.totalorder %s26, 1
      %p43 = por %p41, %p42
      %p44 = scmp.ne.s32.totalorder %s36, %s39
      %p45 = scmp.eq.s32.totalorder %s26, 0
      %p46 = por %p44, %p45
      %p47 = scmp.ne.s32.totalorder %s36, %s39
      %p48 = scmp.eq.s32.totalorder %s31, 1
      %p49 = por %p47, %p48
      %p50 = scmp.ne.s32.totalorder %s39, %s40
      %p51 = scmp.eq.s32.totalorder %s31, 0
      %p52 = por %p50, %p51
      %p53 = scmp.ne.s32.totalorder %s39, %s40
      %p54 = scmp.eq.s32.totalorder %s32, 1
      %p55 = por %p53, %p54
      %p57 = scmp.ne.s32.totalorder %s40, %s56
      %p58 = scmp.eq.s32.totalorder %s32, 0
      %p59 = por %p57, %p58
      %s61 = sadd.s32 %s60, 1
      %p64 = scmp.eq.s32.totalorder %s26, 1
      %p65 = scmp.ne.s32.totalorder %s60, %s62
      %p66 = scmp.eq.s32.totalorder %s26, 0
      %p67 = por %p65, %p66
      %p68 = scmp.ne.s32.totalorder %s60, %s62
      %p69 = scmp.eq.s32.totalorder %s31, 1
      %p70 = por %p68, %p69
      %p71 = scmp.ne.s32.totalorder %s62, %s63
      %p72 = scmp.eq.s32.totalorder %s31, 0
      %p73 = por %p71, %p72
      %p74 = scmp.ne.s32.totalorder %s62, %s63
      %p75 = scmp.eq.s32.totalorder %s32, 1
      %p76 = por %p74, %p75
      %p78 = scmp.ne.s32.totalorder %s63, %s77
      %p79 = scmp.eq.s32.totalorder %s32, 0
      %p80 = por %p78, %p79
      %s82 = sadd.s32 %s81, 1
      %p85 = scmp.eq.s32.totalorder %s26, 1
      %p86 = scmp.ne.s32.totalorder %s81, %s83
      %p87 = scmp.eq.s32.totalorder %s26, 0
      %p88 = por %p86, %p87
      %p89 = scmp.ne.s32.totalorder %s81, %s83
      %p90 = scmp.eq.s32.totalorder %s31, 1
      %p91 = por %p89, %p90
      %p92 = scmp.ne.s32.totalorder %s83, %s84
      %p93 = scmp.eq.s32.totalorder %s31, 0
      %p94 = por %p92, %p93
      %p95 = scmp.ne.s32.totalorder %s83, %s84
      %p96 = scmp.eq.s32.totalorder %s32, 1
      %p97 = por %p95, %p96
      %p99 = scmp.ne.s32.totalorder %s84, %s98
      %p100 = scmp.eq.s32.totalorder %s32, 0
      %p101 = por %p99, %p100
      %s103 = sadd.s32 %s102, 1
      %p106 = scmp.eq.s32.totalorder %s26, 1
      %p107 = scmp.ne.s32.totalorder %s102, %s104
      %p108 = scmp.eq.s32.totalorder %s26, 0
      %p109 = por %p107, %p108
      %p110 = scmp.ne.s32.totalorder %s102, %s104
      %p111 = scmp.eq.s32.totalorder %s31, 1
      %p112 = por %p110, %p111
      %p113 = scmp.ne.s32.totalorder %s104, %s105
      %p114 = scmp.eq.s32.totalorder %s31, 0
      %p115 = por %p113, %p114
      %p116 = scmp.ne.s32.totalorder %s104, %s105
      %p117 = scmp.eq.s32.totalorder %s32, 1
      %p118 = por %p116, %p117
      %p120 = scmp.ne.s32.totalorder %s105, %s119
      %p121 = scmp.eq.s32.totalorder %s32, 0
      %p122 = por %p120, %p121
      %s124 = sadd.s32 %s123, 1
      %p127 = scmp.eq.s32.totalorder %s26, 1
      %p128 = scmp.ne.s32.totalorder %s123, %s125
      %p129 = scmp.eq.s32.totalorder %s26, 0
      %p130 = por %p128, %p129
      %p131 = scmp.ne.s32.totalorder %s123, %s125
      %p132 = scmp.eq.s32.totalorder %s31, 1
      %p133 = por %p131, %p132
      %p134 = scmp.ne.s32.totalorder %s125, %s126
      %p135 = scmp.eq.s32.totalorder %s31, 0
      %p136 = por %p134, %p135
      %p137 = scmp.ne.s32.totalorder %s125, %s126
      %p138 = scmp.eq.s32.totalorder %s32, 1
      %p139 = por %p137, %p138
      %p141 = scmp.ne.s32.totalorder %s126, %s140
      %p142 = scmp.eq.s32.totalorder %s32, 0
      %p143 = por %p141, %p142
      %s145 = sadd.s32 %s144, 1
      %p148 = scmp.eq.s32.totalorder %s26, 1
      %p149 = scmp.ne.s32.totalorder %s144, %s146
      %p150 = scmp.eq.s32.totalorder %s26, 0
      %p151 = por %p149, %p150
      %p152 = scmp.ne.s32.totalorder %s144, %s146
      %p153 = scmp.eq.s32.totalorder %s31, 1
      %p154 = por %p152, %p153
      %p155 = scmp.ne.s32.totalorder %s146, %s147
      %p156 = scmp.eq.s32.totalorder %s31, 0
      %p157 = por %p155, %p156
      %p158 = scmp.ne.s32.totalorder %s146, %s147
      %p159 = scmp.eq.s32.totalorder %s32, 1
      %p160 = por %p158, %p159
      %p162 = scmp.ne.s32.totalorder %s147, %s161
      %p163 = scmp.eq.s32.totalorder %s32, 0
      %p164 = por %p162, %p163
      %s166 = sadd.s32 %s165, 1
      %p169 = scmp.eq.s32.totalorder %s26, 1
      %p170 = scmp.ne.s32.totalorder %s165, %s167
      %p171 = scmp.eq.s32.totalorder %s26, 0
      %p172 = por %p170, %p171
      %p173 = scmp.ne.s32.totalorder %s165, %s167
      %p174 = scmp.eq.s32.totalorder %s31, 1
      %p175 = por %p173, %p174
      %p176 = scmp.ne.s32.totalorder %s167, %s168
      %p177 = scmp.eq.s32.totalorder %s31, 0
      %p178 = por %p176, %p177
      %p179 = scmp.ne.s32.totalorder %s167, %s168
      %p180 = scmp.eq.s32.totalorder %s32, 1
      %p181 = por %p179, %p180
      %p183 = scmp.ne.s32.totalorder %s168, %s182
      %p184 = scmp.eq.s32.totalorder %s32, 0
      %p185 = por %p183, %p184
      %s187 = sadd.s32 %s186, 1
      %p190 = scmp.eq.s32.totalorder %s26, 1
      %p191 = scmp.ne.s32.totalorder %s186, %s188
      %p192 = scmp.eq.s32.totalorder %s26, 0
      %p193 = por %p191, %p192
      %p194 = scmp.ne.s32.totalorder %s186, %s188
      %p195 = scmp.eq.s32.totalorder %s31, 1
      %p196 = por %p194, %p195
      %p197 = scmp.ne.s32.totalorder %s188, %s189
      %p198 = scmp.eq.s32.totalorder %s31, 0
      %p199 = por %p197, %p198
      %p200 = scmp.ne.s32.totalorder %s188, %s189
      %p201 = scmp.eq.s32.totalorder %s32, 1
      %p202 = por %p200, %p201
      %p204 = scmp.ne.s32.totalorder %s189, %s203
      %p205 = scmp.eq.s32.totalorder %s32, 0
      %p206 = por %p204, %p205
      %s208 = sadd.s32 %s207, 1
      %p211 = scmp.eq.s32.totalorder %s26, 1
      %p212 = scmp.ne.s32.totalorder %s207, %s209
      %p213 = scmp.eq.s32.totalorder %s26, 0
      %p214 = por %p212, %p213
      %p215 = scmp.ne.s32.totalorder %s207, %s209
      %p216 = scmp.eq.s32.totalorder %s31, 1
      %p217 = por %p215, %p216
      %p218 = scmp.ne.s32.totalorder %s209, %s210
      %p219 = scmp.eq.s32.totalorder %s31, 0
      %p220 = por %p218, %p219
      %p221 = scmp.ne.s32.totalorder %s209, %s210
      %p222 = scmp.eq.s32.totalorder %s32, 1
      %p223 = por %p221, %p222
      %p225 = scmp.ne.s32.totalorder %s210, %s224
      %p226 = scmp.eq.s32.totalorder %s32, 0
      %p227 = por %p225, %p226
      %s229 = sadd.s32 %s228, 1
      %p232 = scmp.eq.s32.totalorder %s26, 1
      %p233 = scmp.ne.s32.totalorder %s228, %s230
      %p234 = scmp.eq.s32.totalorder %s26, 0
      %p235 = por %p233, %p234
      %p236 = scmp.ne.s32.totalorder %s228, %s230
      %p237 = scmp.eq.s32.totalorder %s31, 1
      %p238 = por %p236, %p237
      %p239 = scmp.ne.s32.totalorder %s230, %s231
      %p240 = scmp.eq.s32.totalorder %s31, 0
      %p241 = por %p239, %p240
      %p242 = scmp.ne.s32.totalorder %s230, %s231
      %p243 = scmp.eq.s32.totalorder %s32, 1
      %p244 = por %p242, %p243
      %p246 = scmp.ne.s32.totalorder %s231, %s245
      %p247 = scmp.eq.s32.totalorder %s32, 0
      %p248 = por %p246, %p247
      %s250 = sadd.s32 %s249, 1
      %p253 = scmp.eq.s32.totalorder %s26, 1
      %p254 = scmp.ne.s32.totalorder %s249, %s251
      %p255 = scmp.eq.s32.totalorder %s26, 0
      %p256 = por %p254, %p255
      %p257 = scmp.ne.s32.totalorder %s249, %s251
      %p258 = scmp.eq.s32.totalorder %s31, 1
      %p259 = por %p257, %p258
      %p260 = scmp.ne.s32.totalorder %s251, %s252
      %p261 = scmp.eq.s32.totalorder %s31, 0
      %p262 = por %p260, %p261
      %p263 = scmp.ne.s32.totalorder %s251, %s252
      %p264 = scmp.eq.s32.totalorder %s32, 1
      %p265 = por %p263, %p264
      %p267 = scmp.ne.s32.totalorder %s252, %s266
      %p268 = scmp.eq.s32.totalorder %s32, 0
      %p269 = por %p267, %p268
      %s271 = sadd.s32 %s270, 1
      %p274 = scmp.eq.s32.totalorder %s26, 1
      %p275 = scmp.ne.s32.totalorder %s270, %s272
      %p276 = scmp.eq.s32.totalorder %s26, 0
      %p277 = por %p275, %p276
      %p278 = scmp.ne.s32.totalorder %s270, %s272
      %p279 = scmp.eq.s32.totalorder %s31, 1
      %p280 = por %p278, %p279
      %p281 = scmp.ne.s32.totalorder %s272, %s273
      %p282 = scmp.eq.s32.totalorder %s31, 0
      %p283 = por %p281, %p282
      %p284 = scmp.ne.s32.totalorder %s272, %s273
      %p285 = scmp.eq.s32.totalorder %s32, 1
      %p286 = por %p284, %p285
      %p288 = scmp.ne.s32.totalorder %s273, %s287
      %p289 = scmp.eq.s32.totalorder %s32, 0
      %p290 = por %p288, %p289
      %s292 = sadd.s32 %s291, 1
      %p295 = scmp.eq.s32.totalorder %s26, 1
      %p296 = scmp.ne.s32.totalorder %s291, %s293
      %p297 = scmp.eq.s32.totalorder %s26, 0
      %p298 = por %p296, %p297
      %p299 = scmp.ne.s32.totalorder %s291, %s293
      %p300 = scmp.eq.s32.totalorder %s31, 1
      %p301 = por %p299, %p300
      %p302 = scmp.ne.s32.totalorder %s293, %s294
      %p303 = scmp.eq.s32.totalorder %s31, 0
      %p304 = por %p302, %p303
      %p305 = scmp.ne.s32.totalorder %s293, %s294
      %p306 = scmp.eq.s32.totalorder %s32, 1
      %p307 = por %p305, %p306
      %p309 = scmp.ne.s32.totalorder %s294, %s308
      %p310 = scmp.eq.s32.totalorder %s32, 0
      %p311 = por %p309, %p310
      %s312 = ssub.s32 %s26, %s33
      %p313 = scmp.eq.s32.totalorder %s312, 0
      %s315 = sadd.s32 %s314, 1
      %s316 = scalar_select %p313, %s314, %s315
      %p319 = pneg %p313
      %p320 = scmp.eq.s32.totalorder %s26, 1
      %p321 = por %p319, %p320
      %p322 = scmp.ne.s32.totalorder %s314, %s317
      %p323 = scmp.eq.s32.totalorder %s26, 0
      %p324 = por %p322, %p323
      %p325 = scmp.ne.s32.totalorder %s314, %s317
      %p326 = scmp.eq.s32.totalorder %s31, 1
      %p327 = por %p325, %p326
      %p328 = scmp.ne.s32.totalorder %s317, %s318
      %p329 = scmp.eq.s32.totalorder %s31, 0
      %p330 = por %p328, %p329
      %p331 = scmp.ne.s32.totalorder %s317, %s318
      %p332 = scmp.eq.s32.totalorder %s32, 1
      %p333 = por %p331, %p332
      %p335 = scmp.ne.s32.totalorder %s318, %s334
      %p336 = scmp.eq.s32.totalorder %s32, 0
      %p337 = por %p335, %p336
      %p338 = scmp.le.s32.totalorder 1, %s26
      %p339 = scmp.lt.s32.totalorder %s26, 3
      %p340 = pnand %p338, %p339
      %p341 = pneg %p340
      // Predicated region
      $region9: #{tpu_custom_call.1} parent=5 // pred_check
        _
      $region10: #{tpu_custom_call.1} parent=5 // pred_check_branch
        %343 = sbr.rel (%p340) target = $region12
      $region11: #{tpu_custom_call.1} parent=5 // pred_region
        %s344 = ssub.s32 %s26, 1
        // Predicated region
        $region13: #{tpu_custom_call.1} parent=11 // pred_check
          %p345 = pneg %p73
        $region14: #{tpu_custom_call.1} parent=11 // pred_check_branch
          %347 = sbr.rel (%p345) target = $region16
        $region15: #{tpu_custom_call.1} parent=11 // pred_region
          %s349 = ssub.s32 2048, 2048
          %350 = vsyncadd [#allocation6], %s349
          %s351 = sshll.u32 [#allocation5], 4
          %s352 = int_to_ptr.vmem [resolvable:$true] %s351
          %357 = dma.hbm_to_vmem [thread:$0]  %s1, 2048, %s352, [#allocation6], 64, 64, 4
        $region16: #{tpu_custom_call.1} parent=11 // pred_fallthru
          _
        // Predicated region
        $region17: #{tpu_custom_call.1} parent=11 // pred_check
          %p358 = pneg %p94
        $region18: #{tpu_custom_call.1} parent=11 // pred_check_branch
          %360 = sbr.rel (%p358) target = $region20
        $region19: #{tpu_custom_call.1} parent=11 // pred_region
          _
        $region20: #{tpu_custom_call.1} parent=11 // pred_fallthru
          _
        // Predicated region
        $region21: #{tpu_custom_call.1} parent=11 // pred_check
          %p361 = pneg %p115
        $region22: #{tpu_custom_call.1} parent=11 // pred_check_branch
          %363 = sbr.rel (%p361) target = $region24
        $region23: #{tpu_custom_call.1} parent=11 // pred_region
          %s365 = ssub.s32 4096, 4096
          %366 = vsyncadd [#allocation6], %s365
          %s367 = sshll.u32 [#allocation7], 4
          %s368 = int_to_ptr.vmem [resolvable:$true] %s367
          %373 = dma.hbm_to_vmem [thread:$0]  %s3, 4096, %s368, [#allocation6], 256, 256, 16
        $region24: #{tpu_custom_call.1} parent=11 // pred_fallthru
          _
        // Predicated region
        $region25: #{tpu_custom_call.1} parent=11 // pred_check
          %p374 = pneg %p136
        $region26: #{tpu_custom_call.1} parent=11 // pred_check_branch
          %376 = sbr.rel (%p374) target = $region28
        $region27: #{tpu_custom_call.1} parent=11 // pred_region
          _
        $region28: #{tpu_custom_call.1} parent=11 // pred_fallthru
          _
        // Predicated region
        $region29: #{tpu_custom_call.1} parent=11 // pred_check
          %p377 = pneg %p157
        $region30: #{tpu_custom_call.1} parent=11 // pred_check_branch
          %379 = sbr.rel (%p377) target = $region32
        $region31: #{tpu_custom_call.1} parent=11 // pred_region
          %s381 = ssub.s32 8192, 8192
          %382 = vsyncadd [#allocation9], %s381
          %s383 = sshll.u32 [#allocation8], 4
          %s384 = int_to_ptr.vmem [resolvable:$true] %s383
          %389 = dma.hbm_to_vmem [thread:$0]  %s5, 8192, %s384, [#allocation9], 128, 128, 8
        $region32: #{tpu_custom_call.1} parent=11 // pred_fallthru
          _
        // Predicated region
        $region33: #{tpu_custom_call.1} parent=11 // pred_check
          %p390 = pneg %p178
        $region34: #{tpu_custom_call.1} parent=11 // pred_check_branch
          %392 = sbr.rel (%p390) target = $region36
        $region35: #{tpu_custom_call.1} parent=11 // pred_region
          _
        $region36: #{tpu_custom_call.1} parent=11 // pred_fallthru
          _
        // Predicated region
        $region37: #{tpu_custom_call.1} parent=11 // pred_check
          %p393 = pneg %p199
        $region38: #{tpu_custom_call.1} parent=11 // pred_check_branch
          %395 = sbr.rel (%p393) target = $region40
        $region39: #{tpu_custom_call.1} parent=11 // pred_region
          %s397 = ssub.s32 2048, 2048
          %398 = vsyncadd [#allocation9], %s397
          %s399 = sshll.u32 [#allocation10], 4
          %s400 = int_to_ptr.vmem [resolvable:$true] %s399
          %405 = dma.hbm_to_vmem [thread:$0]  %s7, 2048, %s400, [#allocation9], 64, 64, 4
        $region40: #{tpu_custom_call.1} parent=11 // pred_fallthru
          _
        // Predicated region
        $region41: #{tpu_custom_call.1} parent=11 // pred_check
          %p406 = pneg %p220
        $region42: #{tpu_custom_call.1} parent=11 // pred_check_branch
          %408 = sbr.rel (%p406) target = $region44
        $region43: #{tpu_custom_call.1} parent=11 // pred_region
          _
        $region44: #{tpu_custom_call.1} parent=11 // pred_fallthru
          _
        // Predicated region
        $region45: #{tpu_custom_call.1} parent=11 // pred_check
          %p409 = pneg %p241
        $region46: #{tpu_custom_call.1} parent=11 // pred_check_branch
          %411 = sbr.rel (%p409) target = $region48
        $region47: #{tpu_custom_call.1} parent=11 // pred_region
          _
        $region48: #{tpu_custom_call.1} parent=11 // pred_fallthru
          _
        // Predicated region
        $region49: #{tpu_custom_call.1} parent=11 // pred_check
          %p412 = pneg %p262
        $region50: #{tpu_custom_call.1} parent=11 // pred_check_branch
          %414 = sbr.rel (%p412) target = $region52
        $region51: #{tpu_custom_call.1} parent=11 // pred_region
          _
        $region52: #{tpu_custom_call.1} parent=11 // pred_fallthru
          _
        // Predicated region
        $region53: #{tpu_custom_call.1} parent=11 // pred_check
          %p415 = pneg %p283
        $region54: #{tpu_custom_call.1} parent=11 // pred_check_branch
          %417 = sbr.rel (%p415) target = $region56
        $region55: #{tpu_custom_call.1} parent=11 // pred_region
          _
        $region56: #{tpu_custom_call.1} parent=11 // pred_fallthru
          _
        // Predicated region
        $region57: #{tpu_custom_call.1} parent=11 // pred_check
          %p418 = pneg %p304
        $region58: #{tpu_custom_call.1} parent=11 // pred_check_branch
          %420 = sbr.rel (%p418) target = $region60
        $region59: #{tpu_custom_call.1} parent=11 // pred_region
          _
        $region60: #{tpu_custom_call.1} parent=11 // pred_fallthru
          _
      $region12: #{tpu_custom_call.1} parent=5 // pred_fallthru
        _
      %p421 = scmp.lt.s32.totalorder %s26, 2
      // Predicated region
      $region61: #{tpu_custom_call.1} parent=5 // pred_check
        %p422 = pneg %p421
      $region62: #{tpu_custom_call.1} parent=5 // pred_check_branch
        %424 = sbr.rel (%p422) target = $region64
      $region63: #{tpu_custom_call.1} parent=5 // pred_region
        // Predicated region
        $region65: #{tpu_custom_call.1} parent=63 // pred_check
          %p425 = pneg %p46
        $region66: #{tpu_custom_call.1} parent=63 // pred_check_branch
          %427 = sbr.rel (%p425) target = $region68
        $region67: #{tpu_custom_call.1} parent=63 // pred_region
          %s428 = sand.u32 %s36, 1
          %s429 = scalar_lea.sflag [#allocation4], %s428
          %s430 = sand.u32 %s36, 1
          %s431 = smul.addr %s430, 512
          %s432 = scalar_lea.vmem [#allocation3], %s431
          %s433 = smul.u32 32, %s26
          %s435 = ssub.s32 8192, 8192
          %436 = vsyncadd %s429, %s435
          %s437 = smul.addr %s433, 2
          %s438 = smul.addr %s437, 128
          %s439 = scalar_lea.hbm %s0, %s438
          %s440 = sshll.u32 %s432, 4
          %s441 = int_to_ptr.vmem [resolvable:$true] %s440
          %446 = dma.hbm_to_vmem [thread:$0]  %s439, 8192, %s441, %s429, 256, 256, 16
        $region68: #{tpu_custom_call.1} parent=63 // pred_fallthru
          _
      $region64: #{tpu_custom_call.1} parent=5 // pred_fallthru
        _
      %p447 = scmp.le.s32.totalorder 1, %s26
      %p448 = scmp.lt.s32.totalorder %s26, 3
      %p449 = pnand %p447, %p448
      %p450 = pneg %p449
      // Predicated region
      $region69: #{tpu_custom_call.1} parent=5 // pred_check
        _
      $region70: #{tpu_custom_call.1} parent=5 // pred_check_branch
        %452 = sbr.rel (%p449) target = $region72
      $region71: #{tpu_custom_call.1} parent=5 // pred_region
        %s453 = ssub.s32 %s26, 1
        %s454 = sand.u32 %s39, 1
        %s455 = scalar_lea.sflag [#allocation4], %s454
        %s456 = sand.u32 %s39, 1
        %s457 = smul.addr %s456, 512
        %s458 = scalar_lea.vmem [#allocation3], %s457
        // Predicated region
        $region73: #{tpu_custom_call.1} parent=71 // pred_check
          %p459 = pneg %p52
        $region74: #{tpu_custom_call.1} parent=71 // pred_check_branch
          %461 = sbr.rel (%p459) target = $region76
        $region75: #{tpu_custom_call.1} parent=71 // pred_region
          %462 = dma.done %s455, 8192
        $region76: #{tpu_custom_call.1} parent=71 // pred_fallthru
          _
        // Predicated region
        $region77: #{tpu_custom_call.1} parent=71 // pred_check
          %p463 = pneg %p73
        $region78: #{tpu_custom_call.1} parent=71 // pred_check_branch
          %465 = sbr.rel (%p463) target = $region80
        $region79: #{tpu_custom_call.1} parent=71 // pred_region
          %466 = dma.done [#allocation6], 2048
        $region80: #{tpu_custom_call.1} parent=71 // pred_fallthru
          _
        // Predicated region
        $region81: #{tpu_custom_call.1} parent=71 // pred_check
          %p467 = pneg %p115
        $region82: #{tpu_custom_call.1} parent=71 // pred_check_branch
          %469 = sbr.rel (%p467) target = $region84
        $region83: #{tpu_custom_call.1} parent=71 // pred_region
          %470 = dma.done [#allocation6], 4096
        $region84: #{tpu_custom_call.1} parent=71 // pred_fallthru
          _
        // Predicated region
        $region85: #{tpu_custom_call.1} parent=71 // pred_check
          %p471 = pneg %p157
        $region86: #{tpu_custom_call.1} parent=71 // pred_check_branch
          %473 = sbr.rel (%p471) target = $region88
        $region87: #{tpu_custom_call.1} parent=71 // pred_region
          %474 = dma.done [#allocation9], 8192
        $region88: #{tpu_custom_call.1} parent=71 // pred_fallthru
          _
        // Predicated region
        $region89: #{tpu_custom_call.1} parent=71 // pred_check
          %p475 = pneg %p199
        $region90: #{tpu_custom_call.1} parent=71 // pred_check_branch
          %477 = sbr.rel (%p475) target = $region92
        $region91: #{tpu_custom_call.1} parent=71 // pred_region
          %478 = dma.done [#allocation9], 2048
        $region92: #{tpu_custom_call.1} parent=71 // pred_fallthru
          _
        %s479 = sand.u32 %s39, 1
        %s480 = scalar_lea.sflag [#allocation4], %s479
        %s481 = sand.u32 %s39, 1
        %s482 = smul.addr %s481, 512
        %s483 = scalar_lea.vmem [#allocation3], %s482
        %p484 = pneg %p52
        %p485 = pneg %p49
        %p486 = pneg %p73
        %p487 = pneg %p70
        %p488 = pneg %p94
        %p489 = pneg %p91
        %p490 = pneg %p115
        %p491 = pneg %p112
        %p492 = pneg %p136
        %p493 = pneg %p133
        %p494 = pneg %p157
        %p495 = pneg %p154
        %p496 = pneg %p178
        %p497 = pneg %p175
        %p498 = pneg %p199
        %p499 = pneg %p196
        %p500 = pneg %p220
        %p501 = pneg %p217
        %p502 = pneg %p241
        %p503 = pneg %p238
        %p504 = pneg %p262
        %p505 = pneg %p259
        %p506 = pneg %p283
        %p507 = pneg %p280
        %p508 = pneg %p304
        %p509 = pneg %p301
        %p510 = pneg %p330
        %p511 = pneg %p327
        %s512 = smul.u32 32, %s31
        %p513 = scmp.lt.s32.totalorder %s512, 63
        %s514 = scalar_select %p513, %s512, 63
        %s515 = smul.addr %s514, 8
        %s516 = scalar_lea.vmem %s13, %s515
        %s517 = smul.u32 32, %s31
        %s518 = smul.u32 32, %s31
        %p519 = scmp.lt.s32.totalorder %s518, 63
        %s520 = scalar_select %p519, %s518, 63
        %s521 = smul.addr %s520, 8
        %s522 = scalar_lea.vmem %s13, %s521
        %s523 = smul.u32 32, %s31
        %v525 = vld [vmem:[%s458] sm:$0xff]
        %v526 = vld [vmem:[%s458 + $0x8] sm:$0xff]
        %v527 = vld [vmem:[%s458 + $0x10] sm:$0xff]
        %v528 = vld [vmem:[%s458 + $0x18] sm:$0xff]
        %v529 = vld [vmem:[%s458 + $0x20] sm:$0xff]
        %v530 = vld [vmem:[%s458 + $0x28] sm:$0xff]
        %v531 = vld [vmem:[%s458 + $0x30] sm:$0xff]
        %v532 = vld [vmem:[%s458 + $0x38] sm:$0xff]
        %v533 = vld [vmem:[%s458 + $0x40] sm:$0xff]
        %v534 = vld [vmem:[%s458 + $0x48] sm:$0xff]
        %v535 = vld [vmem:[%s458 + $0x50] sm:$0xff]
        %v536 = vld [vmem:[%s458 + $0x58] sm:$0xff]
        %v537 = vld [vmem:[%s458 + $0x60] sm:$0xff]
        %v538 = vld [vmem:[%s458 + $0x68] sm:$0xff]
        %v539 = vld [vmem:[%s458 + $0x70] sm:$0xff]
        %v540 = vld [vmem:[%s458 + $0x78] sm:$0xff]
        %v541 = vld [vmem:[%s458 + $0x80] sm:$0xff]
        %v542 = vld [vmem:[%s458 + $0x88] sm:$0xff]
        %v543 = vld [vmem:[%s458 + $0x90] sm:$0xff]
        %v544 = vld [vmem:[%s458 + $0x98] sm:$0xff]
        %v545 = vld [vmem:[%s458 + $0xa0] sm:$0xff]
        %v546 = vld [vmem:[%s458 + $0xa8] sm:$0xff]
        %v547 = vld [vmem:[%s458 + $0xb0] sm:$0xff]
        %v548 = vld [vmem:[%s458 + $0xb8] sm:$0xff]
        %v549 = vld [vmem:[%s458 + $0xc0] sm:$0xff]
        %v550 = vld [vmem:[%s458 + $0xc8] sm:$0xff]
        %v551 = vld [vmem:[%s458 + $0xd0] sm:$0xff]
        %v552 = vld [vmem:[%s458 + $0xd8] sm:$0xff]
        %v553 = vld [vmem:[%s458 + $0xe0] sm:$0xff]
        %v554 = vld [vmem:[%s458 + $0xe8] sm:$0xff]
        %v555 = vld [vmem:[%s458 + $0xf0] sm:$0xff]
        %v556 = vld [vmem:[%s458 + $0xf8] sm:$0xff]
        %v557 = vld [vmem:[%s458 + $0x100] sm:$0xff]
        %v558 = vld [vmem:[%s458 + $0x108] sm:$0xff]
        %v559 = vld [vmem:[%s458 + $0x110] sm:$0xff]
        %v560 = vld [vmem:[%s458 + $0x118] sm:$0xff]
        %v561 = vld [vmem:[%s458 + $0x120] sm:$0xff]
        %v562 = vld [vmem:[%s458 + $0x128] sm:$0xff]
        %v563 = vld [vmem:[%s458 + $0x130] sm:$0xff]
        %v564 = vld [vmem:[%s458 + $0x138] sm:$0xff]
        %v565 = vld [vmem:[%s458 + $0x140] sm:$0xff]
        %v566 = vld [vmem:[%s458 + $0x148] sm:$0xff]
        %v567 = vld [vmem:[%s458 + $0x150] sm:$0xff]
        %v568 = vld [vmem:[%s458 + $0x158] sm:$0xff]
        %v569 = vld [vmem:[%s458 + $0x160] sm:$0xff]
        %v570 = vld [vmem:[%s458 + $0x168] sm:$0xff]
        %v571 = vld [vmem:[%s458 + $0x170] sm:$0xff]
        %v572 = vld [vmem:[%s458 + $0x178] sm:$0xff]
        %v573 = vld [vmem:[%s458 + $0x180] sm:$0xff]
        %v574 = vld [vmem:[%s458 + $0x188] sm:$0xff]
        %v575 = vld [vmem:[%s458 + $0x190] sm:$0xff]
        %v576 = vld [vmem:[%s458 + $0x198] sm:$0xff]
        %v577 = vld [vmem:[%s458 + $0x1a0] sm:$0xff]
        %v578 = vld [vmem:[%s458 + $0x1a8] sm:$0xff]
        %v579 = vld [vmem:[%s458 + $0x1b0] sm:$0xff]
        %v580 = vld [vmem:[%s458 + $0x1b8] sm:$0xff]
        %v581 = vld [vmem:[%s458 + $0x1c0] sm:$0xff]
        %v582 = vld [vmem:[%s458 + $0x1c8] sm:$0xff]
        %v583 = vld [vmem:[%s458 + $0x1d0] sm:$0xff]
        %v584 = vld [vmem:[%s458 + $0x1d8] sm:$0xff]
        %v585 = vld [vmem:[%s458 + $0x1e0] sm:$0xff]
        %v586 = vld [vmem:[%s458 + $0x1e8] sm:$0xff]
        %v587 = vld [vmem:[%s458 + $0x1f0] sm:$0xff]
        %v588 = vld [vmem:[%s458 + $0x1f8] sm:$0xff]
        %v589 = vpack.c.bf16 %v527, %v525
        %v590 = vpack.c.bf16 %v528, %v526
        %v591 = vpack.c.bf16 %v531, %v529
        %v592 = vpack.c.bf16 %v532, %v530
        %v593 = vpack.c.bf16 %v535, %v533
        %v594 = vpack.c.bf16 %v536, %v534
        %v595 = vpack.c.bf16 %v539, %v537
        %v596 = vpack.c.bf16 %v540, %v538
        %v597 = vpack.c.bf16 %v543, %v541
        %v598 = vpack.c.bf16 %v544, %v542
        %v599 = vpack.c.bf16 %v547, %v545
        %v600 = vpack.c.bf16 %v548, %v546
        %v601 = vpack.c.bf16 %v551, %v549
        %v602 = vpack.c.bf16 %v552, %v550
        %v603 = vpack.c.bf16 %v555, %v553
        %v604 = vpack.c.bf16 %v556, %v554
        %v605 = vpack.c.bf16 %v559, %v557
        %v606 = vpack.c.bf16 %v560, %v558
        %v607 = vpack.c.bf16 %v563, %v561
        %v608 = vpack.c.bf16 %v564, %v562
        %v609 = vpack.c.bf16 %v567, %v565
        %v610 = vpack.c.bf16 %v568, %v566
        %v611 = vpack.c.bf16 %v571, %v569
        %v612 = vpack.c.bf16 %v572, %v570
        %v613 = vpack.c.bf16 %v575, %v573
        %v614 = vpack.c.bf16 %v576, %v574
        %v615 = vpack.c.bf16 %v579, %v577
        %v616 = vpack.c.bf16 %v580, %v578
        %v617 = vpack.c.bf16 %v583, %v581
        %v618 = vpack.c.bf16 %v584, %v582
        %v619 = vpack.c.bf16 %v587, %v585
        %v620 = vpack.c.bf16 %v588, %v586
        %v621 = vld [vmem:[#allocation5] sm:$0xf]
        %v622 = vld [vmem:[#allocation5 + $0x4] sm:$0xf]
        %v623 = vld [vmem:[#allocation5 + $0x8] sm:$0xf]
        %v624 = vld [vmem:[#allocation5 + $0xc] sm:$0xf]
        %v625 = vld [vmem:[#allocation5 + $0x10] sm:$0xf]
        %v626 = vld [vmem:[#allocation5 + $0x14] sm:$0xf]
        %v627 = vld [vmem:[#allocation5 + $0x18] sm:$0xf]
        %v628 = vld [vmem:[#allocation5 + $0x1c] sm:$0xf]
        %v629 = vld [vmem:[#allocation5 + $0x20] sm:$0xf]
        %v630 = vld [vmem:[#allocation5 + $0x24] sm:$0xf]
        %v631 = vld [vmem:[#allocation5 + $0x28] sm:$0xf]
        %v632 = vld [vmem:[#allocation5 + $0x2c] sm:$0xf]
        %v633 = vld [vmem:[#allocation5 + $0x30] sm:$0xf]
        %v634 = vld [vmem:[#allocation5 + $0x34] sm:$0xf]
        %v635 = vld [vmem:[#allocation5 + $0x38] sm:$0xf]
        %v636 = vld [vmem:[#allocation5 + $0x3c] sm:$0xf]
        %v637 = vld [vmem:[#allocation5 + $0x40] sm:$0xf]
        %v638 = vld [vmem:[#allocation5 + $0x44] sm:$0xf]
        %v639 = vld [vmem:[#allocation5 + $0x48] sm:$0xf]
        %v640 = vld [vmem:[#allocation5 + $0x4c] sm:$0xf]
        %v641 = vld [vmem:[#allocation5 + $0x50] sm:$0xf]
        %v642 = vld [vmem:[#allocation5 + $0x54] sm:$0xf]
        %v643 = vld [vmem:[#allocation5 + $0x58] sm:$0xf]
        %v644 = vld [vmem:[#allocation5 + $0x5c] sm:$0xf]
        %v645 = vld [vmem:[#allocation5 + $0x60] sm:$0xf]
        %v646 = vld [vmem:[#allocation5 + $0x64] sm:$0xf]
        %v647 = vld [vmem:[#allocation5 + $0x68] sm:$0xf]
        %v648 = vld [vmem:[#allocation5 + $0x6c] sm:$0xf]
        %v649 = vld [vmem:[#allocation5 + $0x70] sm:$0xf]
        %v650 = vld [vmem:[#allocation5 + $0x74] sm:$0xf]
        %v651 = vld [vmem:[#allocation5 + $0x78] sm:$0xf]
        %v652 = vld [vmem:[#allocation5 + $0x7c] sm:$0xf]
        %v653 = vld [vmem:[%s2] sm:$0x1]
        %v655 = vlaneseq
        %v656 = vshrl.u32 %v655, 7
        %v657 = vsub.s32 0, %v656
        %v658 = vrot.slane %v653, %v657
        %v692 = vunpack.c.l.b16 %v621
        %v693 = vunpack.c.l.b16 %v622
        %v694 = vunpack.c.l.b16 %v623
        %v695 = vunpack.c.l.b16 %v624
        %v696 = vunpack.c.l.b16 %v625
        %v697 = vunpack.c.l.b16 %v626
        %v698 = vunpack.c.l.b16 %v627
        %v699 = vunpack.c.l.b16 %v628
        %v700 = vunpack.c.l.b16 %v629
        %v701 = vunpack.c.l.b16 %v630
        %v702 = vunpack.c.l.b16 %v631
        %v703 = vunpack.c.l.b16 %v632
        %v704 = vunpack.c.l.b16 %v633
        %v705 = vunpack.c.l.b16 %v634
        %v706 = vunpack.c.l.b16 %v635
        %v707 = vunpack.c.l.b16 %v636
        %v708 = vunpack.c.l.b16 %v637
        %v709 = vunpack.c.l.b16 %v638
        %v710 = vunpack.c.l.b16 %v639
        %v711 = vunpack.c.l.b16 %v640
        %v712 = vunpack.c.l.b16 %v641
        %v713 = vunpack.c.l.b16 %v642
        %v714 = vunpack.c.l.b16 %v643
        %v715 = vunpack.c.l.b16 %v644
        %v716 = vunpack.c.l.b16 %v645
        %v717 = vunpack.c.l.b16 %v646
        %v718 = vunpack.c.l.b16 %v647
        %v719 = vunpack.c.l.b16 %v648
        %v720 = vunpack.c.l.b16 %v649
        %v721 = vunpack.c.l.b16 %v650
        %v722 = vunpack.c.l.b16 %v651
        %v723 = vunpack.c.l.b16 %v652
        %v724 = vpack.c.b16 %v693, %v692
        %v725 = vpack.c.b16 %v695, %v694
        %v726 = vpack.c.b16 %v697, %v696
        %v727 = vpack.c.b16 %v699, %v698
        %v728 = vpack.c.b16 %v701, %v700
        %v729 = vpack.c.b16 %v703, %v702
        %v730 = vpack.c.b16 %v705, %v704
        %v731 = vpack.c.b16 %v707, %v706
        %v732 = vpack.c.b16 %v709, %v708
        %v733 = vpack.c.b16 %v711, %v710
        %v734 = vpack.c.b16 %v713, %v712
        %v735 = vpack.c.b16 %v715, %v714
        %v736 = vpack.c.b16 %v717, %v716
        %v737 = vpack.c.b16 %v719, %v718
        %v738 = vpack.c.b16 %v721, %v720
        %v739 = vpack.c.b16 %v723, %v722
        %756 = vmatprep.subr.bf16.mxu0 0
        %757 = vmatpush1.bf16.msra.mxu0 %v731
        %758 = vmatprep.subr.bf16.mxu0 0
        %759 = vmatpush1.bf16.msra.mxu0 %v730
        %760 = vmatprep.subr.bf16.mxu0 0
        %761 = vmatpush1.bf16.msra.mxu0 %v729
        %762 = vmatprep.subr.bf16.mxu0 0
        %763 = vmatpush1.bf16.msra.mxu0 %v728
        %764 = vmatprep.subr.bf16.mxu0 0
        %765 = vmatpush1.bf16.msra.mxu0 %v727
        %766 = vmatprep.subr.bf16.mxu0 0
        %767 = vmatpush1.bf16.msra.mxu0 %v726
        %768 = vmatprep.subr.bf16.mxu0 0
        %769 = vmatpush1.bf16.msra.mxu0 %v725
        %770 = vmatprep.subr.bf16.mxu0 0
        %771 = vmatpush1.bf16.msra.mxu0 %v724
        %772 = vmatprep.subr.bf16.mxu0 0
        %773 = vmatpush2.bf16.msra.mxu0 %v739
        %774 = vmatprep.subr.bf16.mxu0 0
        %775 = vmatpush2.bf16.msra.mxu0 %v738
        %776 = vmatprep.subr.bf16.mxu0 0
        %777 = vmatpush2.bf16.msra.mxu0 %v737
        %778 = vmatprep.subr.bf16.mxu0 0
        %779 = vmatpush2.bf16.msra.mxu0 %v736
        %780 = vmatprep.subr.bf16.mxu0 0
        %781 = vmatpush2.bf16.msra.mxu0 %v735
        %782 = vmatprep.subr.bf16.mxu0 0
        %783 = vmatpush2.bf16.msra.mxu0 %v734
        %784 = vmatprep.subr.bf16.mxu0 0
        %785 = vmatpush2.bf16.msra.mxu0 %v733
        %786 = vmatprep.subr.bf16.mxu0 0
        %787 = vmatpush2.bf16.msra.mxu0 %v732
        %788 = vmatprep.mubr.bf16.mxu0 %v590
        %789 = vmatmul.mubr.bf16.gmra.mxu0 %v589
        %v790 = vpop.f32.mrf.mxu0
        %v791 = vadd.f32 %v658, %v790
        %v792 = vpop.f32.mrf.mxu0
        %v793 = vpop.f32.mrf.mxu0
        %v794 = vadd.f32 %v658, %v793
        %v795 = vpop.f32.mrf.mxu0
        %796 = vmatprep.mubr.bf16.mxu0 %v592
        %797 = vmatmul.mubr.bf16.gmra.mxu0 %v591
        %v798 = vpop.f32.mrf.mxu0
        %v799 = vadd.f32 %v658, %v798
        %v800 = vpop.f32.mrf.mxu0
        %v801 = vpop.f32.mrf.mxu0
        %v802 = vadd.f32 %v658, %v801
        %v803 = vpop.f32.mrf.mxu0
        %804 = vmatprep.mubr.bf16.mxu0 %v594
        %805 = vmatmul.mubr.bf16.gmra.mxu0 %v593
        %v806 = vpop.f32.mrf.mxu0
        %v807 = vadd.f32 %v658, %v806
        %v808 = vpop.f32.mrf.mxu0
        %v809 = vpop.f32.mrf.mxu0
        %v810 = vadd.f32 %v658, %v809
        %v811 = vpop.f32.mrf.mxu0
        %812 = vmatprep.mubr.bf16.mxu0 %v596
        %813 = vmatmul.mubr.bf16.gmra.mxu0 %v595
        %v814 = vpop.f32.mrf.mxu0
        %v815 = vadd.f32 %v658, %v814
        %v816 = vpop.f32.mrf.mxu0
        %v817 = vpop.f32.mrf.mxu0
        %v818 = vadd.f32 %v658, %v817
        %v819 = vpop.f32.mrf.mxu0
        %820 = vmatprep.mubr.bf16.mxu0 %v598
        %821 = vmatmul.mubr.bf16.gmra.mxu0 %v597
        %v822 = vpop.f32.mrf.mxu0
        %v823 = vadd.f32 %v658, %v822
        %v824 = vpop.f32.mrf.mxu0
        %v825 = vpop.f32.mrf.mxu0
        %v826 = vadd.f32 %v658, %v825
        %v827 = vpop.f32.mrf.mxu0
        %828 = vmatprep.mubr.bf16.mxu0 %v600
        %829 = vmatmul.mubr.bf16.gmra.mxu0 %v599
        %v830 = vpop.f32.mrf.mxu0
        %v831 = vadd.f32 %v658, %v830
        %v832 = vpop.f32.mrf.mxu0
        %v833 = vpop.f32.mrf.mxu0
        %v834 = vadd.f32 %v658, %v833
        %v835 = vpop.f32.mrf.mxu0
        %836 = vmatprep.mubr.bf16.mxu0 %v602
        %837 = vmatmul.mubr.bf16.gmra.mxu0 %v601
        %v838 = vpop.f32.mrf.mxu0
        %v839 = vadd.f32 %v658, %v838
        %v840 = vpop.f32.mrf.mxu0
        %v841 = vpop.f32.mrf.mxu0
        %v842 = vadd.f32 %v658, %v841
        %v843 = vpop.f32.mrf.mxu0
        %844 = vmatprep.mubr.bf16.mxu0 %v604
        %845 = vmatmul.mubr.bf16.gmra.mxu0 %v603
        %v846 = vpop.f32.mrf.mxu0
        %v847 = vadd.f32 %v658, %v846
        %v848 = vpop.f32.mrf.mxu0
        %v849 = vpop.f32.mrf.mxu0
        %v850 = vadd.f32 %v658, %v849
        %v851 = vpop.f32.mrf.mxu0
        %852 = vmatprep.mubr.bf16.mxu0 %v606
        %853 = vmatmul.mubr.bf16.gmra.mxu0 %v605
        %v854 = vpop.f32.mrf.mxu0
        %v855 = vadd.f32 %v658, %v854
        %v856 = vpop.f32.mrf.mxu0
        %v857 = vpop.f32.mrf.mxu0
        %v858 = vadd.f32 %v658, %v857
        %v859 = vpop.f32.mrf.mxu0
        %860 = vmatprep.mubr.bf16.mxu0 %v608
        %861 = vmatmul.mubr.bf16.gmra.mxu0 %v607
        %v862 = vpop.f32.mrf.mxu0
        %v863 = vadd.f32 %v658, %v862
        %v864 = vpop.f32.mrf.mxu0
        %v865 = vpop.f32.mrf.mxu0
        %v866 = vadd.f32 %v658, %v865
        %v867 = vpop.f32.mrf.mxu0
        %868 = vmatprep.mubr.bf16.mxu0 %v610
        %869 = vmatmul.mubr.bf16.gmra.mxu0 %v609
        %v870 = vpop.f32.mrf.mxu0
        %v871 = vadd.f32 %v658, %v870
        %v872 = vpop.f32.mrf.mxu0
        %v873 = vpop.f32.mrf.mxu0
        %v874 = vadd.f32 %v658, %v873
        %v875 = vpop.f32.mrf.mxu0
        %876 = vmatprep.mubr.bf16.mxu0 %v612
        %877 = vmatmul.mubr.bf16.gmra.mxu0 %v611
        %v878 = vpop.f32.mrf.mxu0
        %v879 = vadd.f32 %v658, %v878
        %v880 = vpop.f32.mrf.mxu0
        %v881 = vpop.f32.mrf.mxu0
        %v882 = vadd.f32 %v658, %v881
        %v883 = vpop.f32.mrf.mxu0
        %884 = vmatprep.mubr.bf16.mxu0 %v614
        %885 = vmatmul.mubr.bf16.gmra.mxu0 %v613
        %v886 = vpop.f32.mrf.mxu0
        %v887 = vadd.f32 %v658, %v886
        %v888 = vpop.f32.mrf.mxu0
        %v889 = vpop.f32.mrf.mxu0
        %v890 = vadd.f32 %v658, %v889
        %v891 = vpop.f32.mrf.mxu0
        %892 = vmatprep.mubr.bf16.mxu0 %v616
        %893 = vmatmul.mubr.bf16.gmra.mxu0 %v615
        %v894 = vpop.f32.mrf.mxu0
        %v895 = vadd.f32 %v658, %v894
        %v896 = vpop.f32.mrf.mxu0
        %v897 = vpop.f32.mrf.mxu0
        %v898 = vadd.f32 %v658, %v897
        %v899 = vpop.f32.mrf.mxu0
        %900 = vmatprep.mubr.bf16.mxu0 %v618
        %901 = vmatmul.mubr.bf16.gmra.mxu0 %v617
        %v902 = vpop.f32.mrf.mxu0
        %v903 = vadd.f32 %v658, %v902
        %v904 = vpop.f32.mrf.mxu0
        %v905 = vpop.f32.mrf.mxu0
        %v906 = vadd.f32 %v658, %v905
        %v907 = vpop.f32.mrf.mxu0
        %908 = vmatprep.mubr.bf16.mxu0 %v620
        %909 = vmatmul.mubr.bf16.gmra.mxu0 %v619
        %v910 = vpop.f32.mrf.mxu0
        %v911 = vadd.f32 %v658, %v910
        %v912 = vpop.f32.mrf.mxu0
        %v913 = vpop.f32.mrf.mxu0
        %v914 = vadd.f32 %v658, %v913
        %v915 = vpop.f32.mrf.mxu0
        %916 = vdwg.mxu0
        %v917 = vmax.f32 %v791, 0.0
        %v918 = vmax.f32 %v794, 0.0
        %v919 = vmax.f32 %v799, 0.0
        %v920 = vmax.f32 %v802, 0.0
        %v921 = vmax.f32 %v807, 0.0
        %v922 = vmax.f32 %v810, 0.0
        %v923 = vmax.f32 %v815, 0.0
        %v924 = vmax.f32 %v818, 0.0
        %v925 = vmax.f32 %v823, 0.0
        %v926 = vmax.f32 %v826, 0.0
        %v927 = vmax.f32 %v831, 0.0
        %v928 = vmax.f32 %v834, 0.0
        %v929 = vmax.f32 %v839, 0.0
        %v930 = vmax.f32 %v842, 0.0
        %v931 = vmax.f32 %v847, 0.0
        %v932 = vmax.f32 %v850, 0.0
        %v933 = vmax.f32 %v855, 0.0
        %v934 = vmax.f32 %v858, 0.0
        %v935 = vmax.f32 %v863, 0.0
        %v936 = vmax.f32 %v866, 0.0
        %v937 = vmax.f32 %v871, 0.0
        %v938 = vmax.f32 %v874, 0.0
        %v939 = vmax.f32 %v879, 0.0
        %v940 = vmax.f32 %v882, 0.0
        %v941 = vmax.f32 %v887, 0.0
        %v942 = vmax.f32 %v890, 0.0
        %v943 = vmax.f32 %v895, 0.0
        %v944 = vmax.f32 %v898, 0.0
        %v945 = vmax.f32 %v903, 0.0
        %v946 = vmax.f32 %v906, 0.0
        %v947 = vmax.f32 %v911, 0.0
        %v948 = vmax.f32 %v914, 0.0
        %v949 = vpack.c.bf16 %v918, %v917
        %v950 = vpack.c.bf16 %v920, %v919
        %v951 = vpack.c.bf16 %v922, %v921
        %v952 = vpack.c.bf16 %v924, %v923
        %v953 = vpack.c.bf16 %v926, %v925
        %v954 = vpack.c.bf16 %v928, %v927
        %v955 = vpack.c.bf16 %v930, %v929
        %v956 = vpack.c.bf16 %v932, %v931
        %v957 = vpack.c.bf16 %v934, %v933
        %v958 = vpack.c.bf16 %v936, %v935
        %v959 = vpack.c.bf16 %v938, %v937
        %v960 = vpack.c.bf16 %v940, %v939
        %v961 = vpack.c.bf16 %v942, %v941
        %v962 = vpack.c.bf16 %v944, %v943
        %v963 = vpack.c.bf16 %v946, %v945
        %v964 = vpack.c.bf16 %v948, %v947
        %v965 = vld [vmem:[#allocation7] sm:$0xff]
        %v966 = vld [vmem:[#allocation7 + $0x8] sm:$0xff]
        %v967 = vld [vmem:[#allocation7 + $0x10] sm:$0xff]
        %v968 = vld [vmem:[#allocation7 + $0x18] sm:$0xff]
        %v969 = vld [vmem:[#allocation7 + $0x20] sm:$0xff]
        %v970 = vld [vmem:[#allocation7 + $0x28] sm:$0xff]
        %v971 = vld [vmem:[#allocation7 + $0x30] sm:$0xff]
        %v972 = vld [vmem:[#allocation7 + $0x38] sm:$0xff]
        %v973 = vld [vmem:[#allocation7 + $0x40] sm:$0xff]
        %v974 = vld [vmem:[#allocation7 + $0x48] sm:$0xff]
        %v975 = vld [vmem:[#allocation7 + $0x50] sm:$0xff]
        %v976 = vld [vmem:[#allocation7 + $0x58] sm:$0xff]
        %v977 = vld [vmem:[#allocation7 + $0x60] sm:$0xff]
        %v978 = vld [vmem:[#allocation7 + $0x68] sm:$0xff]
        %v979 = vld [vmem:[#allocation7 + $0x70] sm:$0xff]
        %v980 = vld [vmem:[#allocation7 + $0x78] sm:$0xff]
        %v981 = vld [vmem:[#allocation7 + $0x80] sm:$0xff]
        %v982 = vld [vmem:[#allocation7 + $0x88] sm:$0xff]
        %v983 = vld [vmem:[#allocation7 + $0x90] sm:$0xff]
        %v984 = vld [vmem:[#allocation7 + $0x98] sm:$0xff]
        %v985 = vld [vmem:[#allocation7 + $0xa0] sm:$0xff]
        %v986 = vld [vmem:[#allocation7 + $0xa8] sm:$0xff]
        %v987 = vld [vmem:[#allocation7 + $0xb0] sm:$0xff]
        %v988 = vld [vmem:[#allocation7 + $0xb8] sm:$0xff]
        %v989 = vld [vmem:[#allocation7 + $0xc0] sm:$0xff]
        %v990 = vld [vmem:[#allocation7 + $0xc8] sm:$0xff]
        %v991 = vld [vmem:[#allocation7 + $0xd0] sm:$0xff]
        %v992 = vld [vmem:[#allocation7 + $0xd8] sm:$0xff]
        %v993 = vld [vmem:[#allocation7 + $0xe0] sm:$0xff]
        %v994 = vld [vmem:[#allocation7 + $0xe8] sm:$0xff]
        %v995 = vld [vmem:[#allocation7 + $0xf0] sm:$0xff]
        %v996 = vld [vmem:[#allocation7 + $0xf8] sm:$0xff]
        %v997 = vld [vmem:[%s4] sm:$0xf]
        %v999 = vlaneseq
        %v1000 = vshrl.u32 %v999, 7
        %v1001 = vsub.s32 0, %v1000
        %v1002 = vrot.slane %v997, %v1001
        %v1003 = vlaneseq
        %v1004 = vshrl.u32 %v1003, 7
        %v1005 = vsub.s32 1, %v1004
        %v1006 = vrot.slane %v997, %v1005
        %v1007 = vlaneseq
        %v1008 = vshrl.u32 %v1007, 7
        %v1009 = vsub.s32 2, %v1008
        %v1010 = vrot.slane %v997, %v1009
        %v1011 = vlaneseq
        %v1012 = vshrl.u32 %v1011, 7
        %v1013 = vsub.s32 3, %v1012
        %v1014 = vrot.slane %v997, %v1013
        %v1051 = vunpack.c.l.b16 %v965
        %v1052 = vunpack.c.h.b16 %v965
        %v1053 = vunpack.c.l.b16 %v966
        %v1054 = vunpack.c.h.b16 %v966
        %v1055 = vunpack.c.l.b16 %v967
        %v1056 = vunpack.c.h.b16 %v967
        %v1057 = vunpack.c.l.b16 %v968
        %v1058 = vunpack.c.h.b16 %v968
        %v1059 = vunpack.c.l.b16 %v969
        %v1060 = vunpack.c.h.b16 %v969
        %v1061 = vunpack.c.l.b16 %v970
        %v1062 = vunpack.c.h.b16 %v970
        %v1063 = vunpack.c.l.b16 %v971
        %v1064 = vunpack.c.h.b16 %v971
        %v1065 = vunpack.c.l.b16 %v972
        %v1066 = vunpack.c.h.b16 %v972
        %v1067 = vunpack.c.l.b16 %v973
        %v1068 = vunpack.c.h.b16 %v973
        %v1069 = vunpack.c.l.b16 %v974
        %v1070 = vunpack.c.h.b16 %v974
        %v1071 = vunpack.c.l.b16 %v975
        %v1072 = vunpack.c.h.b16 %v975
        %v1073 = vunpack.c.l.b16 %v976
        %v1074 = vunpack.c.h.b16 %v976
        %v1075 = vunpack.c.l.b16 %v977
        %v1076 = vunpack.c.h.b16 %v977
        %v1077 = vunpack.c.l.b16 %v978
        %v1078 = vunpack.c.h.b16 %v978
        %v1079 = vunpack.c.l.b16 %v979
        %v1080 = vunpack.c.h.b16 %v979
        %v1081 = vunpack.c.l.b16 %v980
        %v1082 = vunpack.c.h.b16 %v980
        %v1083 = vunpack.c.l.b16 %v981
        %v1084 = vunpack.c.h.b16 %v981
        %v1085 = vunpack.c.l.b16 %v982
        %v1086 = vunpack.c.h.b16 %v982
        %v1087 = vunpack.c.l.b16 %v983
        %v1088 = vunpack.c.h.b16 %v983
        %v1089 = vunpack.c.l.b16 %v984
        %v1090 = vunpack.c.h.b16 %v984
        %v1091 = vunpack.c.l.b16 %v985
        %v1092 = vunpack.c.h.b16 %v985
        %v1093 = vunpack.c.l.b16 %v986
        %v1094 = vunpack.c.h.b16 %v986
        %v1095 = vunpack.c.l.b16 %v987
        %v1096 = vunpack.c.h.b16 %v987
        %v1097 = vunpack.c.l.b16 %v988
        %v1098 = vunpack.c.h.b16 %v988
        %v1099 = vunpack.c.l.b16 %v989
        %v1100 = vunpack.c.h.b16 %v989
        %v1101 = vunpack.c.l.b16 %v990
        %v1102 = vunpack.c.h.b16 %v990
        %v1103 = vunpack.c.l.b16 %v991
        %v1104 = vunpack.c.h.b16 %v991
        %v1105 = vunpack.c.l.b16 %v992
        %v1106 = vunpack.c.h.b16 %v992
        %v1107 = vunpack.c.l.b16 %v993
        %v1108 = vunpack.c.h.b16 %v993
        %v1109 = vunpack.c.l.b16 %v994
        %v1110 = vunpack.c.h.b16 %v994
        %v1111 = vunpack.c.l.b16 %v995
        %v1112 = vunpack.c.h.b16 %v995
        %v1113 = vunpack.c.l.b16 %v996
        %v1114 = vunpack.c.h.b16 %v996
        %v1115 = vpack.c.b16 %v1055, %v1051
        %v1116 = vpack.c.b16 %v1056, %v1052
        %v1117 = vpack.c.b16 %v1057, %v1053
        %v1118 = vpack.c.b16 %v1058, %v1054
        %v1119 = vpack.c.b16 %v1063, %v1059
        %v1120 = vpack.c.b16 %v1064, %v1060
        %v1121 = vpack.c.b16 %v1065, %v1061
        %v1122 = vpack.c.b16 %v1066, %v1062
        %v1123 = vpack.c.b16 %v1071, %v1067
        %v1124 = vpack.c.b16 %v1072, %v1068
        %v1125 = vpack.c.b16 %v1073, %v1069
        %v1126 = vpack.c.b16 %v1074, %v1070
        %v1127 = vpack.c.b16 %v1079, %v1075
        %v1128 = vpack.c.b16 %v1080, %v1076
        %v1129 = vpack.c.b16 %v1081, %v1077
        %v1130 = vpack.c.b16 %v1082, %v1078
        %v1131 = vpack.c.b16 %v1087, %v1083
        %v1132 = vpack.c.b16 %v1088, %v1084
        %v1133 = vpack.c.b16 %v1089, %v1085
        %v1134 = vpack.c.b16 %v1090, %v1086
        %v1135 = vpack.c.b16 %v1095, %v1091
        %v1136 = vpack.c.b16 %v1096, %v1092
        %v1137 = vpack.c.b16 %v1097, %v1093
        %v1138 = vpack.c.b16 %v1098, %v1094
        %v1139 = vpack.c.b16 %v1103, %v1099
        %v1140 = vpack.c.b16 %v1104, %v1100
        %v1141 = vpack.c.b16 %v1105, %v1101
        %v1142 = vpack.c.b16 %v1106, %v1102
        %v1143 = vpack.c.b16 %v1111, %v1107
        %v1144 = vpack.c.b16 %v1112, %v1108
        %v1145 = vpack.c.b16 %v1113, %v1109
        %v1146 = vpack.c.b16 %v1114, %v1110
        %1179 = vmatprep.subr.bf16.mxu0 %v1144
        %1180 = vmatpush1.bf16.msra.mxu0 %v1143
        %1181 = vmatprep.subr.bf16.mxu0 %v1140
        %1182 = vmatpush1.bf16.msra.mxu0 %v1139
        %1183 = vmatprep.subr.bf16.mxu0 %v1136
        %1184 = vmatpush1.bf16.msra.mxu0 %v1135
        %1185 = vmatprep.subr.bf16.mxu0 %v1132
        %1186 = vmatpush1.bf16.msra.mxu0 %v1131
        %1187 = vmatprep.subr.bf16.mxu0 %v1128
        %1188 = vmatpush1.bf16.msra.mxu0 %v1127
        %1189 = vmatprep.subr.bf16.mxu0 %v1124
        %1190 = vmatpush1.bf16.msra.mxu0 %v1123
        %1191 = vmatprep.subr.bf16.mxu0 %v1120
        %1192 = vmatpush1.bf16.msra.mxu0 %v1119
        %1193 = vmatprep.subr.bf16.mxu0 %v1116
        %1194 = vmatpush1.bf16.msra.mxu0 %v1115
        %1195 = vmatprep.subr.bf16.mxu0 0
        %1196 = vmatpush2.bf16.msra.mxu0 0
        %1197 = vmatprep.subr.bf16.mxu0 0
        %1198 = vmatpush2.bf16.msra.mxu0 0
        %1199 = vmatprep.subr.bf16.mxu0 0
        %1200 = vmatpush2.bf16.msra.mxu0 0
        %1201 = vmatprep.subr.bf16.mxu0 0
        %1202 = vmatpush2.bf16.msra.mxu0 0
        %1203 = vmatprep.subr.bf16.mxu0 0
        %1204 = vmatpush2.bf16.msra.mxu0 0
        %1205 = vmatprep.subr.bf16.mxu0 0
        %1206 = vmatpush2.bf16.msra.mxu0 0
        %1207 = vmatprep.subr.bf16.mxu0 0
        %1208 = vmatpush2.bf16.msra.mxu0 0
        %1209 = vmatprep.subr.bf16.mxu0 0
        %1210 = vmatpush2.bf16.msra.mxu0 0
        %1211 = vmatprep.mubr.bf16.mxu0 0
        %1212 = vmatmul.mubr.bf16.gmra.mxu0 %v949
        %v1213 = vpop.f32.mrf.mxu0
        %v1214 = vadd.f32 %v1002, %v1213
        %v1215 = vpop.f32.mrf.mxu0
        %v1216 = vadd.f32 %v1006, %v1215
        %v1217 = vpop.f32.mrf.mxu0
        %v1218 = vadd.f32 %v1002, %v1217
        %v1219 = vpop.f32.mrf.mxu0
        %v1220 = vadd.f32 %v1006, %v1219
        %1221 = vmatprep.mubr.bf16.mxu0 0
        %1222 = vmatmul.mubr.bf16.gmra.mxu0 %v950
        %v1223 = vpop.f32.mrf.mxu0
        %v1224 = vadd.f32 %v1002, %v1223
        %v1225 = vpop.f32.mrf.mxu0
        %v1226 = vadd.f32 %v1006, %v1225
        %v1227 = vpop.f32.mrf.mxu0
        %v1228 = vadd.f32 %v1002, %v1227
        %v1229 = vpop.f32.mrf.mxu0
        %v1230 = vadd.f32 %v1006, %v1229
        %1231 = vmatprep.mubr.bf16.mxu0 0
        %1232 = vmatmul.mubr.bf16.gmra.mxu0 %v951
        %v1233 = vpop.f32.mrf.mxu0
        %v1234 = vadd.f32 %v1002, %v1233
        %v1235 = vpop.f32.mrf.mxu0
        %v1236 = vadd.f32 %v1006, %v1235
        %v1237 = vpop.f32.mrf.mxu0
        %v1238 = vadd.f32 %v1002, %v1237
        %v1239 = vpop.f32.mrf.mxu0
        %v1240 = vadd.f32 %v1006, %v1239
        %1241 = vmatprep.mubr.bf16.mxu0 0
        %1242 = vmatmul.mubr.bf16.gmra.mxu0 %v952
        %v1243 = vpop.f32.mrf.mxu0
        %v1244 = vadd.f32 %v1002, %v1243
        %v1245 = vpop.f32.mrf.mxu0
        %v1246 = vadd.f32 %v1006, %v1245
        %v1247 = vpop.f32.mrf.mxu0
        %v1248 = vadd.f32 %v1002, %v1247
        %v1249 = vpop.f32.mrf.mxu0
        %v1250 = vadd.f32 %v1006, %v1249
        %1251 = vmatprep.mubr.bf16.mxu0 0
        %1252 = vmatmul.mubr.bf16.gmra.mxu0 %v953
        %v1253 = vpop.f32.mrf.mxu0
        %v1254 = vadd.f32 %v1002, %v1253
        %v1255 = vpop.f32.mrf.mxu0
        %v1256 = vadd.f32 %v1006, %v1255
        %v1257 = vpop.f32.mrf.mxu0
        %v1258 = vadd.f32 %v1002, %v1257
        %v1259 = vpop.f32.mrf.mxu0
        %v1260 = vadd.f32 %v1006, %v1259
        %1261 = vmatprep.mubr.bf16.mxu0 0
        %1262 = vmatmul.mubr.bf16.gmra.mxu0 %v954
        %v1263 = vpop.f32.mrf.mxu0
        %v1264 = vadd.f32 %v1002, %v1263
        %v1265 = vpop.f32.mrf.mxu0
        %v1266 = vadd.f32 %v1006, %v1265
        %v1267 = vpop.f32.mrf.mxu0
        %v1268 = vadd.f32 %v1002, %v1267
        %v1269 = vpop.f32.mrf.mxu0
        %v1270 = vadd.f32 %v1006, %v1269
        %1271 = vmatprep.mubr.bf16.mxu0 0
        %1272 = vmatmul.mubr.bf16.gmra.mxu0 %v955
        %v1273 = vpop.f32.mrf.mxu0
        %v1274 = vadd.f32 %v1002, %v1273
        %v1275 = vpop.f32.mrf.mxu0
        %v1276 = vadd.f32 %v1006, %v1275
        %v1277 = vpop.f32.mrf.mxu0
        %v1278 = vadd.f32 %v1002, %v1277
        %v1279 = vpop.f32.mrf.mxu0
        %v1280 = vadd.f32 %v1006, %v1279
        %1281 = vmatprep.mubr.bf16.mxu0 0
        %1282 = vmatmul.mubr.bf16.gmra.mxu0 %v956
        %v1283 = vpop.f32.mrf.mxu0
        %v1284 = vadd.f32 %v1002, %v1283
        %v1285 = vpop.f32.mrf.mxu0
        %v1286 = vadd.f32 %v1006, %v1285
        %v1287 = vpop.f32.mrf.mxu0
        %v1288 = vadd.f32 %v1002, %v1287
        %v1289 = vpop.f32.mrf.mxu0
        %v1290 = vadd.f32 %v1006, %v1289
        %1291 = vmatprep.mubr.bf16.mxu0 0
        %1292 = vmatmul.mubr.bf16.gmra.mxu0 %v957
        %v1293 = vpop.f32.mrf.mxu0
        %v1294 = vadd.f32 %v1002, %v1293
        %v1295 = vpop.f32.mrf.mxu0
        %v1296 = vadd.f32 %v1006, %v1295
        %v1297 = vpop.f32.mrf.mxu0
        %v1298 = vadd.f32 %v1002, %v1297
        %v1299 = vpop.f32.mrf.mxu0
        %v1300 = vadd.f32 %v1006, %v1299
        %1301 = vmatprep.mubr.bf16.mxu0 0
        %1302 = vmatmul.mubr.bf16.gmra.mxu0 %v958
        %v1303 = vpop.f32.mrf.mxu0
        %v1304 = vadd.f32 %v1002, %v1303
        %v1305 = vpop.f32.mrf.mxu0
        %v1306 = vadd.f32 %v1006, %v1305
        %v1307 = vpop.f32.mrf.mxu0
        %v1308 = vadd.f32 %v1002, %v1307
        %v1309 = vpop.f32.mrf.mxu0
        %v1310 = vadd.f32 %v1006, %v1309
        %1311 = vmatprep.mubr.bf16.mxu0 0
        %1312 = vmatmul.mubr.bf16.gmra.mxu0 %v959
        %v1313 = vpop.f32.mrf.mxu0
        %v1314 = vadd.f32 %v1002, %v1313
        %v1315 = vpop.f32.mrf.mxu0
        %v1316 = vadd.f32 %v1006, %v1315
        %v1317 = vpop.f32.mrf.mxu0
        %v1318 = vadd.f32 %v1002, %v1317
        %v1319 = vpop.f32.mrf.mxu0
        %v1320 = vadd.f32 %v1006, %v1319
        %1321 = vmatprep.mubr.bf16.mxu0 0
        %1322 = vmatmul.mubr.bf16.gmra.mxu0 %v960
        %v1323 = vpop.f32.mrf.mxu0
        %v1324 = vadd.f32 %v1002, %v1323
        %v1325 = vpop.f32.mrf.mxu0
        %v1326 = vadd.f32 %v1006, %v1325
        %v1327 = vpop.f32.mrf.mxu0
        %v1328 = vadd.f32 %v1002, %v1327
        %v1329 = vpop.f32.mrf.mxu0
        %v1330 = vadd.f32 %v1006, %v1329
        %1331 = vmatprep.mubr.bf16.mxu0 0
        %1332 = vmatmul.mubr.bf16.gmra.mxu0 %v961
        %v1333 = vpop.f32.mrf.mxu0
        %v1334 = vadd.f32 %v1002, %v1333
        %v1335 = vpop.f32.mrf.mxu0
        %v1336 = vadd.f32 %v1006, %v1335
        %v1337 = vpop.f32.mrf.mxu0
        %v1338 = vadd.f32 %v1002, %v1337
        %v1339 = vpop.f32.mrf.mxu0
        %v1340 = vadd.f32 %v1006, %v1339
        %1341 = vmatprep.mubr.bf16.mxu0 0
        %1342 = vmatmul.mubr.bf16.gmra.mxu0 %v962
        %v1343 = vpop.f32.mrf.mxu0
        %v1344 = vadd.f32 %v1002, %v1343
        %v1345 = vpop.f32.mrf.mxu0
        %v1346 = vadd.f32 %v1006, %v1345
        %v1347 = vpop.f32.mrf.mxu0
        %v1348 = vadd.f32 %v1002, %v1347
        %v1349 = vpop.f32.mrf.mxu0
        %v1350 = vadd.f32 %v1006, %v1349
        %1351 = vmatprep.mubr.bf16.mxu0 0
        %1352 = vmatmul.mubr.bf16.gmra.mxu0 %v963
        %v1353 = vpop.f32.mrf.mxu0
        %v1354 = vadd.f32 %v1002, %v1353
        %v1355 = vpop.f32.mrf.mxu0
        %v1356 = vadd.f32 %v1006, %v1355
        %v1357 = vpop.f32.mrf.mxu0
        %v1358 = vadd.f32 %v1002, %v1357
        %v1359 = vpop.f32.mrf.mxu0
        %v1360 = vadd.f32 %v1006, %v1359
        %1361 = vmatprep.mubr.bf16.mxu0 0
        %1362 = vmatmul.mubr.bf16.gmra.mxu0 %v964
        %v1363 = vpop.f32.mrf.mxu0
        %v1364 = vadd.f32 %v1002, %v1363
        %v1365 = vpop.f32.mrf.mxu0
        %v1366 = vadd.f32 %v1006, %v1365
        %v1367 = vpop.f32.mrf.mxu0
        %v1368 = vadd.f32 %v1002, %v1367
        %v1369 = vpop.f32.mrf.mxu0
        %v1370 = vadd.f32 %v1006, %v1369
        %1371 = vdwg.mxu0
        %1372 = vmatprep.subr.bf16.mxu0 %v1146
        %1373 = vmatpush1.bf16.msra.mxu0 %v1145
        %1374 = vmatprep.subr.bf16.mxu0 %v1142
        %1375 = vmatpush1.bf16.msra.mxu0 %v1141
        %1376 = vmatprep.subr.bf16.mxu0 %v1138
        %1377 = vmatpush1.bf16.msra.mxu0 %v1137
        %1378 = vmatprep.subr.bf16.mxu0 %v1134
        %1379 = vmatpush1.bf16.msra.mxu0 %v1133
        %1380 = vmatprep.subr.bf16.mxu0 %v1130
        %1381 = vmatpush1.bf16.msra.mxu0 %v1129
        %1382 = vmatprep.subr.bf16.mxu0 %v1126
        %1383 = vmatpush1.bf16.msra.mxu0 %v1125
        %1384 = vmatprep.subr.bf16.mxu0 %v1122
        %1385 = vmatpush1.bf16.msra.mxu0 %v1121
        %1386 = vmatprep.subr.bf16.mxu0 %v1118
        %1387 = vmatpush1.bf16.msra.mxu0 %v1117
        %1388 = vmatprep.subr.bf16.mxu0 0
        %1389 = vmatpush2.bf16.msra.mxu0 0
        %1390 = vmatprep.subr.bf16.mxu0 0
        %1391 = vmatpush2.bf16.msra.mxu0 0
        %1392 = vmatprep.subr.bf16.mxu0 0
        %1393 = vmatpush2.bf16.msra.mxu0 0
        %1394 = vmatprep.subr.bf16.mxu0 0
        %1395 = vmatpush2.bf16.msra.mxu0 0
        %1396 = vmatprep.subr.bf16.mxu0 0
        %1397 = vmatpush2.bf16.msra.mxu0 0
        %1398 = vmatprep.subr.bf16.mxu0 0
        %1399 = vmatpush2.bf16.msra.mxu0 0
        %1400 = vmatprep.subr.bf16.mxu0 0
        %1401 = vmatpush2.bf16.msra.mxu0 0
        %1402 = vmatprep.subr.bf16.mxu0 0
        %1403 = vmatpush2.bf16.msra.mxu0 0
        %1404 = vmatprep.mubr.bf16.mxu0 0
        %1405 = vmatmul.mubr.bf16.gmra.mxu0 %v949
        %v1406 = vpop.f32.mrf.mxu0
        %v1407 = vadd.f32 %v1010, %v1406
        %v1408 = vpop.f32.mrf.mxu0
        %v1409 = vadd.f32 %v1014, %v1408
        %v1410 = vpop.f32.mrf.mxu0
        %v1411 = vadd.f32 %v1010, %v1410
        %v1412 = vpop.f32.mrf.mxu0
        %v1413 = vadd.f32 %v1014, %v1412
        %1414 = vmatprep.mubr.bf16.mxu0 0
        %1415 = vmatmul.mubr.bf16.gmra.mxu0 %v950
        %v1416 = vpop.f32.mrf.mxu0
        %v1417 = vadd.f32 %v1010, %v1416
        %v1418 = vpop.f32.mrf.mxu0
        %v1419 = vadd.f32 %v1014, %v1418
        %v1420 = vpop.f32.mrf.mxu0
        %v1421 = vadd.f32 %v1010, %v1420
        %v1422 = vpop.f32.mrf.mxu0
        %v1423 = vadd.f32 %v1014, %v1422
        %1424 = vmatprep.mubr.bf16.mxu0 0
        %1425 = vmatmul.mubr.bf16.gmra.mxu0 %v951
        %v1426 = vpop.f32.mrf.mxu0
        %v1427 = vadd.f32 %v1010, %v1426
        %v1428 = vpop.f32.mrf.mxu0
        %v1429 = vadd.f32 %v1014, %v1428
        %v1430 = vpop.f32.mrf.mxu0
        %v1431 = vadd.f32 %v1010, %v1430
        %v1432 = vpop.f32.mrf.mxu0
        %v1433 = vadd.f32 %v1014, %v1432
        %1434 = vmatprep.mubr.bf16.mxu0 0
        %1435 = vmatmul.mubr.bf16.gmra.mxu0 %v952
        %v1436 = vpop.f32.mrf.mxu0
        %v1437 = vadd.f32 %v1010, %v1436
        %v1438 = vpop.f32.mrf.mxu0
        %v1439 = vadd.f32 %v1014, %v1438
        %v1440 = vpop.f32.mrf.mxu0
        %v1441 = vadd.f32 %v1010, %v1440
        %v1442 = vpop.f32.mrf.mxu0
        %v1443 = vadd.f32 %v1014, %v1442
        %1444 = vmatprep.mubr.bf16.mxu0 0
        %1445 = vmatmul.mubr.bf16.gmra.mxu0 %v953
        %v1446 = vpop.f32.mrf.mxu0
        %v1447 = vadd.f32 %v1010, %v1446
        %v1448 = vpop.f32.mrf.mxu0
        %v1449 = vadd.f32 %v1014, %v1448
        %v1450 = vpop.f32.mrf.mxu0
        %v1451 = vadd.f32 %v1010, %v1450
        %v1452 = vpop.f32.mrf.mxu0
        %v1453 = vadd.f32 %v1014, %v1452
        %1454 = vmatprep.mubr.bf16.mxu0 0
        %1455 = vmatmul.mubr.bf16.gmra.mxu0 %v954
        %v1456 = vpop.f32.mrf.mxu0
        %v1457 = vadd.f32 %v1010, %v1456
        %v1458 = vpop.f32.mrf.mxu0
        %v1459 = vadd.f32 %v1014, %v1458
        %v1460 = vpop.f32.mrf.mxu0
        %v1461 = vadd.f32 %v1010, %v1460
        %v1462 = vpop.f32.mrf.mxu0
        %v1463 = vadd.f32 %v1014, %v1462
        %1464 = vmatprep.mubr.bf16.mxu0 0
        %1465 = vmatmul.mubr.bf16.gmra.mxu0 %v955
        %v1466 = vpop.f32.mrf.mxu0
        %v1467 = vadd.f32 %v1010, %v1466
        %v1468 = vpop.f32.mrf.mxu0
        %v1469 = vadd.f32 %v1014, %v1468
        %v1470 = vpop.f32.mrf.mxu0
        %v1471 = vadd.f32 %v1010, %v1470
        %v1472 = vpop.f32.mrf.mxu0
        %v1473 = vadd.f32 %v1014, %v1472
        %1474 = vmatprep.mubr.bf16.mxu0 0
        %1475 = vmatmul.mubr.bf16.gmra.mxu0 %v956
        %v1476 = vpop.f32.mrf.mxu0
        %v1477 = vadd.f32 %v1010, %v1476
        %v1478 = vpop.f32.mrf.mxu0
        %v1479 = vadd.f32 %v1014, %v1478
        %v1480 = vpop.f32.mrf.mxu0
        %v1481 = vadd.f32 %v1010, %v1480
        %v1482 = vpop.f32.mrf.mxu0
        %v1483 = vadd.f32 %v1014, %v1482
        %1484 = vmatprep.mubr.bf16.mxu0 0
        %1485 = vmatmul.mubr.bf16.gmra.mxu0 %v957
        %v1486 = vpop.f32.mrf.mxu0
        %v1487 = vadd.f32 %v1010, %v1486
        %v1488 = vpop.f32.mrf.mxu0
        %v1489 = vadd.f32 %v1014, %v1488
        %v1490 = vpop.f32.mrf.mxu0
        %v1491 = vadd.f32 %v1010, %v1490
        %v1492 = vpop.f32.mrf.mxu0
        %v1493 = vadd.f32 %v1014, %v1492
        %1494 = vmatprep.mubr.bf16.mxu0 0
        %1495 = vmatmul.mubr.bf16.gmra.mxu0 %v958
        %v1496 = vpop.f32.mrf.mxu0
        %v1497 = vadd.f32 %v1010, %v1496
        %v1498 = vpop.f32.mrf.mxu0
        %v1499 = vadd.f32 %v1014, %v1498
        %v1500 = vpop.f32.mrf.mxu0
        %v1501 = vadd.f32 %v1010, %v1500
        %v1502 = vpop.f32.mrf.mxu0
        %v1503 = vadd.f32 %v1014, %v1502
        %1504 = vmatprep.mubr.bf16.mxu0 0
        %1505 = vmatmul.mubr.bf16.gmra.mxu0 %v959
        %v1506 = vpop.f32.mrf.mxu0
        %v1507 = vadd.f32 %v1010, %v1506
        %v1508 = vpop.f32.mrf.mxu0
        %v1509 = vadd.f32 %v1014, %v1508
        %v1510 = vpop.f32.mrf.mxu0
        %v1511 = vadd.f32 %v1010, %v1510
        %v1512 = vpop.f32.mrf.mxu0
        %v1513 = vadd.f32 %v1014, %v1512
        %1514 = vmatprep.mubr.bf16.mxu0 0
        %1515 = vmatmul.mubr.bf16.gmra.mxu0 %v960
        %v1516 = vpop.f32.mrf.mxu0
        %v1517 = vadd.f32 %v1010, %v1516
        %v1518 = vpop.f32.mrf.mxu0
        %v1519 = vadd.f32 %v1014, %v1518
        %v1520 = vpop.f32.mrf.mxu0
        %v1521 = vadd.f32 %v1010, %v1520
        %v1522 = vpop.f32.mrf.mxu0
        %v1523 = vadd.f32 %v1014, %v1522
        %1524 = vmatprep.mubr.bf16.mxu0 0
        %1525 = vmatmul.mubr.bf16.gmra.mxu0 %v961
        %v1526 = vpop.f32.mrf.mxu0
        %v1527 = vadd.f32 %v1010, %v1526
        %v1528 = vpop.f32.mrf.mxu0
        %v1529 = vadd.f32 %v1014, %v1528
        %v1530 = vpop.f32.mrf.mxu0
        %v1531 = vadd.f32 %v1010, %v1530
        %v1532 = vpop.f32.mrf.mxu0
        %v1533 = vadd.f32 %v1014, %v1532
        %1534 = vmatprep.mubr.bf16.mxu0 0
        %1535 = vmatmul.mubr.bf16.gmra.mxu0 %v962
        %v1536 = vpop.f32.mrf.mxu0
        %v1537 = vadd.f32 %v1010, %v1536
        %v1538 = vpop.f32.mrf.mxu0
        %v1539 = vadd.f32 %v1014, %v1538
        %v1540 = vpop.f32.mrf.mxu0
        %v1541 = vadd.f32 %v1010, %v1540
        %v1542 = vpop.f32.mrf.mxu0
        %v1543 = vadd.f32 %v1014, %v1542
        %1544 = vmatprep.mubr.bf16.mxu0 0
        %1545 = vmatmul.mubr.bf16.gmra.mxu0 %v963
        %v1546 = vpop.f32.mrf.mxu0
        %v1547 = vadd.f32 %v1010, %v1546
        %v1548 = vpop.f32.mrf.mxu0
        %v1549 = vadd.f32 %v1014, %v1548
        %v1550 = vpop.f32.mrf.mxu0
        %v1551 = vadd.f32 %v1010, %v1550
        %v1552 = vpop.f32.mrf.mxu0
        %v1553 = vadd.f32 %v1014, %v1552
        %1554 = vmatprep.mubr.bf16.mxu0 0
        %1555 = vmatmul.mubr.bf16.gmra.mxu0 %v964
        %v1556 = vpop.f32.mrf.mxu0
        %v1557 = vadd.f32 %v1010, %v1556
        %v1558 = vpop.f32.mrf.mxu0
        %v1559 = vadd.f32 %v1014, %v1558
        %v1560 = vpop.f32.mrf.mxu0
        %v1561 = vadd.f32 %v1010, %v1560
        %v1562 = vpop.f32.mrf.mxu0
        %v1563 = vadd.f32 %v1014, %v1562
        %1564 = vdwg.mxu0
        %v1565 = vmax.f32 %v1214, 0.0
        %v1566 = vmax.f32 %v1216, 0.0
        %v1567 = vmax.f32 %v1407, 0.0
        %v1568 = vmax.f32 %v1409, 0.0
        %v1569 = vmax.f32 %v1218, 0.0
        %v1570 = vmax.f32 %v1220, 0.0
        %v1571 = vmax.f32 %v1411, 0.0
        %v1572 = vmax.f32 %v1413, 0.0
        %v1573 = vmax.f32 %v1224, 0.0
        %v1574 = vmax.f32 %v1226, 0.0
        %v1575 = vmax.f32 %v1417, 0.0
        %v1576 = vmax.f32 %v1419, 0.0
        %v1577 = vmax.f32 %v1228, 0.0
        %v1578 = vmax.f32 %v1230, 0.0
        %v1579 = vmax.f32 %v1421, 0.0
        %v1580 = vmax.f32 %v1423, 0.0
        %v1581 = vmax.f32 %v1234, 0.0
        %v1582 = vmax.f32 %v1236, 0.0
        %v1583 = vmax.f32 %v1427, 0.0
        %v1584 = vmax.f32 %v1429, 0.0
        %v1585 = vmax.f32 %v1238, 0.0
        %v1586 = vmax.f32 %v1240, 0.0
        %v1587 = vmax.f32 %v1431, 0.0
        %v1588 = vmax.f32 %v1433, 0.0
        %v1589 = vmax.f32 %v1244, 0.0
        %v1590 = vmax.f32 %v1246, 0.0
        %v1591 = vmax.f32 %v1437, 0.0
        %v1592 = vmax.f32 %v1439, 0.0
        %v1593 = vmax.f32 %v1248, 0.0
        %v1594 = vmax.f32 %v1250, 0.0
        %v1595 = vmax.f32 %v1441, 0.0
        %v1596 = vmax.f32 %v1443, 0.0
        %v1597 = vmax.f32 %v1254, 0.0
        %v1598 = vmax.f32 %v1256, 0.0
        %v1599 = vmax.f32 %v1447, 0.0
        %v1600 = vmax.f32 %v1449, 0.0
        %v1601 = vmax.f32 %v1258, 0.0
        %v1602 = vmax.f32 %v1260, 0.0
        %v1603 = vmax.f32 %v1451, 0.0
        %v1604 = vmax.f32 %v1453, 0.0
        %v1605 = vmax.f32 %v1264, 0.0
        %v1606 = vmax.f32 %v1266, 0.0
        %v1607 = vmax.f32 %v1457, 0.0
        %v1608 = vmax.f32 %v1459, 0.0
        %v1609 = vmax.f32 %v1268, 0.0
        %v1610 = vmax.f32 %v1270, 0.0
        %v1611 = vmax.f32 %v1461, 0.0
        %v1612 = vmax.f32 %v1463, 0.0
        %v1613 = vmax.f32 %v1274, 0.0
        %v1614 = vmax.f32 %v1276, 0.0
        %v1615 = vmax.f32 %v1467, 0.0
        %v1616 = vmax.f32 %v1469, 0.0
        %v1617 = vmax.f32 %v1278, 0.0
        %v1618 = vmax.f32 %v1280, 0.0
        %v1619 = vmax.f32 %v1471, 0.0
        %v1620 = vmax.f32 %v1473, 0.0
        %v1621 = vmax.f32 %v1284, 0.0
        %v1622 = vmax.f32 %v1286, 0.0
        %v1623 = vmax.f32 %v1477, 0.0
        %v1624 = vmax.f32 %v1479, 0.0
        %v1625 = vmax.f32 %v1288, 0.0
        %v1626 = vmax.f32 %v1290, 0.0
        %v1627 = vmax.f32 %v1481, 0.0
        %v1628 = vmax.f32 %v1483, 0.0
        %v1629 = vmax.f32 %v1294, 0.0
        %v1630 = vmax.f32 %v1296, 0.0
        %v1631 = vmax.f32 %v1487, 0.0
        %v1632 = vmax.f32 %v1489, 0.0
        %v1633 = vmax.f32 %v1298, 0.0
        %v1634 = vmax.f32 %v1300, 0.0
        %v1635 = vmax.f32 %v1491, 0.0
        %v1636 = vmax.f32 %v1493, 0.0
        %v1637 = vmax.f32 %v1304, 0.0
        %v1638 = vmax.f32 %v1306, 0.0
        %v1639 = vmax.f32 %v1497, 0.0
        %v1640 = vmax.f32 %v1499, 0.0
        %v1641 = vmax.f32 %v1308, 0.0
        %v1642 = vmax.f32 %v1310, 0.0
        %v1643 = vmax.f32 %v1501, 0.0
        %v1644 = vmax.f32 %v1503, 0.0
        %v1645 = vmax.f32 %v1314, 0.0
        %v1646 = vmax.f32 %v1316, 0.0
        %v1647 = vmax.f32 %v1507, 0.0
        %v1648 = vmax.f32 %v1509, 0.0
        %v1649 = vmax.f32 %v1318, 0.0
        %v1650 = vmax.f32 %v1320, 0.0
        %v1651 = vmax.f32 %v1511, 0.0
        %v1652 = vmax.f32 %v1513, 0.0
        %v1653 = vmax.f32 %v1324, 0.0
        %v1654 = vmax.f32 %v1326, 0.0
        %v1655 = vmax.f32 %v1517, 0.0
        %v1656 = vmax.f32 %v1519, 0.0
        %v1657 = vmax.f32 %v1328, 0.0
        %v1658 = vmax.f32 %v1330, 0.0
        %v1659 = vmax.f32 %v1521, 0.0
        %v1660 = vmax.f32 %v1523, 0.0
        %v1661 = vmax.f32 %v1334, 0.0
        %v1662 = vmax.f32 %v1336, 0.0
        %v1663 = vmax.f32 %v1527, 0.0
        %v1664 = vmax.f32 %v1529, 0.0
        %v1665 = vmax.f32 %v1338, 0.0
        %v1666 = vmax.f32 %v1340, 0.0
        %v1667 = vmax.f32 %v1531, 0.0
        %v1668 = vmax.f32 %v1533, 0.0
        %v1669 = vmax.f32 %v1344, 0.0
        %v1670 = vmax.f32 %v1346, 0.0
        %v1671 = vmax.f32 %v1537, 0.0
        %v1672 = vmax.f32 %v1539, 0.0
        %v1673 = vmax.f32 %v1348, 0.0
        %v1674 = vmax.f32 %v1350, 0.0
        %v1675 = vmax.f32 %v1541, 0.0
        %v1676 = vmax.f32 %v1543, 0.0
        %v1677 = vmax.f32 %v1354, 0.0
        %v1678 = vmax.f32 %v1356, 0.0
        %v1679 = vmax.f32 %v1547, 0.0
        %v1680 = vmax.f32 %v1549, 0.0
        %v1681 = vmax.f32 %v1358, 0.0
        %v1682 = vmax.f32 %v1360, 0.0
        %v1683 = vmax.f32 %v1551, 0.0
        %v1684 = vmax.f32 %v1553, 0.0
        %v1685 = vmax.f32 %v1364, 0.0
        %v1686 = vmax.f32 %v1366, 0.0
        %v1687 = vmax.f32 %v1557, 0.0
        %v1688 = vmax.f32 %v1559, 0.0
        %v1689 = vmax.f32 %v1368, 0.0
        %v1690 = vmax.f32 %v1370, 0.0
        %v1691 = vmax.f32 %v1561, 0.0
        %v1692 = vmax.f32 %v1563, 0.0
        %v1693 = vpack.c.bf16 %v1569, %v1565
        %v1694 = vpack.c.bf16 %v1570, %v1566
        %v1695 = vpack.c.bf16 %v1571, %v1567
        %v1696 = vpack.c.bf16 %v1572, %v1568
        %v1697 = vpack.c.bf16 %v1577, %v1573
        %v1698 = vpack.c.bf16 %v1578, %v1574
        %v1699 = vpack.c.bf16 %v1579, %v1575
        %v1700 = vpack.c.bf16 %v1580, %v1576
        %v1701 = vpack.c.bf16 %v1585, %v1581
        %v1702 = vpack.c.bf16 %v1586, %v1582
        %v1703 = vpack.c.bf16 %v1587, %v1583
        %v1704 = vpack.c.bf16 %v1588, %v1584
        %v1705 = vpack.c.bf16 %v1593, %v1589
        %v1706 = vpack.c.bf16 %v1594, %v1590
        %v1707 = vpack.c.bf16 %v1595, %v1591
        %v1708 = vpack.c.bf16 %v1596, %v1592
        %v1709 = vpack.c.bf16 %v1601, %v1597
        %v1710 = vpack.c.bf16 %v1602, %v1598
        %v1711 = vpack.c.bf16 %v1603, %v1599
        %v1712 = vpack.c.bf16 %v1604, %v1600
        %v1713 = vpack.c.bf16 %v1609, %v1605
        %v1714 = vpack.c.bf16 %v1610, %v1606
        %v1715 = vpack.c.bf16 %v1611, %v1607
        %v1716 = vpack.c.bf16 %v1612, %v1608
        %v1717 = vpack.c.bf16 %v1617, %v1613
        %v1718 = vpack.c.bf16 %v1618, %v1614
        %v1719 = vpack.c.bf16 %v1619, %v1615
        %v1720 = vpack.c.bf16 %v1620, %v1616
        %v1721 = vpack.c.bf16 %v1625, %v1621
        %v1722 = vpack.c.bf16 %v1626, %v1622
        %v1723 = vpack.c.bf16 %v1627, %v1623
        %v1724 = vpack.c.bf16 %v1628, %v1624
        %v1725 = vpack.c.bf16 %v1633, %v1629
        %v1726 = vpack.c.bf16 %v1634, %v1630
        %v1727 = vpack.c.bf16 %v1635, %v1631
        %v1728 = vpack.c.bf16 %v1636, %v1632
        %v1729 = vpack.c.bf16 %v1641, %v1637
        %v1730 = vpack.c.bf16 %v1642, %v1638
        %v1731 = vpack.c.bf16 %v1643, %v1639
        %v1732 = vpack.c.bf16 %v1644, %v1640
        %v1733 = vpack.c.bf16 %v1649, %v1645
        %v1734 = vpack.c.bf16 %v1650, %v1646
        %v1735 = vpack.c.bf16 %v1651, %v1647
        %v1736 = vpack.c.bf16 %v1652, %v1648
        %v1737 = vpack.c.bf16 %v1657, %v1653
        %v1738 = vpack.c.bf16 %v1658, %v1654
        %v1739 = vpack.c.bf16 %v1659, %v1655
        %v1740 = vpack.c.bf16 %v1660, %v1656
        %v1741 = vpack.c.bf16 %v1665, %v1661
        %v1742 = vpack.c.bf16 %v1666, %v1662
        %v1743 = vpack.c.bf16 %v1667, %v1663
        %v1744 = vpack.c.bf16 %v1668, %v1664
        %v1745 = vpack.c.bf16 %v1673, %v1669
        %v1746 = vpack.c.bf16 %v1674, %v1670
        %v1747 = vpack.c.bf16 %v1675, %v1671
        %v1748 = vpack.c.bf16 %v1676, %v1672
        %v1749 = vpack.c.bf16 %v1681, %v1677
        %v1750 = vpack.c.bf16 %v1682, %v1678
        %v1751 = vpack.c.bf16 %v1683, %v1679
        %v1752 = vpack.c.bf16 %v1684, %v1680
        %v1753 = vpack.c.bf16 %v1689, %v1685
        %v1754 = vpack.c.bf16 %v1690, %v1686
        %v1755 = vpack.c.bf16 %v1691, %v1687
        %v1756 = vpack.c.bf16 %v1692, %v1688
        %v1757 = vld [vmem:[#allocation8] sm:$0xff]
        %v1758 = vld [vmem:[#allocation8 + $0x8] sm:$0xff]
        %v1759 = vld [vmem:[#allocation8 + $0x10] sm:$0xff]
        %v1760 = vld [vmem:[#allocation8 + $0x18] sm:$0xff]
        %v1761 = vld [vmem:[#allocation8 + $0x20] sm:$0xff]
        %v1762 = vld [vmem:[#allocation8 + $0x28] sm:$0xff]
        %v1763 = vld [vmem:[#allocation8 + $0x30] sm:$0xff]
        %v1764 = vld [vmem:[#allocation8 + $0x38] sm:$0xff]
        %v1765 = vld [vmem:[#allocation8 + $0x40] sm:$0xff]
        %v1766 = vld [vmem:[#allocation8 + $0x48] sm:$0xff]
        %v1767 = vld [vmem:[#allocation8 + $0x50] sm:$0xff]
        %v1768 = vld [vmem:[#allocation8 + $0x58] sm:$0xff]
        %v1769 = vld [vmem:[#allocation8 + $0x60] sm:$0xff]
        %v1770 = vld [vmem:[#allocation8 + $0x68] sm:$0xff]
        %v1771 = vld [vmem:[#allocation8 + $0x70] sm:$0xff]
        %v1772 = vld [vmem:[#allocation8 + $0x78] sm:$0xff]
        %v1773 = vld [vmem:[#allocation8 + $0x80] sm:$0xff]
        %v1774 = vld [vmem:[#allocation8 + $0x88] sm:$0xff]
        %v1775 = vld [vmem:[#allocation8 + $0x90] sm:$0xff]
        %v1776 = vld [vmem:[#allocation8 + $0x98] sm:$0xff]
        %v1777 = vld [vmem:[#allocation8 + $0xa0] sm:$0xff]
        %v1778 = vld [vmem:[#allocation8 + $0xa8] sm:$0xff]
        %v1779 = vld [vmem:[#allocation8 + $0xb0] sm:$0xff]
        %v1780 = vld [vmem:[#allocation8 + $0xb8] sm:$0xff]
        %v1781 = vld [vmem:[#allocation8 + $0xc0] sm:$0xff]
        %v1782 = vld [vmem:[#allocation8 + $0xc8] sm:$0xff]
        %v1783 = vld [vmem:[#allocation8 + $0xd0] sm:$0xff]
        %v1784 = vld [vmem:[#allocation8 + $0xd8] sm:$0xff]
        %v1785 = vld [vmem:[#allocation8 + $0xe0] sm:$0xff]
        %v1786 = vld [vmem:[#allocation8 + $0xe8] sm:$0xff]
        %v1787 = vld [vmem:[#allocation8 + $0xf0] sm:$0xff]
        %v1788 = vld [vmem:[#allocation8 + $0xf8] sm:$0xff]
        %v1789 = vld [vmem:[#allocation8 + $0x100] sm:$0xff]
        %v1790 = vld [vmem:[#allocation8 + $0x108] sm:$0xff]
        %v1791 = vld [vmem:[#allocation8 + $0x110] sm:$0xff]
        %v1792 = vld [vmem:[#allocation8 + $0x118] sm:$0xff]
        %v1793 = vld [vmem:[#allocation8 + $0x120] sm:$0xff]
        %v1794 = vld [vmem:[#allocation8 + $0x128] sm:$0xff]
        %v1795 = vld [vmem:[#allocation8 + $0x130] sm:$0xff]
        %v1796 = vld [vmem:[#allocation8 + $0x138] sm:$0xff]
        %v1797 = vld [vmem:[#allocation8 + $0x140] sm:$0xff]
        %v1798 = vld [vmem:[#allocation8 + $0x148] sm:$0xff]
        %v1799 = vld [vmem:[#allocation8 + $0x150] sm:$0xff]
        %v1800 = vld [vmem:[#allocation8 + $0x158] sm:$0xff]
        %v1801 = vld [vmem:[#allocation8 + $0x160] sm:$0xff]
        %v1802 = vld [vmem:[#allocation8 + $0x168] sm:$0xff]
        %v1803 = vld [vmem:[#allocation8 + $0x170] sm:$0xff]
        %v1804 = vld [vmem:[#allocation8 + $0x178] sm:$0xff]
        %v1805 = vld [vmem:[#allocation8 + $0x180] sm:$0xff]
        %v1806 = vld [vmem:[#allocation8 + $0x188] sm:$0xff]
        %v1807 = vld [vmem:[#allocation8 + $0x190] sm:$0xff]
        %v1808 = vld [vmem:[#allocation8 + $0x198] sm:$0xff]
        %v1809 = vld [vmem:[#allocation8 + $0x1a0] sm:$0xff]
        %v1810 = vld [vmem:[#allocation8 + $0x1a8] sm:$0xff]
        %v1811 = vld [vmem:[#allocation8 + $0x1b0] sm:$0xff]
        %v1812 = vld [vmem:[#allocation8 + $0x1b8] sm:$0xff]
        %v1813 = vld [vmem:[#allocation8 + $0x1c0] sm:$0xff]
        %v1814 = vld [vmem:[#allocation8 + $0x1c8] sm:$0xff]
        %v1815 = vld [vmem:[#allocation8 + $0x1d0] sm:$0xff]
        %v1816 = vld [vmem:[#allocation8 + $0x1d8] sm:$0xff]
        %v1817 = vld [vmem:[#allocation8 + $0x1e0] sm:$0xff]
        %v1818 = vld [vmem:[#allocation8 + $0x1e8] sm:$0xff]
        %v1819 = vld [vmem:[#allocation8 + $0x1f0] sm:$0xff]
        %v1820 = vld [vmem:[#allocation8 + $0x1f8] sm:$0xff]
        %v1821 = vld [vmem:[%s6] sm:$0x3]
        %v1823 = vlaneseq
        %v1824 = vshrl.u32 %v1823, 7
        %v1825 = vsub.s32 0, %v1824
        %v1826 = vrot.slane %v1821, %v1825
        %v1827 = vlaneseq
        %v1828 = vshrl.u32 %v1827, 7
        %v1829 = vsub.s32 1, %v1828
        %v1830 = vrot.slane %v1821, %v1829
        %v1897 = vunpack.c.l.b16 %v1757
        %v1898 = vunpack.c.h.b16 %v1757
        %v1899 = vunpack.c.l.b16 %v1758
        %v1900 = vunpack.c.h.b16 %v1758
        %v1901 = vunpack.c.l.b16 %v1759
        %v1902 = vunpack.c.h.b16 %v1759
        %v1903 = vunpack.c.l.b16 %v1760
        %v1904 = vunpack.c.h.b16 %v1760
        %v1905 = vunpack.c.l.b16 %v1761
        %v1906 = vunpack.c.h.b16 %v1761
        %v1907 = vunpack.c.l.b16 %v1762
        %v1908 = vunpack.c.h.b16 %v1762
        %v1909 = vunpack.c.l.b16 %v1763
        %v1910 = vunpack.c.h.b16 %v1763
        %v1911 = vunpack.c.l.b16 %v1764
        %v1912 = vunpack.c.h.b16 %v1764
        %v1913 = vunpack.c.l.b16 %v1765
        %v1914 = vunpack.c.h.b16 %v1765
        %v1915 = vunpack.c.l.b16 %v1766
        %v1916 = vunpack.c.h.b16 %v1766
        %v1917 = vunpack.c.l.b16 %v1767
        %v1918 = vunpack.c.h.b16 %v1767
        %v1919 = vunpack.c.l.b16 %v1768
        %v1920 = vunpack.c.h.b16 %v1768
        %v1921 = vunpack.c.l.b16 %v1769
        %v1922 = vunpack.c.h.b16 %v1769
        %v1923 = vunpack.c.l.b16 %v1770
        %v1924 = vunpack.c.h.b16 %v1770
        %v1925 = vunpack.c.l.b16 %v1771
        %v1926 = vunpack.c.h.b16 %v1771
        %v1927 = vunpack.c.l.b16 %v1772
        %v1928 = vunpack.c.h.b16 %v1772
        %v1929 = vunpack.c.l.b16 %v1773
        %v1930 = vunpack.c.h.b16 %v1773
        %v1931 = vunpack.c.l.b16 %v1774
        %v1932 = vunpack.c.h.b16 %v1774
        %v1933 = vunpack.c.l.b16 %v1775
        %v1934 = vunpack.c.h.b16 %v1775
        %v1935 = vunpack.c.l.b16 %v1776
        %v1936 = vunpack.c.h.b16 %v1776
        %v1937 = vunpack.c.l.b16 %v1777
        %v1938 = vunpack.c.h.b16 %v1777
        %v1939 = vunpack.c.l.b16 %v1778
        %v1940 = vunpack.c.h.b16 %v1778
        %v1941 = vunpack.c.l.b16 %v1779
        %v1942 = vunpack.c.h.b16 %v1779
        %v1943 = vunpack.c.l.b16 %v1780
        %v1944 = vunpack.c.h.b16 %v1780
        %v1945 = vunpack.c.l.b16 %v1781
        %v1946 = vunpack.c.h.b16 %v1781
        %v1947 = vunpack.c.l.b16 %v1782
        %v1948 = vunpack.c.h.b16 %v1782
        %v1949 = vunpack.c.l.b16 %v1783
        %v1950 = vunpack.c.h.b16 %v1783
        %v1951 = vunpack.c.l.b16 %v1784
        %v1952 = vunpack.c.h.b16 %v1784
        %v1953 = vunpack.c.l.b16 %v1785
        %v1954 = vunpack.c.h.b16 %v1785
        %v1955 = vunpack.c.l.b16 %v1786
        %v1956 = vunpack.c.h.b16 %v1786
        %v1957 = vunpack.c.l.b16 %v1787
        %v1958 = vunpack.c.h.b16 %v1787
        %v1959 = vunpack.c.l.b16 %v1788
        %v1960 = vunpack.c.h.b16 %v1788
        %v1961 = vunpack.c.l.b16 %v1789
        %v1962 = vunpack.c.h.b16 %v1789
        %v1963 = vunpack.c.l.b16 %v1790
        %v1964 = vunpack.c.h.b16 %v1790
        %v1965 = vunpack.c.l.b16 %v1791
        %v1966 = vunpack.c.h.b16 %v1791
        %v1967 = vunpack.c.l.b16 %v1792
        %v1968 = vunpack.c.h.b16 %v1792
        %v1969 = vunpack.c.l.b16 %v1793
        %v1970 = vunpack.c.h.b16 %v1793
        %v1971 = vunpack.c.l.b16 %v1794
        %v1972 = vunpack.c.h.b16 %v1794
        %v1973 = vunpack.c.l.b16 %v1795
        %v1974 = vunpack.c.h.b16 %v1795
        %v1975 = vunpack.c.l.b16 %v1796
        %v1976 = vunpack.c.h.b16 %v1796
        %v1977 = vunpack.c.l.b16 %v1797
        %v1978 = vunpack.c.h.b16 %v1797
        %v1979 = vunpack.c.l.b16 %v1798
        %v1980 = vunpack.c.h.b16 %v1798
        %v1981 = vunpack.c.l.b16 %v1799
        %v1982 = vunpack.c.h.b16 %v1799
        %v1983 = vunpack.c.l.b16 %v1800
        %v1984 = vunpack.c.h.b16 %v1800
        %v1985 = vunpack.c.l.b16 %v1801
        %v1986 = vunpack.c.h.b16 %v1801
        %v1987 = vunpack.c.l.b16 %v1802
        %v1988 = vunpack.c.h.b16 %v1802
        %v1989 = vunpack.c.l.b16 %v1803
        %v1990 = vunpack.c.h.b16 %v1803
        %v1991 = vunpack.c.l.b16 %v1804
        %v1992 = vunpack.c.h.b16 %v1804
        %v1993 = vunpack.c.l.b16 %v1805
        %v1994 = vunpack.c.h.b16 %v1805
        %v1995 = vunpack.c.l.b16 %v1806
        %v1996 = vunpack.c.h.b16 %v1806
        %v1997 = vunpack.c.l.b16 %v1807
        %v1998 = vunpack.c.h.b16 %v1807
        %v1999 = vunpack.c.l.b16 %v1808
        %v2000 = vunpack.c.h.b16 %v1808
        %v2001 = vunpack.c.l.b16 %v1809
        %v2002 = vunpack.c.h.b16 %v1809
        %v2003 = vunpack.c.l.b16 %v1810
        %v2004 = vunpack.c.h.b16 %v1810
        %v2005 = vunpack.c.l.b16 %v1811
        %v2006 = vunpack.c.h.b16 %v1811
        %v2007 = vunpack.c.l.b16 %v1812
        %v2008 = vunpack.c.h.b16 %v1812
        %v2009 = vunpack.c.l.b16 %v1813
        %v2010 = vunpack.c.h.b16 %v1813
        %v2011 = vunpack.c.l.b16 %v1814
        %v2012 = vunpack.c.h.b16 %v1814
        %v2013 = vunpack.c.l.b16 %v1815
        %v2014 = vunpack.c.h.b16 %v1815
        %v2015 = vunpack.c.l.b16 %v1816
        %v2016 = vunpack.c.h.b16 %v1816
        %v2017 = vunpack.c.l.b16 %v1817
        %v2018 = vunpack.c.h.b16 %v1817
        %v2019 = vunpack.c.l.b16 %v1818
        %v2020 = vunpack.c.h.b16 %v1818
        %v2021 = vunpack.c.l.b16 %v1819
        %v2022 = vunpack.c.h.b16 %v1819
        %v2023 = vunpack.c.l.b16 %v1820
        %v2024 = vunpack.c.h.b16 %v1820
        %v2025 = vpack.c.b16 %v1899, %v1897
        %v2026 = vpack.c.b16 %v1900, %v1898
        %v2027 = vpack.c.b16 %v1903, %v1901
        %v2028 = vpack.c.b16 %v1904, %v1902
        %v2029 = vpack.c.b16 %v1907, %v1905
        %v2030 = vpack.c.b16 %v1908, %v1906
        %v2031 = vpack.c.b16 %v1911, %v1909
        %v2032 = vpack.c.b16 %v1912, %v1910
        %v2033 = vpack.c.b16 %v1915, %v1913
        %v2034 = vpack.c.b16 %v1916, %v1914
        %v2035 = vpack.c.b16 %v1919, %v1917
        %v2036 = vpack.c.b16 %v1920, %v1918
        %v2037 = vpack.c.b16 %v1923, %v1921
        %v2038 = vpack.c.b16 %v1924, %v1922
        %v2039 = vpack.c.b16 %v1927, %v1925
        %v2040 = vpack.c.b16 %v1928, %v1926
        %v2041 = vpack.c.b16 %v1931, %v1929
        %v2042 = vpack.c.b16 %v1932, %v1930
        %v2043 = vpack.c.b16 %v1935, %v1933
        %v2044 = vpack.c.b16 %v1936, %v1934
        %v2045 = vpack.c.b16 %v1939, %v1937
        %v2046 = vpack.c.b16 %v1940, %v1938
        %v2047 = vpack.c.b16 %v1943, %v1941
        %v2048 = vpack.c.b16 %v1944, %v1942
        %v2049 = vpack.c.b16 %v1947, %v1945
        %v2050 = vpack.c.b16 %v1948, %v1946
        %v2051 = vpack.c.b16 %v1951, %v1949
        %v2052 = vpack.c.b16 %v1952, %v1950
        %v2053 = vpack.c.b16 %v1955, %v1953
        %v2054 = vpack.c.b16 %v1956, %v1954
        %v2055 = vpack.c.b16 %v1959, %v1957
        %v2056 = vpack.c.b16 %v1960, %v1958
        %v2057 = vpack.c.b16 %v1963, %v1961
        %v2058 = vpack.c.b16 %v1964, %v1962
        %v2059 = vpack.c.b16 %v1967, %v1965
        %v2060 = vpack.c.b16 %v1968, %v1966
        %v2061 = vpack.c.b16 %v1971, %v1969
        %v2062 = vpack.c.b16 %v1972, %v1970
        %v2063 = vpack.c.b16 %v1975, %v1973
        %v2064 = vpack.c.b16 %v1976, %v1974
        %v2065 = vpack.c.b16 %v1979, %v1977
        %v2066 = vpack.c.b16 %v1980, %v1978
        %v2067 = vpack.c.b16 %v1983, %v1981
        %v2068 = vpack.c.b16 %v1984, %v1982
        %v2069 = vpack.c.b16 %v1987, %v1985
        %v2070 = vpack.c.b16 %v1988, %v1986
        %v2071 = vpack.c.b16 %v1991, %v1989
        %v2072 = vpack.c.b16 %v1992, %v1990
        %v2073 = vpack.c.b16 %v1995, %v1993
        %v2074 = vpack.c.b16 %v1996, %v1994
        %v2075 = vpack.c.b16 %v1999, %v1997
        %v2076 = vpack.c.b16 %v2000, %v1998
        %v2077 = vpack.c.b16 %v2003, %v2001
        %v2078 = vpack.c.b16 %v2004, %v2002
        %v2079 = vpack.c.b16 %v2007, %v2005
        %v2080 = vpack.c.b16 %v2008, %v2006
        %v2081 = vpack.c.b16 %v2011, %v2009
        %v2082 = vpack.c.b16 %v2012, %v2010
        %v2083 = vpack.c.b16 %v2015, %v2013
        %v2084 = vpack.c.b16 %v2016, %v2014
        %v2085 = vpack.c.b16 %v2019, %v2017
        %v2086 = vpack.c.b16 %v2020, %v2018
        %v2087 = vpack.c.b16 %v2023, %v2021
        %v2088 = vpack.c.b16 %v2024, %v2022
        %2153 = vmatprep.subr.bf16.mxu0 %v2040
        %2154 = vmatpush1.bf16.msra.mxu0 %v2039
        %2155 = vmatprep.subr.bf16.mxu0 %v2038
        %2156 = vmatpush1.bf16.msra.mxu0 %v2037
        %2157 = vmatprep.subr.bf16.mxu0 %v2036
        %2158 = vmatpush1.bf16.msra.mxu0 %v2035
        %2159 = vmatprep.subr.bf16.mxu0 %v2034
        %2160 = vmatpush1.bf16.msra.mxu0 %v2033
        %2161 = vmatprep.subr.bf16.mxu0 %v2032
        %2162 = vmatpush1.bf16.msra.mxu0 %v2031
        %2163 = vmatprep.subr.bf16.mxu0 %v2030
        %2164 = vmatpush1.bf16.msra.mxu0 %v2029
        %2165 = vmatprep.subr.bf16.mxu0 %v2028
        %2166 = vmatpush1.bf16.msra.mxu0 %v2027
        %2167 = vmatprep.subr.bf16.mxu0 %v2026
        %2168 = vmatpush1.bf16.msra.mxu0 %v2025
        %2169 = vmatprep.subr.bf16.mxu0 %v2056
        %2170 = vmatpush2.bf16.msra.mxu0 %v2055
        %2171 = vmatprep.subr.bf16.mxu0 %v2054
        %2172 = vmatpush2.bf16.msra.mxu0 %v2053
        %2173 = vmatprep.subr.bf16.mxu0 %v2052
        %2174 = vmatpush2.bf16.msra.mxu0 %v2051
        %2175 = vmatprep.subr.bf16.mxu0 %v2050
        %2176 = vmatpush2.bf16.msra.mxu0 %v2049
        %2177 = vmatprep.subr.bf16.mxu0 %v2048
        %2178 = vmatpush2.bf16.msra.mxu0 %v2047
        %2179 = vmatprep.subr.bf16.mxu0 %v2046
        %2180 = vmatpush2.bf16.msra.mxu0 %v2045
        %2181 = vmatprep.subr.bf16.mxu0 %v2044
        %2182 = vmatpush2.bf16.msra.mxu0 %v2043
        %2183 = vmatprep.subr.bf16.mxu0 %v2042
        %2184 = vmatpush2.bf16.msra.mxu0 %v2041
        %2185 = vmatprep.mubr.bf16.mxu0 %v1694
        %2186 = vmatmul.mubr.bf16.gmra.mxu0 %v1693
        %v2187 = vpop.f32.mrf.mxu0
        %v2188 = vadd.f32 %v1826, %v2187
        %v2189 = vpop.f32.mrf.mxu0
        %v2190 = vadd.f32 %v1830, %v2189
        %v2191 = vpop.f32.mrf.mxu0
        %v2192 = vadd.f32 %v1826, %v2191
        %v2193 = vpop.f32.mrf.mxu0
        %v2194 = vadd.f32 %v1830, %v2193
        %2195 = vmatprep.mubr.bf16.mxu0 %v1698
        %2196 = vmatmul.mubr.bf16.gmra.mxu0 %v1697
        %v2197 = vpop.f32.mrf.mxu0
        %v2198 = vadd.f32 %v1826, %v2197
        %v2199 = vpop.f32.mrf.mxu0
        %v2200 = vadd.f32 %v1830, %v2199
        %v2201 = vpop.f32.mrf.mxu0
        %v2202 = vadd.f32 %v1826, %v2201
        %v2203 = vpop.f32.mrf.mxu0
        %v2204 = vadd.f32 %v1830, %v2203
        %2205 = vmatprep.mubr.bf16.mxu0 %v1702
        %2206 = vmatmul.mubr.bf16.gmra.mxu0 %v1701
        %v2207 = vpop.f32.mrf.mxu0
        %v2208 = vadd.f32 %v1826, %v2207
        %v2209 = vpop.f32.mrf.mxu0
        %v2210 = vadd.f32 %v1830, %v2209
        %v2211 = vpop.f32.mrf.mxu0
        %v2212 = vadd.f32 %v1826, %v2211
        %v2213 = vpop.f32.mrf.mxu0
        %v2214 = vadd.f32 %v1830, %v2213
        %2215 = vmatprep.mubr.bf16.mxu0 %v1706
        %2216 = vmatmul.mubr.bf16.gmra.mxu0 %v1705
        %v2217 = vpop.f32.mrf.mxu0
        %v2218 = vadd.f32 %v1826, %v2217
        %v2219 = vpop.f32.mrf.mxu0
        %v2220 = vadd.f32 %v1830, %v2219
        %v2221 = vpop.f32.mrf.mxu0
        %v2222 = vadd.f32 %v1826, %v2221
        %v2223 = vpop.f32.mrf.mxu0
        %v2224 = vadd.f32 %v1830, %v2223
        %2225 = vmatprep.mubr.bf16.mxu0 %v1710
        %2226 = vmatmul.mubr.bf16.gmra.mxu0 %v1709
        %v2227 = vpop.f32.mrf.mxu0
        %v2228 = vadd.f32 %v1826, %v2227
        %v2229 = vpop.f32.mrf.mxu0
        %v2230 = vadd.f32 %v1830, %v2229
        %v2231 = vpop.f32.mrf.mxu0
        %v2232 = vadd.f32 %v1826, %v2231
        %v2233 = vpop.f32.mrf.mxu0
        %v2234 = vadd.f32 %v1830, %v2233
        %2235 = vmatprep.mubr.bf16.mxu0 %v1714
        %2236 = vmatmul.mubr.bf16.gmra.mxu0 %v1713
        %v2237 = vpop.f32.mrf.mxu0
        %v2238 = vadd.f32 %v1826, %v2237
        %v2239 = vpop.f32.mrf.mxu0
        %v2240 = vadd.f32 %v1830, %v2239
        %v2241 = vpop.f32.mrf.mxu0
        %v2242 = vadd.f32 %v1826, %v2241
        %v2243 = vpop.f32.mrf.mxu0
        %v2244 = vadd.f32 %v1830, %v2243
        %2245 = vmatprep.mubr.bf16.mxu0 %v1718
        %2246 = vmatmul.mubr.bf16.gmra.mxu0 %v1717
        %v2247 = vpop.f32.mrf.mxu0
        %v2248 = vadd.f32 %v1826, %v2247
        %v2249 = vpop.f32.mrf.mxu0
        %v2250 = vadd.f32 %v1830, %v2249
        %v2251 = vpop.f32.mrf.mxu0
        %v2252 = vadd.f32 %v1826, %v2251
        %v2253 = vpop.f32.mrf.mxu0
        %v2254 = vadd.f32 %v1830, %v2253
        %2255 = vmatprep.mubr.bf16.mxu0 %v1722
        %2256 = vmatmul.mubr.bf16.gmra.mxu0 %v1721
        %v2257 = vpop.f32.mrf.mxu0
        %v2258 = vadd.f32 %v1826, %v2257
        %v2259 = vpop.f32.mrf.mxu0
        %v2260 = vadd.f32 %v1830, %v2259
        %v2261 = vpop.f32.mrf.mxu0
        %v2262 = vadd.f32 %v1826, %v2261
        %v2263 = vpop.f32.mrf.mxu0
        %v2264 = vadd.f32 %v1830, %v2263
        %2265 = vmatprep.mubr.bf16.mxu0 %v1726
        %2266 = vmatmul.mubr.bf16.gmra.mxu0 %v1725
        %v2267 = vpop.f32.mrf.mxu0
        %v2268 = vadd.f32 %v1826, %v2267
        %v2269 = vpop.f32.mrf.mxu0
        %v2270 = vadd.f32 %v1830, %v2269
        %v2271 = vpop.f32.mrf.mxu0
        %v2272 = vadd.f32 %v1826, %v2271
        %v2273 = vpop.f32.mrf.mxu0
        %v2274 = vadd.f32 %v1830, %v2273
        %2275 = vmatprep.mubr.bf16.mxu0 %v1730
        %2276 = vmatmul.mubr.bf16.gmra.mxu0 %v1729
        %v2277 = vpop.f32.mrf.mxu0
        %v2278 = vadd.f32 %v1826, %v2277
        %v2279 = vpop.f32.mrf.mxu0
        %v2280 = vadd.f32 %v1830, %v2279
        %v2281 = vpop.f32.mrf.mxu0
        %v2282 = vadd.f32 %v1826, %v2281
        %v2283 = vpop.f32.mrf.mxu0
        %v2284 = vadd.f32 %v1830, %v2283
        %2285 = vmatprep.mubr.bf16.mxu0 %v1734
        %2286 = vmatmul.mubr.bf16.gmra.mxu0 %v1733
        %v2287 = vpop.f32.mrf.mxu0
        %v2288 = vadd.f32 %v1826, %v2287
        %v2289 = vpop.f32.mrf.mxu0
        %v2290 = vadd.f32 %v1830, %v2289
        %v2291 = vpop.f32.mrf.mxu0
        %v2292 = vadd.f32 %v1826, %v2291
        %v2293 = vpop.f32.mrf.mxu0
        %v2294 = vadd.f32 %v1830, %v2293
        %2295 = vmatprep.mubr.bf16.mxu0 %v1738
        %2296 = vmatmul.mubr.bf16.gmra.mxu0 %v1737
        %v2297 = vpop.f32.mrf.mxu0
        %v2298 = vadd.f32 %v1826, %v2297
        %v2299 = vpop.f32.mrf.mxu0
        %v2300 = vadd.f32 %v1830, %v2299
        %v2301 = vpop.f32.mrf.mxu0
        %v2302 = vadd.f32 %v1826, %v2301
        %v2303 = vpop.f32.mrf.mxu0
        %v2304 = vadd.f32 %v1830, %v2303
        %2305 = vmatprep.mubr.bf16.mxu0 %v1742
        %2306 = vmatmul.mubr.bf16.gmra.mxu0 %v1741
        %v2307 = vpop.f32.mrf.mxu0
        %v2308 = vadd.f32 %v1826, %v2307
        %v2309 = vpop.f32.mrf.mxu0
        %v2310 = vadd.f32 %v1830, %v2309
        %v2311 = vpop.f32.mrf.mxu0
        %v2312 = vadd.f32 %v1826, %v2311
        %v2313 = vpop.f32.mrf.mxu0
        %v2314 = vadd.f32 %v1830, %v2313
        %2315 = vmatprep.mubr.bf16.mxu0 %v1746
        %2316 = vmatmul.mubr.bf16.gmra.mxu0 %v1745
        %v2317 = vpop.f32.mrf.mxu0
        %v2318 = vadd.f32 %v1826, %v2317
        %v2319 = vpop.f32.mrf.mxu0
        %v2320 = vadd.f32 %v1830, %v2319
        %v2321 = vpop.f32.mrf.mxu0
        %v2322 = vadd.f32 %v1826, %v2321
        %v2323 = vpop.f32.mrf.mxu0
        %v2324 = vadd.f32 %v1830, %v2323
        %2325 = vmatprep.mubr.bf16.mxu0 %v1750
        %2326 = vmatmul.mubr.bf16.gmra.mxu0 %v1749
        %v2327 = vpop.f32.mrf.mxu0
        %v2328 = vadd.f32 %v1826, %v2327
        %v2329 = vpop.f32.mrf.mxu0
        %v2330 = vadd.f32 %v1830, %v2329
        %v2331 = vpop.f32.mrf.mxu0
        %v2332 = vadd.f32 %v1826, %v2331
        %v2333 = vpop.f32.mrf.mxu0
        %v2334 = vadd.f32 %v1830, %v2333
        %2335 = vmatprep.mubr.bf16.mxu0 %v1754
        %2336 = vmatmul.mubr.bf16.gmra.mxu0 %v1753
        %v2337 = vpop.f32.mrf.mxu0
        %v2338 = vadd.f32 %v1826, %v2337
        %v2339 = vpop.f32.mrf.mxu0
        %v2340 = vadd.f32 %v1830, %v2339
        %v2341 = vpop.f32.mrf.mxu0
        %v2342 = vadd.f32 %v1826, %v2341
        %v2343 = vpop.f32.mrf.mxu0
        %v2344 = vadd.f32 %v1830, %v2343
        %2345 = vdwg.mxu0
        %2346 = vmatprep.subr.bf16.mxu0 %v2072
        %2347 = vmatpush1.bf16.msra.mxu0 %v2071
        %2348 = vmatprep.subr.bf16.mxu0 %v2070
        %2349 = vmatpush1.bf16.msra.mxu0 %v2069
        %2350 = vmatprep.subr.bf16.mxu0 %v2068
        %2351 = vmatpush1.bf16.msra.mxu0 %v2067
        %2352 = vmatprep.subr.bf16.mxu0 %v2066
        %2353 = vmatpush1.bf16.msra.mxu0 %v2065
        %2354 = vmatprep.subr.bf16.mxu0 %v2064
        %2355 = vmatpush1.bf16.msra.mxu0 %v2063
        %2356 = vmatprep.subr.bf16.mxu0 %v2062
        %2357 = vmatpush1.bf16.msra.mxu0 %v2061
        %2358 = vmatprep.subr.bf16.mxu0 %v2060
        %2359 = vmatpush1.bf16.msra.mxu0 %v2059
        %2360 = vmatprep.subr.bf16.mxu0 %v2058
        %2361 = vmatpush1.bf16.msra.mxu0 %v2057
        %2362 = vmatprep.subr.bf16.mxu0 %v2088
        %2363 = vmatpush2.bf16.msra.mxu0 %v2087
        %2364 = vmatprep.subr.bf16.mxu0 %v2086
        %2365 = vmatpush2.bf16.msra.mxu0 %v2085
        %2366 = vmatprep.subr.bf16.mxu0 %v2084
        %2367 = vmatpush2.bf16.msra.mxu0 %v2083
        %2368 = vmatprep.subr.bf16.mxu0 %v2082
        %2369 = vmatpush2.bf16.msra.mxu0 %v2081
        %2370 = vmatprep.subr.bf16.mxu0 %v2080
        %2371 = vmatpush2.bf16.msra.mxu0 %v2079
        %2372 = vmatprep.subr.bf16.mxu0 %v2078
        %2373 = vmatpush2.bf16.msra.mxu0 %v2077
        %2374 = vmatprep.subr.bf16.mxu0 %v2076
        %2375 = vmatpush2.bf16.msra.mxu0 %v2075
        %2376 = vmatprep.subr.bf16.mxu0 %v2074
        %2377 = vmatpush2.bf16.msra.mxu0 %v2073
        %2378 = vmatprep.mubr.bf16.mxu0 %v1696
        %2379 = vmatmul.mubr.bf16.gmra.mxu0 %v1695
        %v2380 = vpop.f32.mrf.mxu0
        %v2381 = vadd.f32 %v2188, %v2380
        %v2382 = vpop.f32.mrf.mxu0
        %v2383 = vadd.f32 %v2190, %v2382
        %v2384 = vpop.f32.mrf.mxu0
        %v2385 = vadd.f32 %v2192, %v2384
        %v2386 = vpop.f32.mrf.mxu0
        %v2387 = vadd.f32 %v2194, %v2386
        %2388 = vmatprep.mubr.bf16.mxu0 %v1700
        %2389 = vmatmul.mubr.bf16.gmra.mxu0 %v1699
        %v2390 = vpop.f32.mrf.mxu0
        %v2391 = vadd.f32 %v2198, %v2390
        %v2392 = vpop.f32.mrf.mxu0
        %v2393 = vadd.f32 %v2200, %v2392
        %v2394 = vpop.f32.mrf.mxu0
        %v2395 = vadd.f32 %v2202, %v2394
        %v2396 = vpop.f32.mrf.mxu0
        %v2397 = vadd.f32 %v2204, %v2396
        %2398 = vmatprep.mubr.bf16.mxu0 %v1704
        %2399 = vmatmul.mubr.bf16.gmra.mxu0 %v1703
        %v2400 = vpop.f32.mrf.mxu0
        %v2401 = vadd.f32 %v2208, %v2400
        %v2402 = vpop.f32.mrf.mxu0
        %v2403 = vadd.f32 %v2210, %v2402
        %v2404 = vpop.f32.mrf.mxu0
        %v2405 = vadd.f32 %v2212, %v2404
        %v2406 = vpop.f32.mrf.mxu0
        %v2407 = vadd.f32 %v2214, %v2406
        %2408 = vmatprep.mubr.bf16.mxu0 %v1708
        %2409 = vmatmul.mubr.bf16.gmra.mxu0 %v1707
        %v2410 = vpop.f32.mrf.mxu0
        %v2411 = vadd.f32 %v2218, %v2410
        %v2412 = vpop.f32.mrf.mxu0
        %v2413 = vadd.f32 %v2220, %v2412
        %v2414 = vpop.f32.mrf.mxu0
        %v2415 = vadd.f32 %v2222, %v2414
        %v2416 = vpop.f32.mrf.mxu0
        %v2417 = vadd.f32 %v2224, %v2416
        %2418 = vmatprep.mubr.bf16.mxu0 %v1712
        %2419 = vmatmul.mubr.bf16.gmra.mxu0 %v1711
        %v2420 = vpop.f32.mrf.mxu0
        %v2421 = vadd.f32 %v2228, %v2420
        %v2422 = vpop.f32.mrf.mxu0
        %v2423 = vadd.f32 %v2230, %v2422
        %v2424 = vpop.f32.mrf.mxu0
        %v2425 = vadd.f32 %v2232, %v2424
        %v2426 = vpop.f32.mrf.mxu0
        %v2427 = vadd.f32 %v2234, %v2426
        %2428 = vmatprep.mubr.bf16.mxu0 %v1716
        %2429 = vmatmul.mubr.bf16.gmra.mxu0 %v1715
        %v2430 = vpop.f32.mrf.mxu0
        %v2431 = vadd.f32 %v2238, %v2430
        %v2432 = vpop.f32.mrf.mxu0
        %v2433 = vadd.f32 %v2240, %v2432
        %v2434 = vpop.f32.mrf.mxu0
        %v2435 = vadd.f32 %v2242, %v2434
        %v2436 = vpop.f32.mrf.mxu0
        %v2437 = vadd.f32 %v2244, %v2436
        %2438 = vmatprep.mubr.bf16.mxu0 %v1720
        %2439 = vmatmul.mubr.bf16.gmra.mxu0 %v1719
        %v2440 = vpop.f32.mrf.mxu0
        %v2441 = vadd.f32 %v2248, %v2440
        %v2442 = vpop.f32.mrf.mxu0
        %v2443 = vadd.f32 %v2250, %v2442
        %v2444 = vpop.f32.mrf.mxu0
        %v2445 = vadd.f32 %v2252, %v2444
        %v2446 = vpop.f32.mrf.mxu0
        %v2447 = vadd.f32 %v2254, %v2446
        %2448 = vmatprep.mubr.bf16.mxu0 %v1724
        %2449 = vmatmul.mubr.bf16.gmra.mxu0 %v1723
        %v2450 = vpop.f32.mrf.mxu0
        %v2451 = vadd.f32 %v2258, %v2450
        %v2452 = vpop.f32.mrf.mxu0
        %v2453 = vadd.f32 %v2260, %v2452
        %v2454 = vpop.f32.mrf.mxu0
        %v2455 = vadd.f32 %v2262, %v2454
        %v2456 = vpop.f32.mrf.mxu0
        %v2457 = vadd.f32 %v2264, %v2456
        %2458 = vmatprep.mubr.bf16.mxu0 %v1728
        %2459 = vmatmul.mubr.bf16.gmra.mxu0 %v1727
        %v2460 = vpop.f32.mrf.mxu0
        %v2461 = vadd.f32 %v2268, %v2460
        %v2462 = vpop.f32.mrf.mxu0
        %v2463 = vadd.f32 %v2270, %v2462
        %v2464 = vpop.f32.mrf.mxu0
        %v2465 = vadd.f32 %v2272, %v2464
        %v2466 = vpop.f32.mrf.mxu0
        %v2467 = vadd.f32 %v2274, %v2466
        %2468 = vmatprep.mubr.bf16.mxu0 %v1732
        %2469 = vmatmul.mubr.bf16.gmra.mxu0 %v1731
        %v2470 = vpop.f32.mrf.mxu0
        %v2471 = vadd.f32 %v2278, %v2470
        %v2472 = vpop.f32.mrf.mxu0
        %v2473 = vadd.f32 %v2280, %v2472
        %v2474 = vpop.f32.mrf.mxu0
        %v2475 = vadd.f32 %v2282, %v2474
        %v2476 = vpop.f32.mrf.mxu0
        %v2477 = vadd.f32 %v2284, %v2476
        %2478 = vmatprep.mubr.bf16.mxu0 %v1736
        %2479 = vmatmul.mubr.bf16.gmra.mxu0 %v1735
        %v2480 = vpop.f32.mrf.mxu0
        %v2481 = vadd.f32 %v2288, %v2480
        %v2482 = vpop.f32.mrf.mxu0
        %v2483 = vadd.f32 %v2290, %v2482
        %v2484 = vpop.f32.mrf.mxu0
        %v2485 = vadd.f32 %v2292, %v2484
        %v2486 = vpop.f32.mrf.mxu0
        %v2487 = vadd.f32 %v2294, %v2486
        %2488 = vmatprep.mubr.bf16.mxu0 %v1740
        %2489 = vmatmul.mubr.bf16.gmra.mxu0 %v1739
        %v2490 = vpop.f32.mrf.mxu0
        %v2491 = vadd.f32 %v2298, %v2490
        %v2492 = vpop.f32.mrf.mxu0
        %v2493 = vadd.f32 %v2300, %v2492
        %v2494 = vpop.f32.mrf.mxu0
        %v2495 = vadd.f32 %v2302, %v2494
        %v2496 = vpop.f32.mrf.mxu0
        %v2497 = vadd.f32 %v2304, %v2496
        %2498 = vmatprep.mubr.bf16.mxu0 %v1744
        %2499 = vmatmul.mubr.bf16.gmra.mxu0 %v1743
        %v2500 = vpop.f32.mrf.mxu0
        %v2501 = vadd.f32 %v2308, %v2500
        %v2502 = vpop.f32.mrf.mxu0
        %v2503 = vadd.f32 %v2310, %v2502
        %v2504 = vpop.f32.mrf.mxu0
        %v2505 = vadd.f32 %v2312, %v2504
        %v2506 = vpop.f32.mrf.mxu0
        %v2507 = vadd.f32 %v2314, %v2506
        %2508 = vmatprep.mubr.bf16.mxu0 %v1748
        %2509 = vmatmul.mubr.bf16.gmra.mxu0 %v1747
        %v2510 = vpop.f32.mrf.mxu0
        %v2511 = vadd.f32 %v2318, %v2510
        %v2512 = vpop.f32.mrf.mxu0
        %v2513 = vadd.f32 %v2320, %v2512
        %v2514 = vpop.f32.mrf.mxu0
        %v2515 = vadd.f32 %v2322, %v2514
        %v2516 = vpop.f32.mrf.mxu0
        %v2517 = vadd.f32 %v2324, %v2516
        %2518 = vmatprep.mubr.bf16.mxu0 %v1752
        %2519 = vmatmul.mubr.bf16.gmra.mxu0 %v1751
        %v2520 = vpop.f32.mrf.mxu0
        %v2521 = vadd.f32 %v2328, %v2520
        %v2522 = vpop.f32.mrf.mxu0
        %v2523 = vadd.f32 %v2330, %v2522
        %v2524 = vpop.f32.mrf.mxu0
        %v2525 = vadd.f32 %v2332, %v2524
        %v2526 = vpop.f32.mrf.mxu0
        %v2527 = vadd.f32 %v2334, %v2526
        %2528 = vmatprep.mubr.bf16.mxu0 %v1756
        %2529 = vmatmul.mubr.bf16.gmra.mxu0 %v1755
        %v2530 = vpop.f32.mrf.mxu0
        %v2531 = vadd.f32 %v2338, %v2530
        %v2532 = vpop.f32.mrf.mxu0
        %v2533 = vadd.f32 %v2340, %v2532
        %v2534 = vpop.f32.mrf.mxu0
        %v2535 = vadd.f32 %v2342, %v2534
        %v2536 = vpop.f32.mrf.mxu0
        %v2537 = vadd.f32 %v2344, %v2536
        %2538 = vdwg.mxu0
        %v2539 = vmax.f32 %v2381, 0.0
        %v2540 = vmax.f32 %v2383, 0.0
        %v2541 = vmax.f32 %v2385, 0.0
        %v2542 = vmax.f32 %v2387, 0.0
        %v2543 = vmax.f32 %v2391, 0.0
        %v2544 = vmax.f32 %v2393, 0.0
        %v2545 = vmax.f32 %v2395, 0.0
        %v2546 = vmax.f32 %v2397, 0.0
        %v2547 = vmax.f32 %v2401, 0.0
        %v2548 = vmax.f32 %v2403, 0.0
        %v2549 = vmax.f32 %v2405, 0.0
        %v2550 = vmax.f32 %v2407, 0.0
        %v2551 = vmax.f32 %v2411, 0.0
        %v2552 = vmax.f32 %v2413, 0.0
        %v2553 = vmax.f32 %v2415, 0.0
        %v2554 = vmax.f32 %v2417, 0.0
        %v2555 = vmax.f32 %v2421, 0.0
        %v2556 = vmax.f32 %v2423, 0.0
        %v2557 = vmax.f32 %v2425, 0.0
        %v2558 = vmax.f32 %v2427, 0.0
        %v2559 = vmax.f32 %v2431, 0.0
        %v2560 = vmax.f32 %v2433, 0.0
        %v2561 = vmax.f32 %v2435, 0.0
        %v2562 = vmax.f32 %v2437, 0.0
        %v2563 = vmax.f32 %v2441, 0.0
        %v2564 = vmax.f32 %v2443, 0.0
        %v2565 = vmax.f32 %v2445, 0.0
        %v2566 = vmax.f32 %v2447, 0.0
        %v2567 = vmax.f32 %v2451, 0.0
        %v2568 = vmax.f32 %v2453, 0.0
        %v2569 = vmax.f32 %v2455, 0.0
        %v2570 = vmax.f32 %v2457, 0.0
        %v2571 = vmax.f32 %v2461, 0.0
        %v2572 = vmax.f32 %v2463, 0.0
        %v2573 = vmax.f32 %v2465, 0.0
        %v2574 = vmax.f32 %v2467, 0.0
        %v2575 = vmax.f32 %v2471, 0.0
        %v2576 = vmax.f32 %v2473, 0.0
        %v2577 = vmax.f32 %v2475, 0.0
        %v2578 = vmax.f32 %v2477, 0.0
        %v2579 = vmax.f32 %v2481, 0.0
        %v2580 = vmax.f32 %v2483, 0.0
        %v2581 = vmax.f32 %v2485, 0.0
        %v2582 = vmax.f32 %v2487, 0.0
        %v2583 = vmax.f32 %v2491, 0.0
        %v2584 = vmax.f32 %v2493, 0.0
        %v2585 = vmax.f32 %v2495, 0.0
        %v2586 = vmax.f32 %v2497, 0.0
        %v2587 = vmax.f32 %v2501, 0.0
        %v2588 = vmax.f32 %v2503, 0.0
        %v2589 = vmax.f32 %v2505, 0.0
        %v2590 = vmax.f32 %v2507, 0.0
        %v2591 = vmax.f32 %v2511, 0.0
        %v2592 = vmax.f32 %v2513, 0.0
        %v2593 = vmax.f32 %v2515, 0.0
        %v2594 = vmax.f32 %v2517, 0.0
        %v2595 = vmax.f32 %v2521, 0.0
        %v2596 = vmax.f32 %v2523, 0.0
        %v2597 = vmax.f32 %v2525, 0.0
        %v2598 = vmax.f32 %v2527, 0.0
        %v2599 = vmax.f32 %v2531, 0.0
        %v2600 = vmax.f32 %v2533, 0.0
        %v2601 = vmax.f32 %v2535, 0.0
        %v2602 = vmax.f32 %v2537, 0.0
        %v2603 = vpack.c.bf16 %v2541, %v2539
        %v2604 = vpack.c.bf16 %v2542, %v2540
        %v2605 = vpack.c.bf16 %v2545, %v2543
        %v2606 = vpack.c.bf16 %v2546, %v2544
        %v2607 = vpack.c.bf16 %v2549, %v2547
        %v2608 = vpack.c.bf16 %v2550, %v2548
        %v2609 = vpack.c.bf16 %v2553, %v2551
        %v2610 = vpack.c.bf16 %v2554, %v2552
        %v2611 = vpack.c.bf16 %v2557, %v2555
        %v2612 = vpack.c.bf16 %v2558, %v2556
        %v2613 = vpack.c.bf16 %v2561, %v2559
        %v2614 = vpack.c.bf16 %v2562, %v2560
        %v2615 = vpack.c.bf16 %v2565, %v2563
        %v2616 = vpack.c.bf16 %v2566, %v2564
        %v2617 = vpack.c.bf16 %v2569, %v2567
        %v2618 = vpack.c.bf16 %v2570, %v2568
        %v2619 = vpack.c.bf16 %v2573, %v2571
        %v2620 = vpack.c.bf16 %v2574, %v2572
        %v2621 = vpack.c.bf16 %v2577, %v2575
        %v2622 = vpack.c.bf16 %v2578, %v2576
        %v2623 = vpack.c.bf16 %v2581, %v2579
        %v2624 = vpack.c.bf16 %v2582, %v2580
        %v2625 = vpack.c.bf16 %v2585, %v2583
        %v2626 = vpack.c.bf16 %v2586, %v2584
        %v2627 = vpack.c.bf16 %v2589, %v2587
        %v2628 = vpack.c.bf16 %v2590, %v2588
        %v2629 = vpack.c.bf16 %v2593, %v2591
        %v2630 = vpack.c.bf16 %v2594, %v2592
        %v2631 = vpack.c.bf16 %v2597, %v2595
        %v2632 = vpack.c.bf16 %v2598, %v2596
        %v2633 = vpack.c.bf16 %v2601, %v2599
        %v2634 = vpack.c.bf16 %v2602, %v2600
        %v2635 = vld [vmem:[#allocation10] sm:$0xf]
        %v2636 = vld [vmem:[#allocation10 + $0x4] sm:$0xf]
        %v2637 = vld [vmem:[#allocation10 + $0x8] sm:$0xf]
        %v2638 = vld [vmem:[#allocation10 + $0xc] sm:$0xf]
        %v2639 = vld [vmem:[#allocation10 + $0x10] sm:$0xf]
        %v2640 = vld [vmem:[#allocation10 + $0x14] sm:$0xf]
        %v2641 = vld [vmem:[#allocation10 + $0x18] sm:$0xf]
        %v2642 = vld [vmem:[#allocation10 + $0x1c] sm:$0xf]
        %v2643 = vld [vmem:[#allocation10 + $0x20] sm:$0xf]
        %v2644 = vld [vmem:[#allocation10 + $0x24] sm:$0xf]
        %v2645 = vld [vmem:[#allocation10 + $0x28] sm:$0xf]
        %v2646 = vld [vmem:[#allocation10 + $0x2c] sm:$0xf]
        %v2647 = vld [vmem:[#allocation10 + $0x30] sm:$0xf]
        %v2648 = vld [vmem:[#allocation10 + $0x34] sm:$0xf]
        %v2649 = vld [vmem:[#allocation10 + $0x38] sm:$0xf]
        %v2650 = vld [vmem:[#allocation10 + $0x3c] sm:$0xf]
        %v2651 = vld [vmem:[#allocation10 + $0x40] sm:$0xf]
        %v2652 = vld [vmem:[#allocation10 + $0x44] sm:$0xf]
        %v2653 = vld [vmem:[#allocation10 + $0x48] sm:$0xf]
        %v2654 = vld [vmem:[#allocation10 + $0x4c] sm:$0xf]
        %v2655 = vld [vmem:[#allocation10 + $0x50] sm:$0xf]
        %v2656 = vld [vmem:[#allocation10 + $0x54] sm:$0xf]
        %v2657 = vld [vmem:[#allocation10 + $0x58] sm:$0xf]
        %v2658 = vld [vmem:[#allocation10 + $0x5c] sm:$0xf]
        %v2659 = vld [vmem:[#allocation10 + $0x60] sm:$0xf]
        %v2660 = vld [vmem:[#allocation10 + $0x64] sm:$0xf]
        %v2661 = vld [vmem:[#allocation10 + $0x68] sm:$0xf]
        %v2662 = vld [vmem:[#allocation10 + $0x6c] sm:$0xf]
        %v2663 = vld [vmem:[#allocation10 + $0x70] sm:$0xf]
        %v2664 = vld [vmem:[#allocation10 + $0x74] sm:$0xf]
        %v2665 = vld [vmem:[#allocation10 + $0x78] sm:$0xf]
        %v2666 = vld [vmem:[#allocation10 + $0x7c] sm:$0xf]
        %v2667 = vld [vmem:[%s8] sm:$0x1]
        %v2669 = vlaneseq
        %v2670 = vshrl.u32 %v2669, 7
        %v2671 = vsub.s32 0, %v2670
        %v2672 = vrot.slane %v2667, %v2671
        %v2706 = vunpack.c.l.b16 %v2635
        %v2707 = vunpack.c.l.b16 %v2636
        %v2708 = vunpack.c.l.b16 %v2637
        %v2709 = vunpack.c.l.b16 %v2638
        %v2710 = vunpack.c.l.b16 %v2639
        %v2711 = vunpack.c.l.b16 %v2640
        %v2712 = vunpack.c.l.b16 %v2641
        %v2713 = vunpack.c.l.b16 %v2642
        %v2714 = vunpack.c.l.b16 %v2643
        %v2715 = vunpack.c.l.b16 %v2644
        %v2716 = vunpack.c.l.b16 %v2645
        %v2717 = vunpack.c.l.b16 %v2646
        %v2718 = vunpack.c.l.b16 %v2647
        %v2719 = vunpack.c.l.b16 %v2648
        %v2720 = vunpack.c.l.b16 %v2649
        %v2721 = vunpack.c.l.b16 %v2650
        %v2722 = vunpack.c.l.b16 %v2651
        %v2723 = vunpack.c.l.b16 %v2652
        %v2724 = vunpack.c.l.b16 %v2653
        %v2725 = vunpack.c.l.b16 %v2654
        %v2726 = vunpack.c.l.b16 %v2655
        %v2727 = vunpack.c.l.b16 %v2656
        %v2728 = vunpack.c.l.b16 %v2657
        %v2729 = vunpack.c.l.b16 %v2658
        %v2730 = vunpack.c.l.b16 %v2659
        %v2731 = vunpack.c.l.b16 %v2660
        %v2732 = vunpack.c.l.b16 %v2661
        %v2733 = vunpack.c.l.b16 %v2662
        %v2734 = vunpack.c.l.b16 %v2663
        %v2735 = vunpack.c.l.b16 %v2664
        %v2736 = vunpack.c.l.b16 %v2665
        %v2737 = vunpack.c.l.b16 %v2666
        %v2738 = vpack.c.b16 %v2707, %v2706
        %v2739 = vpack.c.b16 %v2709, %v2708
        %v2740 = vpack.c.b16 %v2711, %v2710
        %v2741 = vpack.c.b16 %v2713, %v2712
        %v2742 = vpack.c.b16 %v2715, %v2714
        %v2743 = vpack.c.b16 %v2717, %v2716
        %v2744 = vpack.c.b16 %v2719, %v2718
        %v2745 = vpack.c.b16 %v2721, %v2720
        %v2746 = vpack.c.b16 %v2723, %v2722
        %v2747 = vpack.c.b16 %v2725, %v2724
        %v2748 = vpack.c.b16 %v2727, %v2726
        %v2749 = vpack.c.b16 %v2729, %v2728
        %v2750 = vpack.c.b16 %v2731, %v2730
        %v2751 = vpack.c.b16 %v2733, %v2732
        %v2752 = vpack.c.b16 %v2735, %v2734
        %v2753 = vpack.c.b16 %v2737, %v2736
        %2770 = vmatprep.subr.bf16.mxu0 0
        %2771 = vmatpush1.bf16.msra.mxu0 %v2745
        %2772 = vmatprep.subr.bf16.mxu0 0
        %2773 = vmatpush1.bf16.msra.mxu0 %v2744
        %2774 = vmatprep.subr.bf16.mxu0 0
        %2775 = vmatpush1.bf16.msra.mxu0 %v2743
        %2776 = vmatprep.subr.bf16.mxu0 0
        %2777 = vmatpush1.bf16.msra.mxu0 %v2742
        %2778 = vmatprep.subr.bf16.mxu0 0
        %2779 = vmatpush1.bf16.msra.mxu0 %v2741
        %2780 = vmatprep.subr.bf16.mxu0 0
        %2781 = vmatpush1.bf16.msra.mxu0 %v2740
        %2782 = vmatprep.subr.bf16.mxu0 0
        %2783 = vmatpush1.bf16.msra.mxu0 %v2739
        %2784 = vmatprep.subr.bf16.mxu0 0
        %2785 = vmatpush1.bf16.msra.mxu0 %v2738
        %2786 = vmatprep.subr.bf16.mxu0 0
        %2787 = vmatpush2.bf16.msra.mxu0 %v2753
        %2788 = vmatprep.subr.bf16.mxu0 0
        %2789 = vmatpush2.bf16.msra.mxu0 %v2752
        %2790 = vmatprep.subr.bf16.mxu0 0
        %2791 = vmatpush2.bf16.msra.mxu0 %v2751
        %2792 = vmatprep.subr.bf16.mxu0 0
        %2793 = vmatpush2.bf16.msra.mxu0 %v2750
        %2794 = vmatprep.subr.bf16.mxu0 0
        %2795 = vmatpush2.bf16.msra.mxu0 %v2749
        %2796 = vmatprep.subr.bf16.mxu0 0
        %2797 = vmatpush2.bf16.msra.mxu0 %v2748
        %2798 = vmatprep.subr.bf16.mxu0 0
        %2799 = vmatpush2.bf16.msra.mxu0 %v2747
        %2800 = vmatprep.subr.bf16.mxu0 0
        %2801 = vmatpush2.bf16.msra.mxu0 %v2746
        %2802 = vmatprep.mubr.bf16.mxu0 %v2604
        %2803 = vmatmul.mubr.bf16.gmra.mxu0 %v2603
        %v2804 = vpop.f32.mrf.mxu0
        %v2805 = vadd.f32 %v2672, %v2804
        %v2806 = vpop.f32.mrf.mxu0
        %v2807 = vpop.f32.mrf.mxu0
        %v2808 = vadd.f32 %v2672, %v2807
        %v2809 = vpop.f32.mrf.mxu0
        %2810 = vmatprep.mubr.bf16.mxu0 %v2606
        %2811 = vmatmul.mubr.bf16.gmra.mxu0 %v2605
        %v2812 = vpop.f32.mrf.mxu0
        %v2813 = vadd.f32 %v2672, %v2812
        %v2814 = vpop.f32.mrf.mxu0
        %v2815 = vpop.f32.mrf.mxu0
        %v2816 = vadd.f32 %v2672, %v2815
        %v2817 = vpop.f32.mrf.mxu0
        %2818 = vmatprep.mubr.bf16.mxu0 %v2608
        %2819 = vmatmul.mubr.bf16.gmra.mxu0 %v2607
        %v2820 = vpop.f32.mrf.mxu0
        %v2821 = vadd.f32 %v2672, %v2820
        %v2822 = vpop.f32.mrf.mxu0
        %v2823 = vpop.f32.mrf.mxu0
        %v2824 = vadd.f32 %v2672, %v2823
        %v2825 = vpop.f32.mrf.mxu0
        %2826 = vmatprep.mubr.bf16.mxu0 %v2610
        %2827 = vmatmul.mubr.bf16.gmra.mxu0 %v2609
        %v2828 = vpop.f32.mrf.mxu0
        %v2829 = vadd.f32 %v2672, %v2828
        %v2830 = vpop.f32.mrf.mxu0
        %v2831 = vpop.f32.mrf.mxu0
        %v2832 = vadd.f32 %v2672, %v2831
        %v2833 = vpop.f32.mrf.mxu0
        %2834 = vmatprep.mubr.bf16.mxu0 %v2612
        %2835 = vmatmul.mubr.bf16.gmra.mxu0 %v2611
        %v2836 = vpop.f32.mrf.mxu0
        %v2837 = vadd.f32 %v2672, %v2836
        %v2838 = vpop.f32.mrf.mxu0
        %v2839 = vpop.f32.mrf.mxu0
        %v2840 = vadd.f32 %v2672, %v2839
        %v2841 = vpop.f32.mrf.mxu0
        %2842 = vmatprep.mubr.bf16.mxu0 %v2614
        %2843 = vmatmul.mubr.bf16.gmra.mxu0 %v2613
        %v2844 = vpop.f32.mrf.mxu0
        %v2845 = vadd.f32 %v2672, %v2844
        %v2846 = vpop.f32.mrf.mxu0
        %v2847 = vpop.f32.mrf.mxu0
        %v2848 = vadd.f32 %v2672, %v2847
        %v2849 = vpop.f32.mrf.mxu0
        %2850 = vmatprep.mubr.bf16.mxu0 %v2616
        %2851 = vmatmul.mubr.bf16.gmra.mxu0 %v2615
        %v2852 = vpop.f32.mrf.mxu0
        %v2853 = vadd.f32 %v2672, %v2852
        %v2854 = vpop.f32.mrf.mxu0
        %v2855 = vpop.f32.mrf.mxu0
        %v2856 = vadd.f32 %v2672, %v2855
        %v2857 = vpop.f32.mrf.mxu0
        %2858 = vmatprep.mubr.bf16.mxu0 %v2618
        %2859 = vmatmul.mubr.bf16.gmra.mxu0 %v2617
        %v2860 = vpop.f32.mrf.mxu0
        %v2861 = vadd.f32 %v2672, %v2860
        %v2862 = vpop.f32.mrf.mxu0
        %v2863 = vpop.f32.mrf.mxu0
        %v2864 = vadd.f32 %v2672, %v2863
        %v2865 = vpop.f32.mrf.mxu0
        %2866 = vmatprep.mubr.bf16.mxu0 %v2620
        %2867 = vmatmul.mubr.bf16.gmra.mxu0 %v2619
        %v2868 = vpop.f32.mrf.mxu0
        %v2869 = vadd.f32 %v2672, %v2868
        %v2870 = vpop.f32.mrf.mxu0
        %v2871 = vpop.f32.mrf.mxu0
        %v2872 = vadd.f32 %v2672, %v2871
        %v2873 = vpop.f32.mrf.mxu0
        %2874 = vmatprep.mubr.bf16.mxu0 %v2622
        %2875 = vmatmul.mubr.bf16.gmra.mxu0 %v2621
        %v2876 = vpop.f32.mrf.mxu0
        %v2877 = vadd.f32 %v2672, %v2876
        %v2878 = vpop.f32.mrf.mxu0
        %v2879 = vpop.f32.mrf.mxu0
        %v2880 = vadd.f32 %v2672, %v2879
        %v2881 = vpop.f32.mrf.mxu0
        %2882 = vmatprep.mubr.bf16.mxu0 %v2624
        %2883 = vmatmul.mubr.bf16.gmra.mxu0 %v2623
        %v2884 = vpop.f32.mrf.mxu0
        %v2885 = vadd.f32 %v2672, %v2884
        %v2886 = vpop.f32.mrf.mxu0
        %v2887 = vpop.f32.mrf.mxu0
        %v2888 = vadd.f32 %v2672, %v2887
        %v2889 = vpop.f32.mrf.mxu0
        %2890 = vmatprep.mubr.bf16.mxu0 %v2626
        %2891 = vmatmul.mubr.bf16.gmra.mxu0 %v2625
        %v2892 = vpop.f32.mrf.mxu0
        %v2893 = vadd.f32 %v2672, %v2892
        %v2894 = vpop.f32.mrf.mxu0
        %v2895 = vpop.f32.mrf.mxu0
        %v2896 = vadd.f32 %v2672, %v2895
        %v2897 = vpop.f32.mrf.mxu0
        %2898 = vmatprep.mubr.bf16.mxu0 %v2628
        %2899 = vmatmul.mubr.bf16.gmra.mxu0 %v2627
        %v2900 = vpop.f32.mrf.mxu0
        %v2901 = vadd.f32 %v2672, %v2900
        %v2902 = vpop.f32.mrf.mxu0
        %v2903 = vpop.f32.mrf.mxu0
        %v2904 = vadd.f32 %v2672, %v2903
        %v2905 = vpop.f32.mrf.mxu0
        %2906 = vmatprep.mubr.bf16.mxu0 %v2630
        %2907 = vmatmul.mubr.bf16.gmra.mxu0 %v2629
        %v2908 = vpop.f32.mrf.mxu0
        %v2909 = vadd.f32 %v2672, %v2908
        %v2910 = vpop.f32.mrf.mxu0
        %v2911 = vpop.f32.mrf.mxu0
        %v2912 = vadd.f32 %v2672, %v2911
        %v2913 = vpop.f32.mrf.mxu0
        %2914 = vmatprep.mubr.bf16.mxu0 %v2632
        %2915 = vmatmul.mubr.bf16.gmra.mxu0 %v2631
        %v2916 = vpop.f32.mrf.mxu0
        %v2917 = vadd.f32 %v2672, %v2916
        %v2918 = vpop.f32.mrf.mxu0
        %v2919 = vpop.f32.mrf.mxu0
        %v2920 = vadd.f32 %v2672, %v2919
        %v2921 = vpop.f32.mrf.mxu0
        %2922 = vmatprep.mubr.bf16.mxu0 %v2634
        %2923 = vmatmul.mubr.bf16.gmra.mxu0 %v2633
        %v2924 = vpop.f32.mrf.mxu0
        %v2925 = vadd.f32 %v2672, %v2924
        %v2926 = vpop.f32.mrf.mxu0
        %v2927 = vpop.f32.mrf.mxu0
        %v2928 = vadd.f32 %v2672, %v2927
        %v2929 = vpop.f32.mrf.mxu0
        %2930 = vdwg.mxu0
        %v2931 = vmax.f32 %v2805, 0.0
        %v2932 = vmax.f32 %v2808, 0.0
        %v2933 = vmax.f32 %v2813, 0.0
        %v2934 = vmax.f32 %v2816, 0.0
        %v2935 = vmax.f32 %v2821, 0.0
        %v2936 = vmax.f32 %v2824, 0.0
        %v2937 = vmax.f32 %v2829, 0.0
        %v2938 = vmax.f32 %v2832, 0.0
        %v2939 = vmax.f32 %v2837, 0.0
        %v2940 = vmax.f32 %v2840, 0.0
        %v2941 = vmax.f32 %v2845, 0.0
        %v2942 = vmax.f32 %v2848, 0.0
        %v2943 = vmax.f32 %v2853, 0.0
        %v2944 = vmax.f32 %v2856, 0.0
        %v2945 = vmax.f32 %v2861, 0.0
        %v2946 = vmax.f32 %v2864, 0.0
        %v2947 = vmax.f32 %v2869, 0.0
        %v2948 = vmax.f32 %v2872, 0.0
        %v2949 = vmax.f32 %v2877, 0.0
        %v2950 = vmax.f32 %v2880, 0.0
        %v2951 = vmax.f32 %v2885, 0.0
        %v2952 = vmax.f32 %v2888, 0.0
        %v2953 = vmax.f32 %v2893, 0.0
        %v2954 = vmax.f32 %v2896, 0.0
        %v2955 = vmax.f32 %v2901, 0.0
        %v2956 = vmax.f32 %v2904, 0.0
        %v2957 = vmax.f32 %v2909, 0.0
        %v2958 = vmax.f32 %v2912, 0.0
        %v2959 = vmax.f32 %v2917, 0.0
        %v2960 = vmax.f32 %v2920, 0.0
        %v2961 = vmax.f32 %v2925, 0.0
        %v2962 = vmax.f32 %v2928, 0.0
        %v2963 = vpack.c.bf16 %v2932, %v2931
        %v2964 = vpack.c.bf16 %v2934, %v2933
        %v2965 = vpack.c.bf16 %v2936, %v2935
        %v2966 = vpack.c.bf16 %v2938, %v2937
        %v2967 = vpack.c.bf16 %v2940, %v2939
        %v2968 = vpack.c.bf16 %v2942, %v2941
        %v2969 = vpack.c.bf16 %v2944, %v2943
        %v2970 = vpack.c.bf16 %v2946, %v2945
        %v2971 = vpack.c.bf16 %v2948, %v2947
        %v2972 = vpack.c.bf16 %v2950, %v2949
        %v2973 = vpack.c.bf16 %v2952, %v2951
        %v2974 = vpack.c.bf16 %v2954, %v2953
        %v2975 = vpack.c.bf16 %v2956, %v2955
        %v2976 = vpack.c.bf16 %v2958, %v2957
        %v2977 = vpack.c.bf16 %v2960, %v2959
        %v2978 = vpack.c.bf16 %v2962, %v2961
        %v2979 = vld [vmem:[%s9] sm:$0xf]
        %v2980 = vld [vmem:[%s9 + $0x4] sm:$0xf]
        %v2981 = vld [vmem:[%s9 + $0x8] sm:$0xf]
        %v2982 = vld [vmem:[%s9 + $0xc] sm:$0xf]
        %v2983 = vld [vmem:[%s9 + $0x10] sm:$0xf]
        %v2984 = vld [vmem:[%s9 + $0x14] sm:$0xf]
        %v2985 = vld [vmem:[%s9 + $0x18] sm:$0xf]
        %v2986 = vld [vmem:[%s9 + $0x1c] sm:$0xf]
        %v2987 = vld [vmem:[%s9 + $0x20] sm:$0xf]
        %v2988 = vld [vmem:[%s9 + $0x24] sm:$0xf]
        %v2989 = vld [vmem:[%s9 + $0x28] sm:$0xf]
        %v2990 = vld [vmem:[%s9 + $0x2c] sm:$0xf]
        %v2991 = vld [vmem:[%s9 + $0x30] sm:$0xf]
        %v2992 = vld [vmem:[%s9 + $0x34] sm:$0xf]
        %v2993 = vld [vmem:[%s9 + $0x38] sm:$0xf]
        %v2994 = vld [vmem:[%s9 + $0x3c] sm:$0xf]
        %v2995 = vld [vmem:[%s10] sm:$0x1]
        %v2997 = vlaneseq
        %v2998 = vshrl.u32 %v2997, 7
        %v2999 = vsub.s32 0, %v2998
        %v3000 = vrot.slane %v2995, %v2999
        %v3018 = vunpack.c.l.b16 %v2979
        %v3019 = vunpack.c.l.b16 %v2980
        %v3020 = vunpack.c.l.b16 %v2981
        %v3021 = vunpack.c.l.b16 %v2982
        %v3022 = vunpack.c.l.b16 %v2983
        %v3023 = vunpack.c.l.b16 %v2984
        %v3024 = vunpack.c.l.b16 %v2985
        %v3025 = vunpack.c.l.b16 %v2986
        %v3026 = vunpack.c.l.b16 %v2987
        %v3027 = vunpack.c.l.b16 %v2988
        %v3028 = vunpack.c.l.b16 %v2989
        %v3029 = vunpack.c.l.b16 %v2990
        %v3030 = vunpack.c.l.b16 %v2991
        %v3031 = vunpack.c.l.b16 %v2992
        %v3032 = vunpack.c.l.b16 %v2993
        %v3033 = vunpack.c.l.b16 %v2994
        %v3034 = vpack.c.b16 %v3019, %v3018
        %v3035 = vpack.c.b16 %v3021, %v3020
        %v3036 = vpack.c.b16 %v3023, %v3022
        %v3037 = vpack.c.b16 %v3025, %v3024
        %v3038 = vpack.c.b16 %v3027, %v3026
        %v3039 = vpack.c.b16 %v3029, %v3028
        %v3040 = vpack.c.b16 %v3031, %v3030
        %v3041 = vpack.c.b16 %v3033, %v3032
        %3050 = vmatprep.subr.bf16.mxu0 0
        %3051 = vmatpush1.bf16.msra.mxu0 %v3041
        %3052 = vmatprep.subr.bf16.mxu0 0
        %3053 = vmatpush1.bf16.msra.mxu0 %v3040
        %3054 = vmatprep.subr.bf16.mxu0 0
        %3055 = vmatpush1.bf16.msra.mxu0 %v3039
        %3056 = vmatprep.subr.bf16.mxu0 0
        %3057 = vmatpush1.bf16.msra.mxu0 %v3038
        %3058 = vmatprep.subr.bf16.mxu0 0
        %3059 = vmatpush1.bf16.msra.mxu0 %v3037
        %3060 = vmatprep.subr.bf16.mxu0 0
        %3061 = vmatpush1.bf16.msra.mxu0 %v3036
        %3062 = vmatprep.subr.bf16.mxu0 0
        %3063 = vmatpush1.bf16.msra.mxu0 %v3035
        %3064 = vmatprep.subr.bf16.mxu0 0
        %3065 = vmatpush1.bf16.msra.mxu0 %v3034
        %3066 = vmatprep.subr.bf16.mxu0 0
        %3067 = vmatpush2.bf16.msra.mxu0 0
        %3068 = vmatprep.subr.bf16.mxu0 0
        %3069 = vmatpush2.bf16.msra.mxu0 0
        %3070 = vmatprep.subr.bf16.mxu0 0
        %3071 = vmatpush2.bf16.msra.mxu0 0
        %3072 = vmatprep.subr.bf16.mxu0 0
        %3073 = vmatpush2.bf16.msra.mxu0 0
        %3074 = vmatprep.subr.bf16.mxu0 0
        %3075 = vmatpush2.bf16.msra.mxu0 0
        %3076 = vmatprep.subr.bf16.mxu0 0
        %3077 = vmatpush2.bf16.msra.mxu0 0
        %3078 = vmatprep.subr.bf16.mxu0 0
        %3079 = vmatpush2.bf16.msra.mxu0 0
        %3080 = vmatprep.subr.bf16.mxu0 0
        %3081 = vmatpush2.bf16.msra.mxu0 0
        %3082 = vmatprep.mubr.bf16.mxu0 0
        %3083 = vmatmul.mubr.bf16.gmra.mxu0 %v2963
        %v3084 = vpop.f32.mrf.mxu0
        %v3085 = vadd.f32 %v3000, %v3084
        %v3086 = vpop.f32.mrf.mxu0
        %v3087 = vpop.f32.mrf.mxu0
        %v3088 = vadd.f32 %v3000, %v3087
        %v3089 = vpop.f32.mrf.mxu0
        %3090 = vmatprep.mubr.bf16.mxu0 0
        %3091 = vmatmul.mubr.bf16.gmra.mxu0 %v2964
        %v3092 = vpop.f32.mrf.mxu0
        %v3093 = vadd.f32 %v3000, %v3092
        %v3094 = vpop.f32.mrf.mxu0
        %v3095 = vpop.f32.mrf.mxu0
        %v3096 = vadd.f32 %v3000, %v3095
        %v3097 = vpop.f32.mrf.mxu0
        %3098 = vmatprep.mubr.bf16.mxu0 0
        %3099 = vmatmul.mubr.bf16.gmra.mxu0 %v2965
        %v3100 = vpop.f32.mrf.mxu0
        %v3101 = vadd.f32 %v3000, %v3100
        %v3102 = vpop.f32.mrf.mxu0
        %v3103 = vpop.f32.mrf.mxu0
        %v3104 = vadd.f32 %v3000, %v3103
        %v3105 = vpop.f32.mrf.mxu0
        %3106 = vmatprep.mubr.bf16.mxu0 0
        %3107 = vmatmul.mubr.bf16.gmra.mxu0 %v2966
        %v3108 = vpop.f32.mrf.mxu0
        %v3109 = vadd.f32 %v3000, %v3108
        %v3110 = vpop.f32.mrf.mxu0
        %v3111 = vpop.f32.mrf.mxu0
        %v3112 = vadd.f32 %v3000, %v3111
        %v3113 = vpop.f32.mrf.mxu0
        %3114 = vmatprep.mubr.bf16.mxu0 0
        %3115 = vmatmul.mubr.bf16.gmra.mxu0 %v2967
        %v3116 = vpop.f32.mrf.mxu0
        %v3117 = vadd.f32 %v3000, %v3116
        %v3118 = vpop.f32.mrf.mxu0
        %v3119 = vpop.f32.mrf.mxu0
        %v3120 = vadd.f32 %v3000, %v3119
        %v3121 = vpop.f32.mrf.mxu0
        %3122 = vmatprep.mubr.bf16.mxu0 0
        %3123 = vmatmul.mubr.bf16.gmra.mxu0 %v2968
        %v3124 = vpop.f32.mrf.mxu0
        %v3125 = vadd.f32 %v3000, %v3124
        %v3126 = vpop.f32.mrf.mxu0
        %v3127 = vpop.f32.mrf.mxu0
        %v3128 = vadd.f32 %v3000, %v3127
        %v3129 = vpop.f32.mrf.mxu0
        %3130 = vmatprep.mubr.bf16.mxu0 0
        %3131 = vmatmul.mubr.bf16.gmra.mxu0 %v2969
        %v3132 = vpop.f32.mrf.mxu0
        %v3133 = vadd.f32 %v3000, %v3132
        %v3134 = vpop.f32.mrf.mxu0
        %v3135 = vpop.f32.mrf.mxu0
        %v3136 = vadd.f32 %v3000, %v3135
        %v3137 = vpop.f32.mrf.mxu0
        %3138 = vmatprep.mubr.bf16.mxu0 0
        %3139 = vmatmul.mubr.bf16.gmra.mxu0 %v2970
        %v3140 = vpop.f32.mrf.mxu0
        %v3141 = vadd.f32 %v3000, %v3140
        %v3142 = vpop.f32.mrf.mxu0
        %v3143 = vpop.f32.mrf.mxu0
        %v3144 = vadd.f32 %v3000, %v3143
        %v3145 = vpop.f32.mrf.mxu0
        %3146 = vmatprep.mubr.bf16.mxu0 0
        %3147 = vmatmul.mubr.bf16.gmra.mxu0 %v2971
        %v3148 = vpop.f32.mrf.mxu0
        %v3149 = vadd.f32 %v3000, %v3148
        %v3150 = vpop.f32.mrf.mxu0
        %v3151 = vpop.f32.mrf.mxu0
        %v3152 = vadd.f32 %v3000, %v3151
        %v3153 = vpop.f32.mrf.mxu0
        %3154 = vmatprep.mubr.bf16.mxu0 0
        %3155 = vmatmul.mubr.bf16.gmra.mxu0 %v2972
        %v3156 = vpop.f32.mrf.mxu0
        %v3157 = vadd.f32 %v3000, %v3156
        %v3158 = vpop.f32.mrf.mxu0
        %v3159 = vpop.f32.mrf.mxu0
        %v3160 = vadd.f32 %v3000, %v3159
        %v3161 = vpop.f32.mrf.mxu0
        %3162 = vmatprep.mubr.bf16.mxu0 0
        %3163 = vmatmul.mubr.bf16.gmra.mxu0 %v2973
        %v3164 = vpop.f32.mrf.mxu0
        %v3165 = vadd.f32 %v3000, %v3164
        %v3166 = vpop.f32.mrf.mxu0
        %v3167 = vpop.f32.mrf.mxu0
        %v3168 = vadd.f32 %v3000, %v3167
        %v3169 = vpop.f32.mrf.mxu0
        %3170 = vmatprep.mubr.bf16.mxu0 0
        %3171 = vmatmul.mubr.bf16.gmra.mxu0 %v2974
        %v3172 = vpop.f32.mrf.mxu0
        %v3173 = vadd.f32 %v3000, %v3172
        %v3174 = vpop.f32.mrf.mxu0
        %v3175 = vpop.f32.mrf.mxu0
        %v3176 = vadd.f32 %v3000, %v3175
        %v3177 = vpop.f32.mrf.mxu0
        %3178 = vmatprep.mubr.bf16.mxu0 0
        %3179 = vmatmul.mubr.bf16.gmra.mxu0 %v2975
        %v3180 = vpop.f32.mrf.mxu0
        %v3181 = vadd.f32 %v3000, %v3180
        %v3182 = vpop.f32.mrf.mxu0
        %v3183 = vpop.f32.mrf.mxu0
        %v3184 = vadd.f32 %v3000, %v3183
        %v3185 = vpop.f32.mrf.mxu0
        %3186 = vmatprep.mubr.bf16.mxu0 0
        %3187 = vmatmul.mubr.bf16.gmra.mxu0 %v2976
        %v3188 = vpop.f32.mrf.mxu0
        %v3189 = vadd.f32 %v3000, %v3188
        %v3190 = vpop.f32.mrf.mxu0
        %v3191 = vpop.f32.mrf.mxu0
        %v3192 = vadd.f32 %v3000, %v3191
        %v3193 = vpop.f32.mrf.mxu0
        %3194 = vmatprep.mubr.bf16.mxu0 0
        %3195 = vmatmul.mubr.bf16.gmra.mxu0 %v2977
        %v3196 = vpop.f32.mrf.mxu0
        %v3197 = vadd.f32 %v3000, %v3196
        %v3198 = vpop.f32.mrf.mxu0
        %v3199 = vpop.f32.mrf.mxu0
        %v3200 = vadd.f32 %v3000, %v3199
        %v3201 = vpop.f32.mrf.mxu0
        %3202 = vmatprep.mubr.bf16.mxu0 0
        %3203 = vmatmul.mubr.bf16.gmra.mxu0 %v2978
        %v3204 = vpop.f32.mrf.mxu0
        %v3205 = vadd.f32 %v3000, %v3204
        %v3206 = vpop.f32.mrf.mxu0
        %v3207 = vpop.f32.mrf.mxu0
        %v3208 = vadd.f32 %v3000, %v3207
        %v3209 = vpop.f32.mrf.mxu0
        %3210 = vdwg.mxu0
        %v3211 = vmax.f32 %v3085, 0.0
        %v3212 = vmax.f32 %v3088, 0.0
        %v3213 = vmax.f32 %v3093, 0.0
        %v3214 = vmax.f32 %v3096, 0.0
        %v3215 = vmax.f32 %v3101, 0.0
        %v3216 = vmax.f32 %v3104, 0.0
        %v3217 = vmax.f32 %v3109, 0.0
        %v3218 = vmax.f32 %v3112, 0.0
        %v3219 = vmax.f32 %v3117, 0.0
        %v3220 = vmax.f32 %v3120, 0.0
        %v3221 = vmax.f32 %v3125, 0.0
        %v3222 = vmax.f32 %v3128, 0.0
        %v3223 = vmax.f32 %v3133, 0.0
        %v3224 = vmax.f32 %v3136, 0.0
        %v3225 = vmax.f32 %v3141, 0.0
        %v3226 = vmax.f32 %v3144, 0.0
        %v3227 = vmax.f32 %v3149, 0.0
        %v3228 = vmax.f32 %v3152, 0.0
        %v3229 = vmax.f32 %v3157, 0.0
        %v3230 = vmax.f32 %v3160, 0.0
        %v3231 = vmax.f32 %v3165, 0.0
        %v3232 = vmax.f32 %v3168, 0.0
        %v3233 = vmax.f32 %v3173, 0.0
        %v3234 = vmax.f32 %v3176, 0.0
        %v3235 = vmax.f32 %v3181, 0.0
        %v3236 = vmax.f32 %v3184, 0.0
        %v3237 = vmax.f32 %v3189, 0.0
        %v3238 = vmax.f32 %v3192, 0.0
        %v3239 = vmax.f32 %v3197, 0.0
        %v3240 = vmax.f32 %v3200, 0.0
        %v3241 = vmax.f32 %v3205, 0.0
        %v3242 = vmax.f32 %v3208, 0.0
        %v3243 = vld [vmem:[%s11] sm:$0x1]
        %v3245 = vlaneseq
        %v3246 = vshrl.u32 %v3245, 7
        %v3247 = vsub.s32 0, %v3246
        %v3248 = vrot.slane %v3243, %v3247
        %v3250 = vmul.f32 %v3211, %v3248
        %v3251 = vmul.f32 %v3212, %v3248
        %v3252 = vmul.f32 %v3213, %v3248
        %v3253 = vmul.f32 %v3214, %v3248
        %v3254 = vmul.f32 %v3215, %v3248
        %v3255 = vmul.f32 %v3216, %v3248
        %v3256 = vmul.f32 %v3217, %v3248
        %v3257 = vmul.f32 %v3218, %v3248
        %v3258 = vmul.f32 %v3219, %v3248
        %v3259 = vmul.f32 %v3220, %v3248
        %v3260 = vmul.f32 %v3221, %v3248
        %v3261 = vmul.f32 %v3222, %v3248
        %v3262 = vmul.f32 %v3223, %v3248
        %v3263 = vmul.f32 %v3224, %v3248
        %v3264 = vmul.f32 %v3225, %v3248
        %v3265 = vmul.f32 %v3226, %v3248
        %v3266 = vmul.f32 %v3227, %v3248
        %v3267 = vmul.f32 %v3228, %v3248
        %v3268 = vmul.f32 %v3229, %v3248
        %v3269 = vmul.f32 %v3230, %v3248
        %v3270 = vmul.f32 %v3231, %v3248
        %v3271 = vmul.f32 %v3232, %v3248
        %v3272 = vmul.f32 %v3233, %v3248
        %v3273 = vmul.f32 %v3234, %v3248
        %v3274 = vmul.f32 %v3235, %v3248
        %v3275 = vmul.f32 %v3236, %v3248
        %v3276 = vmul.f32 %v3237, %v3248
        %v3277 = vmul.f32 %v3238, %v3248
        %v3278 = vmul.f32 %v3239, %v3248
        %v3279 = vmul.f32 %v3240, %v3248
        %v3280 = vmul.f32 %v3241, %v3248
        %v3281 = vmul.f32 %v3242, %v3248
        %vm3282 = vcmask 523264
        %v3283 = vsel %vm3282, %v3250, 0.0
        %3284 = vadd.xlane.f32.xlu0 %v3283
        %v3285 = vpop.xlane.xlu0 %3284
        %v3286 = vsel %vm3282, %v3251, 0.0
        %3287 = vadd.xlane.f32.xlu0 %v3286
        %v3288 = vpop.xlane.xlu0 %3287
        %v3289 = vsel %vm3282, %v3252, 0.0
        %3290 = vadd.xlane.f32.xlu0 %v3289
        %v3291 = vpop.xlane.xlu0 %3290
        %v3292 = vsel %vm3282, %v3253, 0.0
        %3293 = vadd.xlane.f32.xlu0 %v3292
        %v3294 = vpop.xlane.xlu0 %3293
        %v3295 = vsel %vm3282, %v3254, 0.0
        %3296 = vadd.xlane.f32.xlu0 %v3295
        %v3297 = vpop.xlane.xlu0 %3296
        %v3298 = vsel %vm3282, %v3255, 0.0
        %3299 = vadd.xlane.f32.xlu0 %v3298
        %v3300 = vpop.xlane.xlu0 %3299
        %v3301 = vsel %vm3282, %v3256, 0.0
        %3302 = vadd.xlane.f32.xlu0 %v3301
        %v3303 = vpop.xlane.xlu0 %3302
        %v3304 = vsel %vm3282, %v3257, 0.0
        %3305 = vadd.xlane.f32.xlu0 %v3304
        %v3306 = vpop.xlane.xlu0 %3305
        %v3307 = vsel %vm3282, %v3258, 0.0
        %3308 = vadd.xlane.f32.xlu0 %v3307
        %v3309 = vpop.xlane.xlu0 %3308
        %v3310 = vsel %vm3282, %v3259, 0.0
        %3311 = vadd.xlane.f32.xlu0 %v3310
        %v3312 = vpop.xlane.xlu0 %3311
        %v3313 = vsel %vm3282, %v3260, 0.0
        %3314 = vadd.xlane.f32.xlu0 %v3313
        %v3315 = vpop.xlane.xlu0 %3314
        %v3316 = vsel %vm3282, %v3261, 0.0
        %3317 = vadd.xlane.f32.xlu0 %v3316
        %v3318 = vpop.xlane.xlu0 %3317
        %v3319 = vsel %vm3282, %v3262, 0.0
        %3320 = vadd.xlane.f32.xlu0 %v3319
        %v3321 = vpop.xlane.xlu0 %3320
        %v3322 = vsel %vm3282, %v3263, 0.0
        %3323 = vadd.xlane.f32.xlu0 %v3322
        %v3324 = vpop.xlane.xlu0 %3323
        %v3325 = vsel %vm3282, %v3264, 0.0
        %3326 = vadd.xlane.f32.xlu0 %v3325
        %v3327 = vpop.xlane.xlu0 %3326
        %v3328 = vsel %vm3282, %v3265, 0.0
        %3329 = vadd.xlane.f32.xlu0 %v3328
        %v3330 = vpop.xlane.xlu0 %3329
        %v3331 = vsel %vm3282, %v3266, 0.0
        %3332 = vadd.xlane.f32.xlu0 %v3331
        %v3333 = vpop.xlane.xlu0 %3332
        %v3334 = vsel %vm3282, %v3267, 0.0
        %3335 = vadd.xlane.f32.xlu0 %v3334
        %v3336 = vpop.xlane.xlu0 %3335
        %v3337 = vsel %vm3282, %v3268, 0.0
        %3338 = vadd.xlane.f32.xlu0 %v3337
        %v3339 = vpop.xlane.xlu0 %3338
        %v3340 = vsel %vm3282, %v3269, 0.0
        %3341 = vadd.xlane.f32.xlu0 %v3340
        %v3342 = vpop.xlane.xlu0 %3341
        %v3343 = vsel %vm3282, %v3270, 0.0
        %3344 = vadd.xlane.f32.xlu0 %v3343
        %v3345 = vpop.xlane.xlu0 %3344
        %v3346 = vsel %vm3282, %v3271, 0.0
        %3347 = vadd.xlane.f32.xlu0 %v3346
        %v3348 = vpop.xlane.xlu0 %3347
        %v3349 = vsel %vm3282, %v3272, 0.0
        %3350 = vadd.xlane.f32.xlu0 %v3349
        %v3351 = vpop.xlane.xlu0 %3350
        %v3352 = vsel %vm3282, %v3273, 0.0
        %3353 = vadd.xlane.f32.xlu0 %v3352
        %v3354 = vpop.xlane.xlu0 %3353
        %v3355 = vsel %vm3282, %v3274, 0.0
        %3356 = vadd.xlane.f32.xlu0 %v3355
        %v3357 = vpop.xlane.xlu0 %3356
        %v3358 = vsel %vm3282, %v3275, 0.0
        %3359 = vadd.xlane.f32.xlu0 %v3358
        %v3360 = vpop.xlane.xlu0 %3359
        %v3361 = vsel %vm3282, %v3276, 0.0
        %3362 = vadd.xlane.f32.xlu0 %v3361
        %v3363 = vpop.xlane.xlu0 %3362
        %v3364 = vsel %vm3282, %v3277, 0.0
        %3365 = vadd.xlane.f32.xlu0 %v3364
        %v3366 = vpop.xlane.xlu0 %3365
        %v3367 = vsel %vm3282, %v3278, 0.0
        %3368 = vadd.xlane.f32.xlu0 %v3367
        %v3369 = vpop.xlane.xlu0 %3368
        %v3370 = vsel %vm3282, %v3279, 0.0
        %3371 = vadd.xlane.f32.xlu0 %v3370
        %v3372 = vpop.xlane.xlu0 %3371
        %v3373 = vsel %vm3282, %v3280, 0.0
        %3374 = vadd.xlane.f32.xlu0 %v3373
        %v3375 = vpop.xlane.xlu0 %3374
        %v3376 = vsel %vm3282, %v3281, 0.0
        %3377 = vadd.xlane.f32.xlu0 %v3376
        %v3378 = vpop.xlane.xlu0 %3377
        %v3379 = vld [vmem:[#allocation2] sm:$0x1]
        %v3381 = vlaneseq
        %v3382 = vshrl.u32 %v3381, 7
        %v3383 = vsub.s32 0, %v3382
        %v3384 = vrot.slane %v3379, %v3383
        %v3386 = vadd.f32 %v3285, %v3384
        %v3387 = vadd.f32 %v3288, %v3384
        %v3388 = vadd.f32 %v3291, %v3384
        %v3389 = vadd.f32 %v3294, %v3384
        %v3390 = vadd.f32 %v3297, %v3384
        %v3391 = vadd.f32 %v3300, %v3384
        %v3392 = vadd.f32 %v3303, %v3384
        %v3393 = vadd.f32 %v3306, %v3384
        %v3394 = vadd.f32 %v3309, %v3384
        %v3395 = vadd.f32 %v3312, %v3384
        %v3396 = vadd.f32 %v3315, %v3384
        %v3397 = vadd.f32 %v3318, %v3384
        %v3398 = vadd.f32 %v3321, %v3384
        %v3399 = vadd.f32 %v3324, %v3384
        %v3400 = vadd.f32 %v3327, %v3384
        %v3401 = vadd.f32 %v3330, %v3384
        %v3402 = vadd.f32 %v3333, %v3384
        %v3403 = vadd.f32 %v3336, %v3384
        %v3404 = vadd.f32 %v3339, %v3384
        %v3405 = vadd.f32 %v3342, %v3384
        %v3406 = vadd.f32 %v3345, %v3384
        %v3407 = vadd.f32 %v3348, %v3384
        %v3408 = vadd.f32 %v3351, %v3384
        %v3409 = vadd.f32 %v3354, %v3384
        %v3410 = vadd.f32 %v3357, %v3384
        %v3411 = vadd.f32 %v3360, %v3384
        %v3412 = vadd.f32 %v3363, %v3384
        %v3413 = vadd.f32 %v3366, %v3384
        %v3414 = vadd.f32 %v3369, %v3384
        %v3415 = vadd.f32 %v3372, %v3384
        %v3416 = vadd.f32 %v3375, %v3384
        %v3417 = vadd.f32 %v3378, %v3384
        %v3418 = vsub.f32 0.0, %v3386
        %v3419 = vsub.f32 0.0, %v3387
        %v3420 = vsub.f32 0.0, %v3388
        %v3421 = vsub.f32 0.0, %v3389
        %v3422 = vsub.f32 0.0, %v3390
        %v3423 = vsub.f32 0.0, %v3391
        %v3424 = vsub.f32 0.0, %v3392
        %v3425 = vsub.f32 0.0, %v3393
        %v3426 = vsub.f32 0.0, %v3394
        %v3427 = vsub.f32 0.0, %v3395
        %v3428 = vsub.f32 0.0, %v3396
        %v3429 = vsub.f32 0.0, %v3397
        %v3430 = vsub.f32 0.0, %v3398
        %v3431 = vsub.f32 0.0, %v3399
        %v3432 = vsub.f32 0.0, %v3400
        %v3433 = vsub.f32 0.0, %v3401
        %v3434 = vsub.f32 0.0, %v3402
        %v3435 = vsub.f32 0.0, %v3403
        %v3436 = vsub.f32 0.0, %v3404
        %v3437 = vsub.f32 0.0, %v3405
        %v3438 = vsub.f32 0.0, %v3406
        %v3439 = vsub.f32 0.0, %v3407
        %v3440 = vsub.f32 0.0, %v3408
        %v3441 = vsub.f32 0.0, %v3409
        %v3442 = vsub.f32 0.0, %v3410
        %v3443 = vsub.f32 0.0, %v3411
        %v3444 = vsub.f32 0.0, %v3412
        %v3445 = vsub.f32 0.0, %v3413
        %v3446 = vsub.f32 0.0, %v3414
        %v3447 = vsub.f32 0.0, %v3415
        %v3448 = vsub.f32 0.0, %v3416
        %v3449 = vsub.f32 0.0, %v3417
        %v3450 = vmul.f32 %v3418, 1.442695
        %v3451 = vpow.pop %v3450
        %v3452 = vmul.f32 %v3419, 1.442695
        %v3453 = vpow.pop %v3452
        %v3454 = vmul.f32 %v3420, 1.442695
        %v3455 = vpow.pop %v3454
        %v3456 = vmul.f32 %v3421, 1.442695
        %v3457 = vpow.pop %v3456
        %v3458 = vmul.f32 %v3422, 1.442695
        %v3459 = vpow.pop %v3458
        %v3460 = vmul.f32 %v3423, 1.442695
        %v3461 = vpow.pop %v3460
        %v3462 = vmul.f32 %v3424, 1.442695
        %v3463 = vpow.pop %v3462
        %v3464 = vmul.f32 %v3425, 1.442695
        %v3465 = vpow.pop %v3464
        %v3466 = vmul.f32 %v3426, 1.442695
        %v3467 = vpow.pop %v3466
        %v3468 = vmul.f32 %v3427, 1.442695
        %v3469 = vpow.pop %v3468
        %v3470 = vmul.f32 %v3428, 1.442695
        %v3471 = vpow.pop %v3470
        %v3472 = vmul.f32 %v3429, 1.442695
        %v3473 = vpow.pop %v3472
        %v3474 = vmul.f32 %v3430, 1.442695
        %v3475 = vpow.pop %v3474
        %v3476 = vmul.f32 %v3431, 1.442695
        %v3477 = vpow.pop %v3476
        %v3478 = vmul.f32 %v3432, 1.442695
        %v3479 = vpow.pop %v3478
        %v3480 = vmul.f32 %v3433, 1.442695
        %v3481 = vpow.pop %v3480
        %v3482 = vmul.f32 %v3434, 1.442695
        %v3483 = vpow.pop %v3482
        %v3484 = vmul.f32 %v3435, 1.442695
        %v3485 = vpow.pop %v3484
        %v3486 = vmul.f32 %v3436, 1.442695
        %v3487 = vpow.pop %v3486
        %v3488 = vmul.f32 %v3437, 1.442695
        %v3489 = vpow.pop %v3488
        %v3490 = vmul.f32 %v3438, 1.442695
        %v3491 = vpow.pop %v3490
        %v3492 = vmul.f32 %v3439, 1.442695
        %v3493 = vpow.pop %v3492
        %v3494 = vmul.f32 %v3440, 1.442695
        %v3495 = vpow.pop %v3494
        %v3496 = vmul.f32 %v3441, 1.442695
        %v3497 = vpow.pop %v3496
        %v3498 = vmul.f32 %v3442, 1.442695
        %v3499 = vpow.pop %v3498
        %v3500 = vmul.f32 %v3443, 1.442695
        %v3501 = vpow.pop %v3500
        %v3502 = vmul.f32 %v3444, 1.442695
        %v3503 = vpow.pop %v3502
        %v3504 = vmul.f32 %v3445, 1.442695
        %v3505 = vpow.pop %v3504
        %v3506 = vmul.f32 %v3446, 1.442695
        %v3507 = vpow.pop %v3506
        %v3508 = vmul.f32 %v3447, 1.442695
        %v3509 = vpow.pop %v3508
        %v3510 = vmul.f32 %v3448, 1.442695
        %v3511 = vpow.pop %v3510
        %v3512 = vmul.f32 %v3449, 1.442695
        %v3513 = vpow.pop %v3512
        %v3514 = vadd.f32 %v3451, 1.0
        %v3515 = vadd.f32 %v3453, 1.0
        %v3516 = vadd.f32 %v3455, 1.0
        %v3517 = vadd.f32 %v3457, 1.0
        %v3518 = vadd.f32 %v3459, 1.0
        %v3519 = vadd.f32 %v3461, 1.0
        %v3520 = vadd.f32 %v3463, 1.0
        %v3521 = vadd.f32 %v3465, 1.0
        %v3522 = vadd.f32 %v3467, 1.0
        %v3523 = vadd.f32 %v3469, 1.0
        %v3524 = vadd.f32 %v3471, 1.0
        %v3525 = vadd.f32 %v3473, 1.0
        %v3526 = vadd.f32 %v3475, 1.0
        %v3527 = vadd.f32 %v3477, 1.0
        %v3528 = vadd.f32 %v3479, 1.0
        %v3529 = vadd.f32 %v3481, 1.0
        %v3530 = vadd.f32 %v3483, 1.0
        %v3531 = vadd.f32 %v3485, 1.0
        %v3532 = vadd.f32 %v3487, 1.0
        %v3533 = vadd.f32 %v3489, 1.0
        %v3534 = vadd.f32 %v3491, 1.0
        %v3535 = vadd.f32 %v3493, 1.0
        %v3536 = vadd.f32 %v3495, 1.0
        %v3537 = vadd.f32 %v3497, 1.0
        %v3538 = vadd.f32 %v3499, 1.0
        %v3539 = vadd.f32 %v3501, 1.0
        %v3540 = vadd.f32 %v3503, 1.0
        %v3541 = vadd.f32 %v3505, 1.0
        %v3542 = vadd.f32 %v3507, 1.0
        %v3543 = vadd.f32 %v3509, 1.0
        %v3544 = vadd.f32 %v3511, 1.0
        %v3545 = vadd.f32 %v3513, 1.0
        %v3546 = vrcp.pop %v3514
        %v3547 = vrcp.pop %v3515
        %v3548 = vrcp.pop %v3516
        %v3549 = vrcp.pop %v3517
        %v3550 = vrcp.pop %v3518
        %v3551 = vrcp.pop %v3519
        %v3552 = vrcp.pop %v3520
        %v3553 = vrcp.pop %v3521
        %v3554 = vrcp.pop %v3522
        %v3555 = vrcp.pop %v3523
        %v3556 = vrcp.pop %v3524
        %v3557 = vrcp.pop %v3525
        %v3558 = vrcp.pop %v3526
        %v3559 = vrcp.pop %v3527
        %v3560 = vrcp.pop %v3528
        %v3561 = vrcp.pop %v3529
        %v3562 = vrcp.pop %v3530
        %v3563 = vrcp.pop %v3531
        %v3564 = vrcp.pop %v3532
        %v3565 = vrcp.pop %v3533
        %v3566 = vrcp.pop %v3534
        %v3567 = vrcp.pop %v3535
        %v3568 = vrcp.pop %v3536
        %v3569 = vrcp.pop %v3537
        %v3570 = vrcp.pop %v3538
        %v3571 = vrcp.pop %v3539
        %v3572 = vrcp.pop %v3540
        %v3573 = vrcp.pop %v3541
        %v3574 = vrcp.pop %v3542
        %v3575 = vrcp.pop %v3543
        %v3576 = vrcp.pop %v3544
        %v3577 = vrcp.pop %v3545
        %vm3578 = vcmask 7168
        %3579 = vst.msk [vmem:[%s522] sm:$0xff] %vm3578, %v3546
        %3580 = vst.msk [vmem:[%s522 + $0x8] sm:$0xff] %vm3578, %v3547
        %3581 = vst.msk [vmem:[%s522 + $0x10] sm:$0xff] %vm3578, %v3548
        %3582 = vst.msk [vmem:[%s522 + $0x18] sm:$0xff] %vm3578, %v3549
        %3583 = vst.msk [vmem:[%s522 + $0x20] sm:$0xff] %vm3578, %v3550
        %3584 = vst.msk [vmem:[%s522 + $0x28] sm:$0xff] %vm3578, %v3551
        %3585 = vst.msk [vmem:[%s522 + $0x30] sm:$0xff] %vm3578, %v3552
        %3586 = vst.msk [vmem:[%s522 + $0x38] sm:$0xff] %vm3578, %v3553
        %3587 = vst.msk [vmem:[%s522 + $0x40] sm:$0xff] %vm3578, %v3554
        %3588 = vst.msk [vmem:[%s522 + $0x48] sm:$0xff] %vm3578, %v3555
        %3589 = vst.msk [vmem:[%s522 + $0x50] sm:$0xff] %vm3578, %v3556
        %3590 = vst.msk [vmem:[%s522 + $0x58] sm:$0xff] %vm3578, %v3557
        %3591 = vst.msk [vmem:[%s522 + $0x60] sm:$0xff] %vm3578, %v3558
        %3592 = vst.msk [vmem:[%s522 + $0x68] sm:$0xff] %vm3578, %v3559
        %3593 = vst.msk [vmem:[%s522 + $0x70] sm:$0xff] %vm3578, %v3560
        %3594 = vst.msk [vmem:[%s522 + $0x78] sm:$0xff] %vm3578, %v3561
        %3595 = vst.msk [vmem:[%s522 + $0x80] sm:$0xff] %vm3578, %v3562
        %3596 = vst.msk [vmem:[%s522 + $0x88] sm:$0xff] %vm3578, %v3563
        %3597 = vst.msk [vmem:[%s522 + $0x90] sm:$0xff] %vm3578, %v3564
        %3598 = vst.msk [vmem:[%s522 + $0x98] sm:$0xff] %vm3578, %v3565
        %3599 = vst.msk [vmem:[%s522 + $0xa0] sm:$0xff] %vm3578, %v3566
        %3600 = vst.msk [vmem:[%s522 + $0xa8] sm:$0xff] %vm3578, %v3567
        %3601 = vst.msk [vmem:[%s522 + $0xb0] sm:$0xff] %vm3578, %v3568
        %3602 = vst.msk [vmem:[%s522 + $0xb8] sm:$0xff] %vm3578, %v3569
        %3603 = vst.msk [vmem:[%s522 + $0xc0] sm:$0xff] %vm3578, %v3570
        %3604 = vst.msk [vmem:[%s522 + $0xc8] sm:$0xff] %vm3578, %v3571
        %3605 = vst.msk [vmem:[%s522 + $0xd0] sm:$0xff] %vm3578, %v3572
        %3606 = vst.msk [vmem:[%s522 + $0xd8] sm:$0xff] %vm3578, %v3573
        %3607 = vst.msk [vmem:[%s522 + $0xe0] sm:$0xff] %vm3578, %v3574
        %3608 = vst.msk [vmem:[%s522 + $0xe8] sm:$0xff] %vm3578, %v3575
        %3609 = vst.msk [vmem:[%s522 + $0xf0] sm:$0xff] %vm3578, %v3576
        %3610 = vst.msk [vmem:[%s522 + $0xf8] sm:$0xff] %vm3578, %v3577
        %s3611 = smul.u32 32, %s31
        %p3612 = scmp.lt.s32.totalorder %s3611, 63
        %s3613 = scalar_select %p3612, %s3611, 63
        %s3614 = smul.addr %s3613, 8
        %s3615 = scalar_lea.vmem %s13, %s3614
        // Predicated region
        $region93: #{tpu_custom_call.1} parent=71 // pred_check
          %p3616 = pneg %p327
        $region94: #{tpu_custom_call.1} parent=71 // pred_check_branch
          %3618 = sbr.rel (%p3616) target = $region96
        $region95: #{tpu_custom_call.1} parent=71 // pred_region
          %s3619 = smul.u32 32, %s31
        $region96: #{tpu_custom_call.1} parent=71 // pred_fallthru
          _
      $region72: #{tpu_custom_call.1} parent=5 // pred_fallthru
        _
      %p3620 = scmp.le.s32.totalorder 2, %s26
      // Predicated region
      $region97: #{tpu_custom_call.1} parent=5 // pred_check
        %p3621 = pneg %p3620
      $region98: #{tpu_custom_call.1} parent=5 // pred_check_branch
        %3623 = sbr.rel (%p3621) target = $region100
      $region99: #{tpu_custom_call.1} parent=5 // pred_region
        %s3624 = ssub.s32 %s26, 2
        // Predicated region
        $region101: #{tpu_custom_call.1} parent=99 // pred_check
          %p3625 = pneg %p333
        $region102: #{tpu_custom_call.1} parent=99 // pred_check_branch
          %3627 = sbr.rel (%p3625) target = $region104
        $region103: #{tpu_custom_call.1} parent=99 // pred_region
          %s3628 = smul.u32 32, %s32
          %p3629 = scmp.lt.s32.totalorder %s3628, 63
          %s3630 = scalar_select %p3629, %s3628, 63
          %s3631 = smul.addr %s3630, 8
          %s3632 = scalar_lea.vmem %s13, %s3631
        $region104: #{tpu_custom_call.1} parent=99 // pred_fallthru
          _
      $region100: #{tpu_custom_call.1} parent=5 // pred_fallthru
        _
    $region6: #{tpu_custom_call.1} parent=1 // loop_footer
      %s30 = sadd.s32 1, %s26
    $region7: #{tpu_custom_call.1} parent=1 // loop_footer_branch
      %25 = sbr.rel target = $region3
    $region8: #{tpu_custom_call.1} parent=1 // loop_exit
      _
    %3633 = vsyncpa [#allocation4], 1
    %s3634 = scalar_lea.sflag [#allocation4], 1
    %3635 = vsyncpa %s3634, 1
    %3636 = vsyncpa [#allocation6], 1
    %3637 = vsyncpa [#allocation9], 1

</llo_original>
